<compile_context>
chip_gen: v7x
topology: tpu7x:2x2x1
jax: 0.10.0
libtpu: 0.0.40
codegen_flags: <defaults>
</compile_context>

<pallas_src>
import functools
import math

import jax
import jax.numpy as jnp
from jax.experimental import pallas as pl
from jax.experimental.pallas import tpu as pltpu

# ---------------- small synthetic "BERT" config ----------------
HIDDEN = 32
N_HEADS = 2
HEAD_DIM = HIDDEN // N_HEADS
N_LAYERS = 2
INTERMEDIATE = 64
VOCAB = 128
MAX_POS = 16
N_CLASSES = 6
CLASSES_PAD = 128               # lane-dense padded classifier width
LN_EPS = 1e-12
ATTN_SCALE = 1.0 / math.sqrt(HEAD_DIM)


# ---------------- in-kernel helpers (f32 elementwise math) ----------------

def _layernorm(x, g, b):
    mean = jnp.mean(x, axis=-1, keepdims=True)
    xc = x - mean
    var = jnp.mean(xc * xc, axis=-1, keepdims=True)
    return xc * jax.lax.rsqrt(var + LN_EPS) * g + b


def _gelu(x):
    # TODO(synk): HF bert-base uses erf-GELU; tanh approximation used here.
    return 0.5 * x * (1.0 + jnp.tanh(0.7978845608028654 * (x + 0.044715 * x * x * x)))


# ---------------- fused forward kernel ----------------

def _fused_forward_kernel(
        ids_ref, mask_ref,
        word_emb_ref, pos_emb_ref, type_emb_ref,
        emb_ln_g_ref, emb_ln_b_ref,
        w_qkv_ref, b_qkv_ref, wo_ref, bo_ref, ln1_g_ref, ln1_b_ref,
        wi_ref, bi_ref, wf_ref, bf_ref, ln2_g_ref, ln2_b_ref,
        wp_ref, bp_ref, wc_ref, bc_ref,
        logits_ref,
        *, batch, seq):
    rows = batch * seq

    # ---- embeddings: one-hot gather on the MXU + pos/type add, then LayerNorm ----
    ids = ids_ref[...]                                                    # (rows, 1) int32
    vocab_iota = jax.lax.broadcasted_iota(jnp.int32, (rows, VOCAB), 1)
    onehot = (ids == vocab_iota).astype(jnp.bfloat16)                     # (rows, VOCAB)
    emb = jnp.dot(onehot, word_emb_ref[...],
                  preferred_element_type=jnp.float32)                     # (rows, H) f32
    pos_type = pos_emb_ref[0:seq, :] + type_emb_ref[0:1, :]               # (S, H) f32
    emb = emb + jnp.tile(pos_type, (batch, 1))                            # (rows, H)
    h = _layernorm(emb, emb_ln_g_ref[...], emb_ln_b_ref[...])

    # additive attention mask built in-kernel: 0 for valid tokens, -1e4 for padding
    add_mask = (1.0 - mask_ref[...].astype(jnp.float32)) * -10000.0       # (B, 1, S)

    # ---- transformer encoder layers (statically unrolled over stacked weights) ----
    for l in range(N_LAYERS):
        # fused QKV projection: single (rows, H) x (H, 3H) bf16 matmul, f32 acc.
        # 1/sqrt(head_dim) is folded into the Q columns of w_qkv at init time.
        qkv = jnp.dot(h.astype(jnp.bfloat16), w_qkv_ref[l],
                      preferred_element_type=jnp.float32) + b_qkv_ref[l]  # (rows, 3H)
        qkv3 = qkv.reshape(batch, seq, 3 * HIDDEN)                        # free (S sublane-aligned)

        head_ctx = []
        for hh in range(N_HEADS):
            q = qkv3[..., hh * HEAD_DIM:(hh + 1) * HEAD_DIM]              # (B, S, Dh)
            k = qkv3[..., HIDDEN + hh * HEAD_DIM:HIDDEN + (hh + 1) * HEAD_DIM]
            v = qkv3[..., 2 * HIDDEN + hh * HEAD_DIM:2 * HIDDEN + (hh + 1) * HEAD_DIM]
            s = jnp.einsum('bqd,bkd->bqk', q, k,
                           preferred_element_type=jnp.float32) + add_mask  # (B, S, S)
            s_max = jnp.max(s, axis=-1, keepdims=True)
            p = jnp.exp(s - s_max)
            p = p * pl.reciprocal(jnp.sum(p, axis=-1, keepdims=True), approx=True)
            head_ctx.append(jnp.einsum('bqk,bkd->bqd', p, v,
                                       preferred_element_type=jnp.float32))
        ctx = jnp.concatenate(head_ctx, axis=-1).reshape(rows, HIDDEN)    # values only, no scratch

        attn_out = jnp.dot(ctx.astype(jnp.bfloat16), wo_ref[l],
                           preferred_element_type=jnp.float32) + bo_ref[l]
        h = _layernorm(attn_out + h, ln1_g_ref[l], ln1_b_ref[l])

        inter = _gelu(jnp.dot(h.astype(jnp.bfloat16), wi_ref[l],
                              preferred_element_type=jnp.float32) + bi_ref[l])
        ffn = jnp.dot(inter.astype(jnp.bfloat16), wf_ref[l],
                      preferred_element_type=jnp.float32) + bf_ref[l]
        h = _layernorm(ffn + h, ln2_g_ref[l], ln2_b_ref[l])

    # ---- BERT pooler + classifier on ALL rows (trivially small matmuls); the
    # CLS rows / real class columns are selected outside so the output store is
    # a full unmasked lane-dense (rows, 128) vst. ----
    pooled = jnp.tanh(jnp.dot(h.astype(jnp.bfloat16), wp_ref[...],
                              preferred_element_type=jnp.float32) + bp_ref[...])
    # nn.Dropout(0.1): identity in eval mode.
    logits_ref[...] = (jnp.dot(pooled.astype(jnp.bfloat16), wc_ref[...],
                               preferred_element_type=jnp.float32) + bc_ref[...])


# ---------------- deterministic parameter init ----------------

def init_params(key):
    counter = [0]

    def nxt():
        counter[0] += 1
        return jax.random.fold_in(key, counter[0])

    def nrm(shape, scale=0.02):
        return scale * jax.random.normal(nxt(), shape, dtype=jnp.float32)

    def ones(shape):
        return jnp.ones(shape, dtype=jnp.float32)

    def zeros(shape):
        return jnp.zeros(shape, dtype=jnp.float32)

    params = {
        "word_emb": nrm((VOCAB, HIDDEN)).astype(jnp.bfloat16),   # MXU operand -> bf16
        "pos_emb": nrm((MAX_POS, HIDDEN)),
        "type_emb": nrm((2, HIDDEN)),
        "emb_ln_g": ones((1, HIDDEN)),
        "emb_ln_b": zeros((1, HIDDEN)),
    }

    # Stacked per-layer weights; Q/K/V fused into a single (H, 3H) matrix with
    # the 1/sqrt(head_dim) attention scale folded into the Q columns (Q bias is
    # zero, so no bias scaling needed).
    w_qkv, b_qkv, wo, bo, ln1_g, ln1_b = [], [], [], [], [], []
    wi, bi, wf, bf, ln2_g, ln2_b = [], [], [], [], [], []
    for _ in range(N_LAYERS):
        wq = nrm((HIDDEN, HIDDEN)) * ATTN_SCALE
        wk = nrm((HIDDEN, HIDDEN))
        wv = nrm((HIDDEN, HIDDEN))
        w_qkv.append(jnp.concatenate([wq, wk, wv], axis=1))
        b_qkv.append(zeros((1, 3 * HIDDEN)))
        wo.append(nrm((HIDDEN, HIDDEN))); bo.append(zeros((1, HIDDEN)))
        ln1_g.append(ones((1, HIDDEN))); ln1_b.append(zeros((1, HIDDEN)))
        wi.append(nrm((HIDDEN, INTERMEDIATE))); bi.append(zeros((1, INTERMEDIATE)))
        wf.append(nrm((INTERMEDIATE, HIDDEN))); bf.append(zeros((1, HIDDEN)))
        ln2_g.append(ones((1, HIDDEN))); ln2_b.append(zeros((1, HIDDEN)))

    def stack(xs):
        return jnp.stack(xs, axis=0)

    params.update(
        # MXU weights in bf16 (halves weight DMA / VMEM residency); biases & LN in f32.
        w_qkv=stack(w_qkv).astype(jnp.bfloat16), b_qkv=stack(b_qkv),
        wo=stack(wo).astype(jnp.bfloat16), bo=stack(bo),
        ln1_g=stack(ln1_g), ln1_b=stack(ln1_b),
        wi=stack(wi).astype(jnp.bfloat16), bi=stack(bi),
        wf=stack(wf).astype(jnp.bfloat16), bf=stack(bf),
        ln2_g=stack(ln2_g), ln2_b=stack(ln2_b),
    )

    # Pooler + classifier head; classifier lane-padded to 128 output columns.
    params["wp"] = nrm((HIDDEN, HIDDEN)).astype(jnp.bfloat16)
    params["bp"] = zeros((1, HIDDEN))
    wc = nrm((HIDDEN, N_CLASSES))
    bc = zeros((1, N_CLASSES))
    params["wc_pad"] = (jnp.zeros((HIDDEN, CLASSES_PAD), jnp.float32)
                        .at[:, :N_CLASSES].set(wc).astype(jnp.bfloat16))
    params["bc_pad"] = jnp.zeros((1, CLASSES_PAD), jnp.float32).at[:, :N_CLASSES].set(bc)
    return params


# ---------------- forward pass (EmotionClassifier.forward) ----------------

def emotion_classifier_forward(params, input_ids, attention_mask):
    B, S = input_ids.shape
    rows = B * S

    # Integer inputs go straight into the kernel; the embedding gather, pos/type
    # add and additive-mask construction all happen in-kernel.
    ids2 = input_ids.reshape(rows, 1).astype(jnp.int32)
    mask3 = attention_mask.reshape(B, 1, S).astype(jnp.int32)

    operands = (
        ids2, mask3,
        params["word_emb"], params["pos_emb"], params["type_emb"],
        params["emb_ln_g"], params["emb_ln_b"],
        params["w_qkv"], params["b_qkv"], params["wo"], params["bo"],
        params["ln1_g"], params["ln1_b"],
        params["wi"], params["bi"], params["wf"], params["bf"],
        params["ln2_g"], params["ln2_b"],
        params["wp"], params["bp"], params["wc_pad"], params["bc_pad"],
    )

    def full_spec(a):
        nd = a.ndim
        return pl.BlockSpec(a.shape, lambda i, _nd=nd: (0,) * _nd)

    logits_all = pl.pallas_call(
        functools.partial(_fused_forward_kernel, batch=B, seq=S),
        out_shape=jax.ShapeDtypeStruct((rows, CLASSES_PAD), jnp.float32),
        grid=(1,),
        in_specs=[full_spec(a) for a in operands],
        out_specs=pl.BlockSpec((rows, CLASSES_PAD), lambda i: (0, 0)),
        compiler_params=pltpu.CompilerParams(dimension_semantics=("arbitrary",)),
    )(*operands)

    # Row b*S is the [CLS] row for batch b; padded class columns dropped.
    return logits_all.reshape(B, S, CLASSES_PAD)[:, 0, :N_CLASSES]


# ---------------- demo ----------------

if __name__ == "__main__":
    root = jax.random.PRNGKey(0)
    params = init_params(root)

    B, S = 2, 8
    k_ids, _ = jax.random.split(jax.random.PRNGKey(0))
    input_ids = jax.random.randint(k_ids, (B, S), 0, VOCAB, dtype=jnp.int32)
    attention_mask = jnp.ones((B, S), dtype=jnp.int32).at[1, 6:].set(0)

    logits = emotion_classifier_forward(params, input_ids, attention_mask)
    logits = jax.block_until_ready(logits)
    assert logits.shape == (B, N_CLASSES)
    assert logits.dtype == jnp.float32
    assert bool(jnp.all(jnp.isfinite(logits)))
    print("KERNEL_OK")
</pallas_src>

<mosaic_0001>
module attributes {stable_mosaic.version = 11 : i64} {
  func.func @_fused_forward_kernel(%arg0: i32, %arg1: memref<16x1xi32, #tpu.memory_space<vmem>>, %arg2: memref<2x1x8xi32, #tpu.memory_space<vmem>>, %arg3: memref<128x32xbf16, #tpu.memory_space<vmem>>, %arg4: memref<16x32xf32, #tpu.memory_space<vmem>>, %arg5: memref<2x32xf32, #tpu.memory_space<vmem>>, %arg6: memref<1x32xf32, #tpu.memory_space<vmem>>, %arg7: memref<1x32xf32, #tpu.memory_space<vmem>>, %arg8: memref<2x32x96xbf16, #tpu.memory_space<vmem>>, %arg9: memref<2x1x96xf32, #tpu.memory_space<vmem>>, %arg10: memref<2x32x32xbf16, #tpu.memory_space<vmem>>, %arg11: memref<2x1x32xf32, #tpu.memory_space<vmem>>, %arg12: memref<2x1x32xf32, #tpu.memory_space<vmem>>, %arg13: memref<2x1x32xf32, #tpu.memory_space<vmem>>, %arg14: memref<2x32x64xbf16, #tpu.memory_space<vmem>>, %arg15: memref<2x1x64xf32, #tpu.memory_space<vmem>>, %arg16: memref<2x64x32xbf16, #tpu.memory_space<vmem>>, %arg17: memref<2x1x32xf32, #tpu.memory_space<vmem>>, %arg18: memref<2x1x32xf32, #tpu.memory_space<vmem>>, %arg19: memref<2x1x32xf32, #tpu.memory_space<vmem>>, %arg20: memref<32x32xbf16, #tpu.memory_space<vmem>>, %arg21: memref<1x32xf32, #tpu.memory_space<vmem>>, %arg22: memref<32x128xbf16, #tpu.memory_space<vmem>>, %arg23: memref<1x128xf32, #tpu.memory_space<vmem>>, %arg24: memref<16x128xf32, #tpu.memory_space<vmem>>) attributes {dimension_semantics = [#tpu.dimension_semantics<arbitrary>], iteration_bounds = array<i64: 1>, scalar_prefetch = 0 : i64, scratch_operands = 0 : i64, tpu.core_type = #tpu.core_type<tc>, window_params = [{pipeline_mode = #tpu.pipeline_mode<synchronous>, transform_indices = @transform_0, window_bounds = array<i64: 16, 1>}, {pipeline_mode = #tpu.pipeline_mode<synchronous>, transform_indices = @transform_1, window_bounds = array<i64: 2, 1, 8>}, {pipeline_mode = #tpu.pipeline_mode<synchronous>, transform_indices = @transform_2, window_bounds = array<i64: 128, 32>}, {pipeline_mode = #tpu.pipeline_mode<synchronous>, transform_indices = @transform_3, window_bounds = array<i64: 16, 32>}, {pipeline_mode = #tpu.pipeline_mode<synchronous>, transform_indices = @transform_4, window_bounds = array<i64: 2, 32>}, {pipeline_mode = #tpu.pipeline_mode<synchronous>, transform_indices = @transform_5, window_bounds = array<i64: 1, 32>}, {pipeline_mode = #tpu.pipeline_mode<synchronous>, transform_indices = @transform_6, window_bounds = array<i64: 1, 32>}, {pipeline_mode = #tpu.pipeline_mode<synchronous>, transform_indices = @transform_7, window_bounds = array<i64: 2, 32, 96>}, {pipeline_mode = #tpu.pipeline_mode<synchronous>, transform_indices = @transform_8, window_bounds = array<i64: 2, 1, 96>}, {pipeline_mode = #tpu.pipeline_mode<synchronous>, transform_indices = @transform_9, window_bounds = array<i64: 2, 32, 32>}, {pipeline_mode = #tpu.pipeline_mode<synchronous>, transform_indices = @transform_10, window_bounds = array<i64: 2, 1, 32>}, {pipeline_mode = #tpu.pipeline_mode<synchronous>, transform_indices = @transform_11, window_bounds = array<i64: 2, 1, 32>}, {pipeline_mode = #tpu.pipeline_mode<synchronous>, transform_indices = @transform_12, window_bounds = array<i64: 2, 1, 32>}, {pipeline_mode = #tpu.pipeline_mode<synchronous>, transform_indices = @transform_13, window_bounds = array<i64: 2, 32, 64>}, {pipeline_mode = #tpu.pipeline_mode<synchronous>, transform_indices = @transform_14, window_bounds = array<i64: 2, 1, 64>}, {pipeline_mode = #tpu.pipeline_mode<synchronous>, transform_indices = @transform_15, window_bounds = array<i64: 2, 64, 32>}, {pipeline_mode = #tpu.pipeline_mode<synchronous>, transform_indices = @transform_16, window_bounds = array<i64: 2, 1, 32>}, {pipeline_mode = #tpu.pipeline_mode<synchronous>, transform_indices = @transform_17, window_bounds = array<i64: 2, 1, 32>}, {pipeline_mode = #tpu.pipeline_mode<synchronous>, transform_indices = @transform_18, window_bounds = array<i64: 2, 1, 32>}, {pipeline_mode = #tpu.pipeline_mode<synchronous>, transform_indices = @transform_19, window_bounds = array<i64: 32, 32>}, {pipeline_mode = #tpu.pipeline_mode<synchronous>, transform_indices = @transform_20, window_bounds = array<i64: 1, 32>}, {pipeline_mode = #tpu.pipeline_mode<synchronous>, transform_indices = @transform_21, window_bounds = array<i64: 32, 128>}, {pipeline_mode = #tpu.pipeline_mode<synchronous>, transform_indices = @transform_22, window_bounds = array<i64: 1, 128>}, {pipeline_mode = #tpu.pipeline_mode<synchronous>, transform_indices = @transform_23, window_bounds = array<i64: 16, 128>}]} {
    %c0 = arith.constant 0 : index
    %c0_0 = arith.constant 0 : index
    %0 = vector.load %arg1[%c0, %c0_0] : memref<16x1xi32, #tpu.memory_space<vmem>>, vector<16x1xi32>
    %1 = tpu.iota {dimensions = array<i32: 1>} : vector<16x128xi32>
    %2 = vector.broadcast %0 : vector<16x1xi32> to vector<16x128xi32>
    %3 = arith.cmpi eq, %2, %1 : vector<16x128xi32>
    %4 = arith.extui %3 : vector<16x128xi1> to vector<16x128xi32>
    %5 = arith.sitofp %4 : vector<16x128xi32> to vector<16x128xf32>
    %6 = arith.truncf %5 : vector<16x128xf32> to vector<16x128xbf16>
    %c0_1 = arith.constant 0 : index
    %c0_2 = arith.constant 0 : index
    %7 = vector.load %arg3[%c0_1, %c0_2] : memref<128x32xbf16, #tpu.memory_space<vmem>>, vector<128x32xbf16>
    %cst = arith.constant dense<0.000000e+00> : vector<16x32xf32>
    %8 = tpu.matmul %6, %7, %cst {dimension_numbers = #tpu.dot_dimension_numbers<[1], [0], [0], [1], [0, 0, 1, 1], [], []>} : vector<16x128xbf16>, vector<128x32xbf16>, vector<16x32xf32> -> vector<16x32xf32>
    %c0_3 = arith.constant 0 : index
    %c0_4 = arith.constant 0 : index
    %9 = vector.load %arg4[%c0_3, %c0_4] : memref<16x32xf32, #tpu.memory_space<vmem>>, vector<8x32xf32>
    %c0_5 = arith.constant 0 : index
    %c0_6 = arith.constant 0 : index
    %10 = vector.load %arg5[%c0_5, %c0_6] : memref<2x32xf32, #tpu.memory_space<vmem>>, vector<1x32xf32>
    %11 = vector.broadcast %10 : vector<1x32xf32> to vector<8x32xf32>
    %12 = arith.addf %9, %11 : vector<8x32xf32>
    %13 = tpu.concatenate %12, %12 in 0 : vector<8x32xf32>, vector<8x32xf32> -> vector<16x32xf32>
    %14 = arith.addf %8, %13 : vector<16x32xf32>
    %c0_7 = arith.constant 0 : index
    %c0_8 = arith.constant 0 : index
    %15 = vector.load %arg6[%c0_7, %c0_8] : memref<1x32xf32, #tpu.memory_space<vmem>>, vector<1x32xf32>
    %c0_9 = arith.constant 0 : index
    %c0_10 = arith.constant 0 : index
    %16 = vector.load %arg7[%c0_9, %c0_10] : memref<1x32xf32, #tpu.memory_space<vmem>>, vector<1x32xf32>
    %cst_11 = arith.constant dense<0.000000e+00> : vector<16xf32>
    %17 = vector.multi_reduction <add>, %14, %cst_11 [1] : vector<16x32xf32> to vector<16xf32>
    %18 = vector.shape_cast %17 : vector<16xf32> to vector<16x1xf32>
    %cst_12 = arith.constant 3.200000e+01 : f32
    %19 = vector.broadcast %cst_12 : f32 to vector<16x1xf32>
    %20 = arith.divf %18, %19 : vector<16x1xf32>
    %21 = vector.broadcast %20 : vector<16x1xf32> to vector<16x32xf32>
    %22 = arith.subf %14, %21 : vector<16x32xf32>
    %23 = arith.mulf %22, %22 : vector<16x32xf32>
    %cst_13 = arith.constant dense<0.000000e+00> : vector<16xf32>
    %24 = vector.multi_reduction <add>, %23, %cst_13 [1] : vector<16x32xf32> to vector<16xf32>
    %25 = vector.shape_cast %24 : vector<16xf32> to vector<16x1xf32>
    %cst_14 = arith.constant 3.200000e+01 : f32
    %26 = vector.broadcast %cst_14 : f32 to vector<16x1xf32>
    %27 = arith.divf %25, %26 : vector<16x1xf32>
    %cst_15 = arith.constant 9.99999996E-13 : f32
    %28 = vector.broadcast %cst_15 : f32 to vector<16x1xf32>
    %29 = arith.addf %27, %28 : vector<16x1xf32>
    %30 = math.rsqrt %29 : vector<16x1xf32>
    %31 = vector.broadcast %30 : vector<16x1xf32> to vector<16x32xf32>
    %32 = arith.mulf %22, %31 : vector<16x32xf32>
    %33 = vector.broadcast %15 : vector<1x32xf32> to vector<16x32xf32>
    %34 = arith.mulf %32, %33 : vector<16x32xf32>
    %35 = vector.broadcast %16 : vector<1x32xf32> to vector<16x32xf32>
    %36 = arith.addf %34, %35 : vector<16x32xf32>
    %c0_16 = arith.constant 0 : index
    %c0_17 = arith.constant 0 : index
    %c0_18 = arith.constant 0 : index
    %37 = vector.load %arg2[%c0_16, %c0_17, %c0_18] : memref<2x1x8xi32, #tpu.memory_space<vmem>>, vector<2x1x8xi32>
    %38 = arith.sitofp %37 : vector<2x1x8xi32> to vector<2x1x8xf32>
    %cst_19 = arith.constant 1.000000e+00 : f32
    %39 = vector.broadcast %cst_19 : f32 to vector<2x1x8xf32>
    %40 = arith.subf %39, %38 : vector<2x1x8xf32>
    %cst_20 = arith.constant -1.000000e+04 : f32
    %41 = vector.broadcast %cst_20 : f32 to vector<2x1x8xf32>
    %42 = arith.mulf %40, %41 : vector<2x1x8xf32>
    %43 = arith.truncf %36 : vector<16x32xf32> to vector<16x32xbf16>
    %c0_21 = arith.constant 0 : index
    %c0_22 = arith.constant 0 : index
    %c0_23 = arith.constant 0 : index
    %44 = vector.load %arg8[%c0_21, %c0_22, %c0_23] : memref<2x32x96xbf16, #tpu.memory_space<vmem>>, vector<1x32x96xbf16>
    %45 = vector.shape_cast %44 : vector<1x32x96xbf16> to vector<32x96xbf16>
    %cst_24 = arith.constant dense<0.000000e+00> : vector<16x96xf32>
    %46 = tpu.matmul %43, %45, %cst_24 {dimension_numbers = #tpu.dot_dimension_numbers<[1], [0], [0], [1], [0, 0, 1, 1], [], []>} : vector<16x32xbf16>, vector<32x96xbf16>, vector<16x96xf32> -> vector<16x96xf32>
    %c0_25 = arith.constant 0 : index
    %c0_26 = arith.constant 0 : index
    %c0_27 = arith.constant 0 : index
    %47 = vector.load %arg9[%c0_25, %c0_26, %c0_27] : memref<2x1x96xf32, #tpu.memory_space<vmem>>, vector<1x1x96xf32>
    %48 = vector.shape_cast %47 : vector<1x1x96xf32> to vector<1x96xf32>
    %49 = vector.broadcast %48 : vector<1x96xf32> to vector<16x96xf32>
    %50 = arith.addf %46, %49 : vector<16x96xf32>
    %51 = vector.shape_cast %50 : vector<16x96xf32> to vector<2x8x96xf32>
    %52 = vector.extract_strided_slice %51 {offsets = [0, 0, 0], sizes = [2, 8, 16], strides = [1, 1, 1]} : vector<2x8x96xf32> to vector<2x8x16xf32>
    %53 = vector.extract_strided_slice %51 {offsets = [0, 0, 32], sizes = [2, 8, 16], strides = [1, 1, 1]} : vector<2x8x96xf32> to vector<2x8x16xf32>
    %54 = vector.extract_strided_slice %51 {offsets = [0, 0, 64], sizes = [2, 8, 16], strides = [1, 1, 1]} : vector<2x8x96xf32> to vector<2x8x16xf32>
    "tpu.trace_start"() <{level = 10 : i32, message = "bqd,bkd->bqk"}> : () -> ()
    %cst_28 = arith.constant dense<0.000000e+00> : vector<2x8x8xf32>
    %55 = tpu.matmul %52, %53, %cst_28 {dimension_numbers = #tpu.dot_dimension_numbers<[2], [2], [1], [1], [0, 0, 0, 1, 1, 1], [0], [0]>} : vector<2x8x16xf32>, vector<2x8x16xf32>, vector<2x8x8xf32> -> vector<2x8x8xf32>
    "tpu.trace_stop"() : () -> ()
    %56 = vector.broadcast %42 : vector<2x1x8xf32> to vector<2x8x8xf32>
    %57 = arith.addf %55, %56 : vector<2x8x8xf32>
    %cst_29 = arith.constant dense<0xFF800000> : vector<2x8xf32>
    %58 = vector.multi_reduction <maximumf>, %57, %cst_29 [2] : vector<2x8x8xf32> to vector<2x8xf32>
    %59 = vector.shape_cast %58 : vector<2x8xf32> to vector<2x8x1xf32>
    %60 = vector.broadcast %59 : vector<2x8x1xf32> to vector<2x8x8xf32>
    %61 = arith.subf %57, %60 : vector<2x8x8xf32>
    %62 = math.exp %61 : vector<2x8x8xf32>
    %cst_30 = arith.constant dense<0.000000e+00> : vector<2x8xf32>
    %63 = vector.multi_reduction <add>, %62, %cst_30 [2] : vector<2x8x8xf32> to vector<2x8xf32>
    %64 = vector.shape_cast %63 : vector<2x8xf32> to vector<2x8x1xf32>
    %65 = tpu.reciprocal %64 {approx = true} : vector<2x8x1xf32> -> vector<2x8x1xf32>
    %66 = vector.broadcast %65 : vector<2x8x1xf32> to vector<2x8x8xf32>
    %67 = arith.mulf %62, %66 : vector<2x8x8xf32>
    "tpu.trace_start"() <{level = 10 : i32, message = "bqk,bkd->bqd"}> : () -> ()
    %cst_31 = arith.constant dense<0.000000e+00> : vector<2x8x16xf32>
    %68 = tpu.matmul %67, %54, %cst_31 {dimension_numbers = #tpu.dot_dimension_numbers<[2], [1], [1], [2], [0, 0, 0, 1, 1, 2], [0], [0]>} : vector<2x8x8xf32>, vector<2x8x16xf32>, vector<2x8x16xf32> -> vector<2x8x16xf32>
    "tpu.trace_stop"() : () -> ()
    %69 = vector.extract_strided_slice %51 {offsets = [0, 0, 16], sizes = [2, 8, 16], strides = [1, 1, 1]} : vector<2x8x96xf32> to vector<2x8x16xf32>
    %70 = vector.extract_strided_slice %51 {offsets = [0, 0, 48], sizes = [2, 8, 16], strides = [1, 1, 1]} : vector<2x8x96xf32> to vector<2x8x16xf32>
    %71 = vector.extract_strided_slice %51 {offsets = [0, 0, 80], sizes = [2, 8, 16], strides = [1, 1, 1]} : vector<2x8x96xf32> to vector<2x8x16xf32>
    "tpu.trace_start"() <{level = 10 : i32, message = "bqd,bkd->bqk"}> : () -> ()
    %cst_32 = arith.constant dense<0.000000e+00> : vector<2x8x8xf32>
    %72 = tpu.matmul %69, %70, %cst_32 {dimension_numbers = #tpu.dot_dimension_numbers<[2], [2], [1], [1], [0, 0, 0, 1, 1, 1], [0], [0]>} : vector<2x8x16xf32>, vector<2x8x16xf32>, vector<2x8x8xf32> -> vector<2x8x8xf32>
    "tpu.trace_stop"() : () -> ()
    %73 = vector.broadcast %42 : vector<2x1x8xf32> to vector<2x8x8xf32>
    %74 = arith.addf %72, %73 : vector<2x8x8xf32>
    %cst_33 = arith.constant dense<0xFF800000> : vector<2x8xf32>
    %75 = vector.multi_reduction <maximumf>, %74, %cst_33 [2] : vector<2x8x8xf32> to vector<2x8xf32>
    %76 = vector.shape_cast %75 : vector<2x8xf32> to vector<2x8x1xf32>
    %77 = vector.broadcast %76 : vector<2x8x1xf32> to vector<2x8x8xf32>
    %78 = arith.subf %74, %77 : vector<2x8x8xf32>
    %79 = math.exp %78 : vector<2x8x8xf32>
    %cst_34 = arith.constant dense<0.000000e+00> : vector<2x8xf32>
    %80 = vector.multi_reduction <add>, %79, %cst_34 [2] : vector<2x8x8xf32> to vector<2x8xf32>
    %81 = vector.shape_cast %80 : vector<2x8xf32> to vector<2x8x1xf32>
    %82 = tpu.reciprocal %81 {approx = true} : vector<2x8x1xf32> -> vector<2x8x1xf32>
    %83 = vector.broadcast %82 : vector<2x8x1xf32> to vector<2x8x8xf32>
    %84 = arith.mulf %79, %83 : vector<2x8x8xf32>
    "tpu.trace_start"() <{level = 10 : i32, message = "bqk,bkd->bqd"}> : () -> ()
    %cst_35 = arith.constant dense<0.000000e+00> : vector<2x8x16xf32>
    %85 = tpu.matmul %84, %71, %cst_35 {dimension_numbers = #tpu.dot_dimension_numbers<[2], [1], [1], [2], [0, 0, 0, 1, 1, 2], [0], [0]>} : vector<2x8x8xf32>, vector<2x8x16xf32>, vector<2x8x16xf32> -> vector<2x8x16xf32>
    "tpu.trace_stop"() : () -> ()
    %86 = tpu.concatenate %68, %85 in 2 : vector<2x8x16xf32>, vector<2x8x16xf32> -> vector<2x8x32xf32>
    %87 = vector.shape_cast %86 : vector<2x8x32xf32> to vector<16x32xf32>
    %88 = arith.truncf %87 : vector<16x32xf32> to vector<16x32xbf16>
    %c0_36 = arith.constant 0 : index
    %c0_37 = arith.constant 0 : index
    %c0_38 = arith.constant 0 : index
    %89 = vector.load %arg10[%c0_36, %c0_37, %c0_38] : memref<2x32x32xbf16, #tpu.memory_space<vmem>>, vector<1x32x32xbf16>
    %90 = vector.shape_cast %89 : vector<1x32x32xbf16> to vector<32x32xbf16>
    %cst_39 = arith.constant dense<0.000000e+00> : vector<16x32xf32>
    %91 = tpu.matmul %88, %90, %cst_39 {dimension_numbers = #tpu.dot_dimension_numbers<[1], [0], [0], [1], [0, 0, 1, 1], [], []>} : vector<16x32xbf16>, vector<32x32xbf16>, vector<16x32xf32> -> vector<16x32xf32>
    %c0_40 = arith.constant 0 : index
    %c0_41 = arith.constant 0 : index
    %c0_42 = arith.constant 0 : index
    %92 = vector.load %arg11[%c0_40, %c0_41, %c0_42] : memref<2x1x32xf32, #tpu.memory_space<vmem>>, vector<1x1x32xf32>
    %93 = vector.shape_cast %92 : vector<1x1x32xf32> to vector<1x32xf32>
    %94 = vector.broadcast %93 : vector<1x32xf32> to vector<16x32xf32>
    %95 = arith.addf %91, %94 : vector<16x32xf32>
    %96 = arith.addf %95, %36 : vector<16x32xf32>
    %c0_43 = arith.constant 0 : index
    %c0_44 = arith.constant 0 : index
    %c0_45 = arith.constant 0 : index
    %97 = vector.load %arg12[%c0_43, %c0_44, %c0_45] : memref<2x1x32xf32, #tpu.memory_space<vmem>>, vector<1x1x32xf32>
    %98 = vector.shape_cast %97 : vector<1x1x32xf32> to vector<1x32xf32>
    %c0_46 = arith.constant 0 : index
    %c0_47 = arith.constant 0 : index
    %c0_48 = arith.constant 0 : index
    %99 = vector.load %arg13[%c0_46, %c0_47, %c0_48] : memref<2x1x32xf32, #tpu.memory_space<vmem>>, vector<1x1x32xf32>
    %100 = vector.shape_cast %99 : vector<1x1x32xf32> to vector<1x32xf32>
    %cst_49 = arith.constant dense<0.000000e+00> : vector<16xf32>
    %101 = vector.multi_reduction <add>, %96, %cst_49 [1] : vector<16x32xf32> to vector<16xf32>
    %102 = vector.shape_cast %101 : vector<16xf32> to vector<16x1xf32>
    %cst_50 = arith.constant 3.200000e+01 : f32
    %103 = vector.broadcast %cst_50 : f32 to vector<16x1xf32>
    %104 = arith.divf %102, %103 : vector<16x1xf32>
    %105 = vector.broadcast %104 : vector<16x1xf32> to vector<16x32xf32>
    %106 = arith.subf %96, %105 : vector<16x32xf32>
    %107 = arith.mulf %106, %106 : vector<16x32xf32>
    %cst_51 = arith.constant dense<0.000000e+00> : vector<16xf32>
    %108 = vector.multi_reduction <add>, %107, %cst_51 [1] : vector<16x32xf32> to vector<16xf32>
    %109 = vector.shape_cast %108 : vector<16xf32> to vector<16x1xf32>
    %cst_52 = arith.constant 3.200000e+01 : f32
    %110 = vector.broadcast %cst_52 : f32 to vector<16x1xf32>
    %111 = arith.divf %109, %110 : vector<16x1xf32>
    %cst_53 = arith.constant 9.99999996E-13 : f32
    %112 = vector.broadcast %cst_53 : f32 to vector<16x1xf32>
    %113 = arith.addf %111, %112 : vector<16x1xf32>
    %114 = math.rsqrt %113 : vector<16x1xf32>
    %115 = vector.broadcast %114 : vector<16x1xf32> to vector<16x32xf32>
    %116 = arith.mulf %106, %115 : vector<16x32xf32>
    %117 = vector.broadcast %98 : vector<1x32xf32> to vector<16x32xf32>
    %118 = arith.mulf %116, %117 : vector<16x32xf32>
    %119 = vector.broadcast %100 : vector<1x32xf32> to vector<16x32xf32>
    %120 = arith.addf %118, %119 : vector<16x32xf32>
    %121 = arith.truncf %120 : vector<16x32xf32> to vector<16x32xbf16>
    %c0_54 = arith.constant 0 : index
    %c0_55 = arith.constant 0 : index
    %c0_56 = arith.constant 0 : index
    %122 = vector.load %arg14[%c0_54, %c0_55, %c0_56] : memref<2x32x64xbf16, #tpu.memory_space<vmem>>, vector<1x32x64xbf16>
    %123 = vector.shape_cast %122 : vector<1x32x64xbf16> to vector<32x64xbf16>
    %cst_57 = arith.constant dense<0.000000e+00> : vector<16x64xf32>
    %124 = tpu.matmul %121, %123, %cst_57 {dimension_numbers = #tpu.dot_dimension_numbers<[1], [0], [0], [1], [0, 0, 1, 1], [], []>} : vector<16x32xbf16>, vector<32x64xbf16>, vector<16x64xf32> -> vector<16x64xf32>
    %c0_58 = arith.constant 0 : index
    %c0_59 = arith.constant 0 : index
    %c0_60 = arith.constant 0 : index
    %125 = vector.load %arg15[%c0_58, %c0_59, %c0_60] : memref<2x1x64xf32, #tpu.memory_space<vmem>>, vector<1x1x64xf32>
    %126 = vector.shape_cast %125 : vector<1x1x64xf32> to vector<1x64xf32>
    %127 = vector.broadcast %126 : vector<1x64xf32> to vector<16x64xf32>
    %128 = arith.addf %124, %127 : vector<16x64xf32>
    %cst_61 = arith.constant 5.000000e-01 : f32
    %129 = vector.broadcast %cst_61 : f32 to vector<16x64xf32>
    %130 = arith.mulf %129, %128 : vector<16x64xf32>
    %cst_62 = arith.constant 4.471500e-02 : f32
    %131 = vector.broadcast %cst_62 : f32 to vector<16x64xf32>
    %132 = arith.mulf %131, %128 : vector<16x64xf32>
    %133 = arith.mulf %132, %128 : vector<16x64xf32>
    %134 = arith.mulf %133, %128 : vector<16x64xf32>
    %135 = arith.addf %128, %134 : vector<16x64xf32>
    %cst_63 = arith.constant 0.797884583 : f32
    %136 = vector.broadcast %cst_63 : f32 to vector<16x64xf32>
    %137 = arith.mulf %136, %135 : vector<16x64xf32>
    %138 = math.tanh %137 : vector<16x64xf32>
    %cst_64 = arith.constant 1.000000e+00 : f32
    %139 = vector.broadcast %cst_64 : f32 to vector<16x64xf32>
    %140 = arith.addf %139, %138 : vector<16x64xf32>
    %141 = arith.mulf %130, %140 : vector<16x64xf32>
    %142 = arith.truncf %141 : vector<16x64xf32> to vector<16x64xbf16>
    %c0_65 = arith.constant 0 : index
    %c0_66 = arith.constant 0 : index
    %c0_67 = arith.constant 0 : index
    %143 = vector.load %arg16[%c0_65, %c0_66, %c0_67] : memref<2x64x32xbf16, #tpu.memory_space<vmem>>, vector<1x64x32xbf16>
    %144 = vector.shape_cast %143 : vector<1x64x32xbf16> to vector<64x32xbf16>
    %cst_68 = arith.constant dense<0.000000e+00> : vector<16x32xf32>
    %145 = tpu.matmul %142, %144, %cst_68 {dimension_numbers = #tpu.dot_dimension_numbers<[1], [0], [0], [1], [0, 0, 1, 1], [], []>} : vector<16x64xbf16>, vector<64x32xbf16>, vector<16x32xf32> -> vector<16x32xf32>
    %c0_69 = arith.constant 0 : index
    %c0_70 = arith.constant 0 : index
    %c0_71 = arith.constant 0 : index
    %146 = vector.load %arg17[%c0_69, %c0_70, %c0_71] : memref<2x1x32xf32, #tpu.memory_space<vmem>>, vector<1x1x32xf32>
    %147 = vector.shape_cast %146 : vector<1x1x32xf32> to vector<1x32xf32>
    %148 = vector.broadcast %147 : vector<1x32xf32> to vector<16x32xf32>
    %149 = arith.addf %145, %148 : vector<16x32xf32>
    %150 = arith.addf %149, %120 : vector<16x32xf32>
    %c0_72 = arith.constant 0 : index
    %c0_73 = arith.constant 0 : index
    %c0_74 = arith.constant 0 : index
    %151 = vector.load %arg18[%c0_72, %c0_73, %c0_74] : memref<2x1x32xf32, #tpu.memory_space<vmem>>, vector<1x1x32xf32>
    %152 = vector.shape_cast %151 : vector<1x1x32xf32> to vector<1x32xf32>
    %c0_75 = arith.constant 0 : index
    %c0_76 = arith.constant 0 : index
    %c0_77 = arith.constant 0 : index
    %153 = vector.load %arg19[%c0_75, %c0_76, %c0_77] : memref<2x1x32xf32, #tpu.memory_space<vmem>>, vector<1x1x32xf32>
    %154 = vector.shape_cast %153 : vector<1x1x32xf32> to vector<1x32xf32>
    %cst_78 = arith.constant dense<0.000000e+00> : vector<16xf32>
    %155 = vector.multi_reduction <add>, %150, %cst_78 [1] : vector<16x32xf32> to vector<16xf32>
    %156 = vector.shape_cast %155 : vector<16xf32> to vector<16x1xf32>
    %cst_79 = arith.constant 3.200000e+01 : f32
    %157 = vector.broadcast %cst_79 : f32 to vector<16x1xf32>
    %158 = arith.divf %156, %157 : vector<16x1xf32>
    %159 = vector.broadcast %158 : vector<16x1xf32> to vector<16x32xf32>
    %160 = arith.subf %150, %159 : vector<16x32xf32>
    %161 = arith.mulf %160, %160 : vector<16x32xf32>
    %cst_80 = arith.constant dense<0.000000e+00> : vector<16xf32>
    %162 = vector.multi_reduction <add>, %161, %cst_80 [1] : vector<16x32xf32> to vector<16xf32>
    %163 = vector.shape_cast %162 : vector<16xf32> to vector<16x1xf32>
    %cst_81 = arith.constant 3.200000e+01 : f32
    %164 = vector.broadcast %cst_81 : f32 to vector<16x1xf32>
    %165 = arith.divf %163, %164 : vector<16x1xf32>
    %cst_82 = arith.constant 9.99999996E-13 : f32
    %166 = vector.broadcast %cst_82 : f32 to vector<16x1xf32>
    %167 = arith.addf %165, %166 : vector<16x1xf32>
    %168 = math.rsqrt %167 : vector<16x1xf32>
    %169 = vector.broadcast %168 : vector<16x1xf32> to vector<16x32xf32>
    %170 = arith.mulf %160, %169 : vector<16x32xf32>
    %171 = vector.broadcast %152 : vector<1x32xf32> to vector<16x32xf32>
    %172 = arith.mulf %170, %171 : vector<16x32xf32>
    %173 = vector.broadcast %154 : vector<1x32xf32> to vector<16x32xf32>
    %174 = arith.addf %172, %173 : vector<16x32xf32>
    %175 = arith.truncf %174 : vector<16x32xf32> to vector<16x32xbf16>
    %c1 = arith.constant 1 : index
    %c0_83 = arith.constant 0 : index
    %c0_84 = arith.constant 0 : index
    %176 = vector.load %arg8[%c1, %c0_83, %c0_84] : memref<2x32x96xbf16, #tpu.memory_space<vmem>>, vector<1x32x96xbf16>
    %177 = vector.shape_cast %176 : vector<1x32x96xbf16> to vector<32x96xbf16>
    %cst_85 = arith.constant dense<0.000000e+00> : vector<16x96xf32>
    %178 = tpu.matmul %175, %177, %cst_85 {dimension_numbers = #tpu.dot_dimension_numbers<[1], [0], [0], [1], [0, 0, 1, 1], [], []>} : vector<16x32xbf16>, vector<32x96xbf16>, vector<16x96xf32> -> vector<16x96xf32>
    %c1_86 = arith.constant 1 : index
    %c0_87 = arith.constant 0 : index
    %c0_88 = arith.constant 0 : index
    %179 = vector.load %arg9[%c1_86, %c0_87, %c0_88] : memref<2x1x96xf32, #tpu.memory_space<vmem>>, vector<1x1x96xf32>
    %180 = vector.shape_cast %179 : vector<1x1x96xf32> to vector<1x96xf32>
    %181 = vector.broadcast %180 : vector<1x96xf32> to vector<16x96xf32>
    %182 = arith.addf %178, %181 : vector<16x96xf32>
    %183 = vector.shape_cast %182 : vector<16x96xf32> to vector<2x8x96xf32>
    %184 = vector.extract_strided_slice %183 {offsets = [0, 0, 0], sizes = [2, 8, 16], strides = [1, 1, 1]} : vector<2x8x96xf32> to vector<2x8x16xf32>
    %185 = vector.extract_strided_slice %183 {offsets = [0, 0, 32], sizes = [2, 8, 16], strides = [1, 1, 1]} : vector<2x8x96xf32> to vector<2x8x16xf32>
    %186 = vector.extract_strided_slice %183 {offsets = [0, 0, 64], sizes = [2, 8, 16], strides = [1, 1, 1]} : vector<2x8x96xf32> to vector<2x8x16xf32>
    "tpu.trace_start"() <{level = 10 : i32, message = "bqd,bkd->bqk"}> : () -> ()
    %cst_89 = arith.constant dense<0.000000e+00> : vector<2x8x8xf32>
    %187 = tpu.matmul %184, %185, %cst_89 {dimension_numbers = #tpu.dot_dimension_numbers<[2], [2], [1], [1], [0, 0, 0, 1, 1, 1], [0], [0]>} : vector<2x8x16xf32>, vector<2x8x16xf32>, vector<2x8x8xf32> -> vector<2x8x8xf32>
    "tpu.trace_stop"() : () -> ()
    %188 = vector.broadcast %42 : vector<2x1x8xf32> to vector<2x8x8xf32>
    %189 = arith.addf %187, %188 : vector<2x8x8xf32>
    %cst_90 = arith.constant dense<0xFF800000> : vector<2x8xf32>
    %190 = vector.multi_reduction <maximumf>, %189, %cst_90 [2] : vector<2x8x8xf32> to vector<2x8xf32>
    %191 = vector.shape_cast %190 : vector<2x8xf32> to vector<2x8x1xf32>
    %192 = vector.broadcast %191 : vector<2x8x1xf32> to vector<2x8x8xf32>
    %193 = arith.subf %189, %192 : vector<2x8x8xf32>
    %194 = math.exp %193 : vector<2x8x8xf32>
    %cst_91 = arith.constant dense<0.000000e+00> : vector<2x8xf32>
    %195 = vector.multi_reduction <add>, %194, %cst_91 [2] : vector<2x8x8xf32> to vector<2x8xf32>
    %196 = vector.shape_cast %195 : vector<2x8xf32> to vector<2x8x1xf32>
    %197 = tpu.reciprocal %196 {approx = true} : vector<2x8x1xf32> -> vector<2x8x1xf32>
    %198 = vector.broadcast %197 : vector<2x8x1xf32> to vector<2x8x8xf32>
    %199 = arith.mulf %194, %198 : vector<2x8x8xf32>
    "tpu.trace_start"() <{level = 10 : i32, message = "bqk,bkd->bqd"}> : () -> ()
    %cst_92 = arith.constant dense<0.000000e+00> : vector<2x8x16xf32>
    %200 = tpu.matmul %199, %186, %cst_92 {dimension_numbers = #tpu.dot_dimension_numbers<[2], [1], [1], [2], [0, 0, 0, 1, 1, 2], [0], [0]>} : vector<2x8x8xf32>, vector<2x8x16xf32>, vector<2x8x16xf32> -> vector<2x8x16xf32>
    "tpu.trace_stop"() : () -> ()
    %201 = vector.extract_strided_slice %183 {offsets = [0, 0, 16], sizes = [2, 8, 16], strides = [1, 1, 1]} : vector<2x8x96xf32> to vector<2x8x16xf32>
    %202 = vector.extract_strided_slice %183 {offsets = [0, 0, 48], sizes = [2, 8, 16], strides = [1, 1, 1]} : vector<2x8x96xf32> to vector<2x8x16xf32>
    %203 = vector.extract_strided_slice %183 {offsets = [0, 0, 80], sizes = [2, 8, 16], strides = [1, 1, 1]} : vector<2x8x96xf32> to vector<2x8x16xf32>
    "tpu.trace_start"() <{level = 10 : i32, message = "bqd,bkd->bqk"}> : () -> ()
    %cst_93 = arith.constant dense<0.000000e+00> : vector<2x8x8xf32>
    %204 = tpu.matmul %201, %202, %cst_93 {dimension_numbers = #tpu.dot_dimension_numbers<[2], [2], [1], [1], [0, 0, 0, 1, 1, 1], [0], [0]>} : vector<2x8x16xf32>, vector<2x8x16xf32>, vector<2x8x8xf32> -> vector<2x8x8xf32>
    "tpu.trace_stop"() : () -> ()
    %205 = vector.broadcast %42 : vector<2x1x8xf32> to vector<2x8x8xf32>
    %206 = arith.addf %204, %205 : vector<2x8x8xf32>
    %cst_94 = arith.constant dense<0xFF800000> : vector<2x8xf32>
    %207 = vector.multi_reduction <maximumf>, %206, %cst_94 [2] : vector<2x8x8xf32> to vector<2x8xf32>
    %208 = vector.shape_cast %207 : vector<2x8xf32> to vector<2x8x1xf32>
    %209 = vector.broadcast %208 : vector<2x8x1xf32> to vector<2x8x8xf32>
    %210 = arith.subf %206, %209 : vector<2x8x8xf32>
    %211 = math.exp %210 : vector<2x8x8xf32>
    %cst_95 = arith.constant dense<0.000000e+00> : vector<2x8xf32>
    %212 = vector.multi_reduction <add>, %211, %cst_95 [2] : vector<2x8x8xf32> to vector<2x8xf32>
    %213 = vector.shape_cast %212 : vector<2x8xf32> to vector<2x8x1xf32>
    %214 = tpu.reciprocal %213 {approx = true} : vector<2x8x1xf32> -> vector<2x8x1xf32>
    %215 = vector.broadcast %214 : vector<2x8x1xf32> to vector<2x8x8xf32>
    %216 = arith.mulf %211, %215 : vector<2x8x8xf32>
    "tpu.trace_start"() <{level = 10 : i32, message = "bqk,bkd->bqd"}> : () -> ()
    %cst_96 = arith.constant dense<0.000000e+00> : vector<2x8x16xf32>
    %217 = tpu.matmul %216, %203, %cst_96 {dimension_numbers = #tpu.dot_dimension_numbers<[2], [1], [1], [2], [0, 0, 0, 1, 1, 2], [0], [0]>} : vector<2x8x8xf32>, vector<2x8x16xf32>, vector<2x8x16xf32> -> vector<2x8x16xf32>
    "tpu.trace_stop"() : () -> ()
    %218 = tpu.concatenate %200, %217 in 2 : vector<2x8x16xf32>, vector<2x8x16xf32> -> vector<2x8x32xf32>
    %219 = vector.shape_cast %218 : vector<2x8x32xf32> to vector<16x32xf32>
    %220 = arith.truncf %219 : vector<16x32xf32> to vector<16x32xbf16>
    %c1_97 = arith.constant 1 : index
    %c0_98 = arith.constant 0 : index
    %c0_99 = arith.constant 0 : index
    %221 = vector.load %arg10[%c1_97, %c0_98, %c0_99] : memref<2x32x32xbf16, #tpu.memory_space<vmem>>, vector<1x32x32xbf16>
    %222 = vector.shape_cast %221 : vector<1x32x32xbf16> to vector<32x32xbf16>
    %cst_100 = arith.constant dense<0.000000e+00> : vector<16x32xf32>
    %223 = tpu.matmul %220, %222, %cst_100 {dimension_numbers = #tpu.dot_dimension_numbers<[1], [0], [0], [1], [0, 0, 1, 1], [], []>} : vector<16x32xbf16>, vector<32x32xbf16>, vector<16x32xf32> -> vector<16x32xf32>
    %c1_101 = arith.constant 1 : index
    %c0_102 = arith.constant 0 : index
    %c0_103 = arith.constant 0 : index
    %224 = vector.load %arg11[%c1_101, %c0_102, %c0_103] : memref<2x1x32xf32, #tpu.memory_space<vmem>>, vector<1x1x32xf32>
    %225 = vector.shape_cast %224 : vector<1x1x32xf32> to vector<1x32xf32>
    %226 = vector.broadcast %225 : vector<1x32xf32> to vector<16x32xf32>
    %227 = arith.addf %223, %226 : vector<16x32xf32>
    %228 = arith.addf %227, %174 : vector<16x32xf32>
    %c1_104 = arith.constant 1 : index
    %c0_105 = arith.constant 0 : index
    %c0_106 = arith.constant 0 : index
    %229 = vector.load %arg12[%c1_104, %c0_105, %c0_106] : memref<2x1x32xf32, #tpu.memory_space<vmem>>, vector<1x1x32xf32>
    %230 = vector.shape_cast %229 : vector<1x1x32xf32> to vector<1x32xf32>
    %c1_107 = arith.constant 1 : index
    %c0_108 = arith.constant 0 : index
    %c0_109 = arith.constant 0 : index
    %231 = vector.load %arg13[%c1_107, %c0_108, %c0_109] : memref<2x1x32xf32, #tpu.memory_space<vmem>>, vector<1x1x32xf32>
    %232 = vector.shape_cast %231 : vector<1x1x32xf32> to vector<1x32xf32>
    %cst_110 = arith.constant dense<0.000000e+00> : vector<16xf32>
    %233 = vector.multi_reduction <add>, %228, %cst_110 [1] : vector<16x32xf32> to vector<16xf32>
    %234 = vector.shape_cast %233 : vector<16xf32> to vector<16x1xf32>
    %cst_111 = arith.constant 3.200000e+01 : f32
    %235 = vector.broadcast %cst_111 : f32 to vector<16x1xf32>
    %236 = arith.divf %234, %235 : vector<16x1xf32>
    %237 = vector.broadcast %236 : vector<16x1xf32> to vector<16x32xf32>
    %238 = arith.subf %228, %237 : vector<16x32xf32>
    %239 = arith.mulf %238, %238 : vector<16x32xf32>
    %cst_112 = arith.constant dense<0.000000e+00> : vector<16xf32>
    %240 = vector.multi_reduction <add>, %239, %cst_112 [1] : vector<16x32xf32> to vector<16xf32>
    %241 = vector.shape_cast %240 : vector<16xf32> to vector<16x1xf32>
    %cst_113 = arith.constant 3.200000e+01 : f32
    %242 = vector.broadcast %cst_113 : f32 to vector<16x1xf32>
    %243 = arith.divf %241, %242 : vector<16x1xf32>
    %cst_114 = arith.constant 9.99999996E-13 : f32
    %244 = vector.broadcast %cst_114 : f32 to vector<16x1xf32>
    %245 = arith.addf %243, %244 : vector<16x1xf32>
    %246 = math.rsqrt %245 : vector<16x1xf32>
    %247 = vector.broadcast %246 : vector<16x1xf32> to vector<16x32xf32>
    %248 = arith.mulf %238, %247 : vector<16x32xf32>
    %249 = vector.broadcast %230 : vector<1x32xf32> to vector<16x32xf32>
    %250 = arith.mulf %248, %249 : vector<16x32xf32>
    %251 = vector.broadcast %232 : vector<1x32xf32> to vector<16x32xf32>
    %252 = arith.addf %250, %251 : vector<16x32xf32>
    %253 = arith.truncf %252 : vector<16x32xf32> to vector<16x32xbf16>
    %c1_115 = arith.constant 1 : index
    %c0_116 = arith.constant 0 : index
    %c0_117 = arith.constant 0 : index
    %254 = vector.load %arg14[%c1_115, %c0_116, %c0_117] : memref<2x32x64xbf16, #tpu.memory_space<vmem>>, vector<1x32x64xbf16>
    %255 = vector.shape_cast %254 : vector<1x32x64xbf16> to vector<32x64xbf16>
    %cst_118 = arith.constant dense<0.000000e+00> : vector<16x64xf32>
    %256 = tpu.matmul %253, %255, %cst_118 {dimension_numbers = #tpu.dot_dimension_numbers<[1], [0], [0], [1], [0, 0, 1, 1], [], []>} : vector<16x32xbf16>, vector<32x64xbf16>, vector<16x64xf32> -> vector<16x64xf32>
    %c1_119 = arith.constant 1 : index
    %c0_120 = arith.constant 0 : index
    %c0_121 = arith.constant 0 : index
    %257 = vector.load %arg15[%c1_119, %c0_120, %c0_121] : memref<2x1x64xf32, #tpu.memory_space<vmem>>, vector<1x1x64xf32>
    %258 = vector.shape_cast %257 : vector<1x1x64xf32> to vector<1x64xf32>
    %259 = vector.broadcast %258 : vector<1x64xf32> to vector<16x64xf32>
    %260 = arith.addf %256, %259 : vector<16x64xf32>
    %cst_122 = arith.constant 5.000000e-01 : f32
    %261 = vector.broadcast %cst_122 : f32 to vector<16x64xf32>
    %262 = arith.mulf %261, %260 : vector<16x64xf32>
    %cst_123 = arith.constant 4.471500e-02 : f32
    %263 = vector.broadcast %cst_123 : f32 to vector<16x64xf32>
    %264 = arith.mulf %263, %260 : vector<16x64xf32>
    %265 = arith.mulf %264, %260 : vector<16x64xf32>
    %266 = arith.mulf %265, %260 : vector<16x64xf32>
    %267 = arith.addf %260, %266 : vector<16x64xf32>
    %cst_124 = arith.constant 0.797884583 : f32
    %268 = vector.broadcast %cst_124 : f32 to vector<16x64xf32>
    %269 = arith.mulf %268, %267 : vector<16x64xf32>
    %270 = math.tanh %269 : vector<16x64xf32>
    %cst_125 = arith.constant 1.000000e+00 : f32
    %271 = vector.broadcast %cst_125 : f32 to vector<16x64xf32>
    %272 = arith.addf %271, %270 : vector<16x64xf32>
    %273 = arith.mulf %262, %272 : vector<16x64xf32>
    %274 = arith.truncf %273 : vector<16x64xf32> to vector<16x64xbf16>
    %c1_126 = arith.constant 1 : index
    %c0_127 = arith.constant 0 : index
    %c0_128 = arith.constant 0 : index
    %275 = vector.load %arg16[%c1_126, %c0_127, %c0_128] : memref<2x64x32xbf16, #tpu.memory_space<vmem>>, vector<1x64x32xbf16>
    %276 = vector.shape_cast %275 : vector<1x64x32xbf16> to vector<64x32xbf16>
    %cst_129 = arith.constant dense<0.000000e+00> : vector<16x32xf32>
    %277 = tpu.matmul %274, %276, %cst_129 {dimension_numbers = #tpu.dot_dimension_numbers<[1], [0], [0], [1], [0, 0, 1, 1], [], []>} : vector<16x64xbf16>, vector<64x32xbf16>, vector<16x32xf32> -> vector<16x32xf32>
    %c1_130 = arith.constant 1 : index
    %c0_131 = arith.constant 0 : index
    %c0_132 = arith.constant 0 : index
    %278 = vector.load %arg17[%c1_130, %c0_131, %c0_132] : memref<2x1x32xf32, #tpu.memory_space<vmem>>, vector<1x1x32xf32>
    %279 = vector.shape_cast %278 : vector<1x1x32xf32> to vector<1x32xf32>
    %280 = vector.broadcast %279 : vector<1x32xf32> to vector<16x32xf32>
    %281 = arith.addf %277, %280 : vector<16x32xf32>
    %282 = arith.addf %281, %252 : vector<16x32xf32>
    %c1_133 = arith.constant 1 : index
    %c0_134 = arith.constant 0 : index
    %c0_135 = arith.constant 0 : index
    %283 = vector.load %arg18[%c1_133, %c0_134, %c0_135] : memref<2x1x32xf32, #tpu.memory_space<vmem>>, vector<1x1x32xf32>
    %284 = vector.shape_cast %283 : vector<1x1x32xf32> to vector<1x32xf32>
    %c1_136 = arith.constant 1 : index
    %c0_137 = arith.constant 0 : index
    %c0_138 = arith.constant 0 : index
    %285 = vector.load %arg19[%c1_136, %c0_137, %c0_138] : memref<2x1x32xf32, #tpu.memory_space<vmem>>, vector<1x1x32xf32>
    %286 = vector.shape_cast %285 : vector<1x1x32xf32> to vector<1x32xf32>
    %cst_139 = arith.constant dense<0.000000e+00> : vector<16xf32>
    %287 = vector.multi_reduction <add>, %282, %cst_139 [1] : vector<16x32xf32> to vector<16xf32>
    %288 = vector.shape_cast %287 : vector<16xf32> to vector<16x1xf32>
    %cst_140 = arith.constant 3.200000e+01 : f32
    %289 = vector.broadcast %cst_140 : f32 to vector<16x1xf32>
    %290 = arith.divf %288, %289 : vector<16x1xf32>
    %291 = vector.broadcast %290 : vector<16x1xf32> to vector<16x32xf32>
    %292 = arith.subf %282, %291 : vector<16x32xf32>
    %293 = arith.mulf %292, %292 : vector<16x32xf32>
    %cst_141 = arith.constant dense<0.000000e+00> : vector<16xf32>
    %294 = vector.multi_reduction <add>, %293, %cst_141 [1] : vector<16x32xf32> to vector<16xf32>
    %295 = vector.shape_cast %294 : vector<16xf32> to vector<16x1xf32>
    %cst_142 = arith.constant 3.200000e+01 : f32
    %296 = vector.broadcast %cst_142 : f32 to vector<16x1xf32>
    %297 = arith.divf %295, %296 : vector<16x1xf32>
    %cst_143 = arith.constant 9.99999996E-13 : f32
    %298 = vector.broadcast %cst_143 : f32 to vector<16x1xf32>
    %299 = arith.addf %297, %298 : vector<16x1xf32>
    %300 = math.rsqrt %299 : vector<16x1xf32>
    %301 = vector.broadcast %300 : vector<16x1xf32> to vector<16x32xf32>
    %302 = arith.mulf %292, %301 : vector<16x32xf32>
    %303 = vector.broadcast %284 : vector<1x32xf32> to vector<16x32xf32>
    %304 = arith.mulf %302, %303 : vector<16x32xf32>
    %305 = vector.broadcast %286 : vector<1x32xf32> to vector<16x32xf32>
    %306 = arith.addf %304, %305 : vector<16x32xf32>
    %307 = arith.truncf %306 : vector<16x32xf32> to vector<16x32xbf16>
    %c0_144 = arith.constant 0 : index
    %c0_145 = arith.constant 0 : index
    %308 = vector.load %arg20[%c0_144, %c0_145] : memref<32x32xbf16, #tpu.memory_space<vmem>>, vector<32x32xbf16>
    %cst_146 = arith.constant dense<0.000000e+00> : vector<16x32xf32>
    %309 = tpu.matmul %307, %308, %cst_146 {dimension_numbers = #tpu.dot_dimension_numbers<[1], [0], [0], [1], [0, 0, 1, 1], [], []>} : vector<16x32xbf16>, vector<32x32xbf16>, vector<16x32xf32> -> vector<16x32xf32>
    %c0_147 = arith.constant 0 : index
    %c0_148 = arith.constant 0 : index
    %310 = vector.load %arg21[%c0_147, %c0_148] : memref<1x32xf32, #tpu.memory_space<vmem>>, vector<1x32xf32>
    %311 = vector.broadcast %310 : vector<1x32xf32> to vector<16x32xf32>
    %312 = arith.addf %309, %311 : vector<16x32xf32>
    %313 = math.tanh %312 : vector<16x32xf32>
    %314 = arith.truncf %313 : vector<16x32xf32> to vector<16x32xbf16>
    %c0_149 = arith.constant 0 : index
    %c0_150 = arith.constant 0 : index
    %315 = vector.load %arg22[%c0_149, %c0_150] : memref<32x128xbf16, #tpu.memory_space<vmem>>, vector<32x128xbf16>
    %cst_151 = arith.constant dense<0.000000e+00> : vector<16x128xf32>
    %316 = tpu.matmul %314, %315, %cst_151 {dimension_numbers = #tpu.dot_dimension_numbers<[1], [0], [0], [1], [0, 0, 1, 1], [], []>} : vector<16x32xbf16>, vector<32x128xbf16>, vector<16x128xf32> -> vector<16x128xf32>
    %c0_152 = arith.constant 0 : index
    %c0_153 = arith.constant 0 : index
    %317 = vector.load %arg23[%c0_152, %c0_153] : memref<1x128xf32, #tpu.memory_space<vmem>>, vector<1x128xf32>
    %318 = vector.broadcast %317 : vector<1x128xf32> to vector<16x128xf32>
    %319 = arith.addf %316, %318 : vector<16x128xf32>
    %c0_154 = arith.constant 0 : index
    %c0_155 = arith.constant 0 : index
    %320 = vector.load %arg24[%c0_154, %c0_155] : memref<16x128xf32, #tpu.memory_space<vmem>>, vector<16x128xf32>
    tpu.vector_store %arg24[%c0_154, %c0_155], %319 {strides = array<i32>} : memref<16x128xf32, #tpu.memory_space<vmem>>, vector<16x128xf32>,
    return
  }
  func.func @transform_0(%arg0: i32) -> (i32, i32) {
    %c0_i32 = arith.constant 0 : i32
    %c0_i32_0 = arith.constant 0 : i32
    %c0_i32_1 = arith.constant 0 : i32
    return %c0_i32, %c0_i32_0 : i32, i32
  }
  func.func @transform_1(%arg0: i32) -> (i32, i32, i32) {
    %c0_i32 = arith.constant 0 : i32
    %c0_i32_0 = arith.constant 0 : i32
    %c0_i32_1 = arith.constant 0 : i32
    %c0_i32_2 = arith.constant 0 : i32
    return %c0_i32, %c0_i32_0, %c0_i32_1 : i32, i32, i32
  }
  func.func @transform_2(%arg0: i32) -> (i32, i32) {
    %c0_i32 = arith.constant 0 : i32
    %c0_i32_0 = arith.constant 0 : i32
    %c0_i32_1 = arith.constant 0 : i32
    return %c0_i32, %c0_i32_0 : i32, i32
  }
  func.func @transform_3(%arg0: i32) -> (i32, i32) {
    %c0_i32 = arith.constant 0 : i32
    %c0_i32_0 = arith.constant 0 : i32
    %c0_i32_1 = arith.constant 0 : i32
    return %c0_i32, %c0_i32_0 : i32, i32
  }
  func.func @transform_4(%arg0: i32) -> (i32, i32) {
    %c0_i32 = arith.constant 0 : i32
    %c0_i32_0 = arith.constant 0 : i32
    %c0_i32_1 = arith.constant 0 : i32
    return %c0_i32, %c0_i32_0 : i32, i32
  }
  func.func @transform_5(%arg0: i32) -> (i32, i32) {
    %c0_i32 = arith.constant 0 : i32
    %c0_i32_0 = arith.constant 0 : i32
    %c0_i32_1 = arith.constant 0 : i32
    return %c0_i32, %c0_i32_0 : i32, i32
  }
  func.func @transform_6(%arg0: i32) -> (i32, i32) {
    %c0_i32 = arith.constant 0 : i32
    %c0_i32_0 = arith.constant 0 : i32
    %c0_i32_1 = arith.constant 0 : i32
    return %c0_i32, %c0_i32_0 : i32, i32
  }
  func.func @transform_7(%arg0: i32) -> (i32, i32, i32) {
    %c0_i32 = arith.constant 0 : i32
    %c0_i32_0 = arith.constant 0 : i32
    %c0_i32_1 = arith.constant 0 : i32
    %c0_i32_2 = arith.constant 0 : i32
    return %c0_i32, %c0_i32_0, %c0_i32_1 : i32, i32, i32
  }
  func.func @transform_8(%arg0: i32) -> (i32, i32, i32) {
    %c0_i32 = arith.constant 0 : i32
    %c0_i32_0 = arith.constant 0 : i32
    %c0_i32_1 = arith.constant 0 : i32
    %c0_i32_2 = arith.constant 0 : i32
    return %c0_i32, %c0_i32_0, %c0_i32_1 : i32, i32, i32
  }
  func.func @transform_9(%arg0: i32) -> (i32, i32, i32) {
    %c0_i32 = arith.constant 0 : i32
    %c0_i32_0 = arith.constant 0 : i32
    %c0_i32_1 = arith.constant 0 : i32
    %c0_i32_2 = arith.constant 0 : i32
    return %c0_i32, %c0_i32_0, %c0_i32_1 : i32, i32, i32
  }
  func.func @transform_10(%arg0: i32) -> (i32, i32, i32) {
    %c0_i32 = arith.constant 0 : i32
    %c0_i32_0 = arith.constant 0 : i32
    %c0_i32_1 = arith.constant 0 : i32
    %c0_i32_2 = arith.constant 0 : i32
    return %c0_i32, %c0_i32_0, %c0_i32_1 : i32, i32, i32
  }
  func.func @transform_11(%arg0: i32) -> (i32, i32, i32) {
    %c0_i32 = arith.constant 0 : i32
    %c0_i32_0 = arith.constant 0 : i32
    %c0_i32_1 = arith.constant 0 : i32
    %c0_i32_2 = arith.constant 0 : i32
    return %c0_i32, %c0_i32_0, %c0_i32_1 : i32, i32, i32
  }
  func.func @transform_12(%arg0: i32) -> (i32, i32, i32) {
    %c0_i32 = arith.constant 0 : i32
    %c0_i32_0 = arith.constant 0 : i32
    %c0_i32_1 = arith.constant 0 : i32
    %c0_i32_2 = arith.constant 0 : i32
    return %c0_i32, %c0_i32_0, %c0_i32_1 : i32, i32, i32
  }
  func.func @transform_13(%arg0: i32) -> (i32, i32, i32) {
    %c0_i32 = arith.constant 0 : i32
    %c0_i32_0 = arith.constant 0 : i32
    %c0_i32_1 = arith.constant 0 : i32
    %c0_i32_2 = arith.constant 0 : i32
    return %c0_i32, %c0_i32_0, %c0_i32_1 : i32, i32, i32
  }
  func.func @transform_14(%arg0: i32) -> (i32, i32, i32) {
    %c0_i32 = arith.constant 0 : i32
    %c0_i32_0 = arith.constant 0 : i32
    %c0_i32_1 = arith.constant 0 : i32
    %c0_i32_2 = arith.constant 0 : i32
    return %c0_i32, %c0_i32_0, %c0_i32_1 : i32, i32, i32
  }
  func.func @transform_15(%arg0: i32) -> (i32, i32, i32) {
    %c0_i32 = arith.constant 0 : i32
    %c0_i32_0 = arith.constant 0 : i32
    %c0_i32_1 = arith.constant 0 : i32
    %c0_i32_2 = arith.constant 0 : i32
    return %c0_i32, %c0_i32_0, %c0_i32_1 : i32, i32, i32
  }
  func.func @transform_16(%arg0: i32) -> (i32, i32, i32) {
    %c0_i32 = arith.constant 0 : i32
    %c0_i32_0 = arith.constant 0 : i32
    %c0_i32_1 = arith.constant 0 : i32
    %c0_i32_2 = arith.constant 0 : i32
    return %c0_i32, %c0_i32_0, %c0_i32_1 : i32, i32, i32
  }
  func.func @transform_17(%arg0: i32) -> (i32, i32, i32) {
    %c0_i32 = arith.constant 0 : i32
    %c0_i32_0 = arith.constant 0 : i32
    %c0_i32_1 = arith.constant 0 : i32
    %c0_i32_2 = arith.constant 0 : i32
    return %c0_i32, %c0_i32_0, %c0_i32_1 : i32, i32, i32
  }
  func.func @transform_18(%arg0: i32) -> (i32, i32, i32) {
    %c0_i32 = arith.constant 0 : i32
    %c0_i32_0 = arith.constant 0 : i32
    %c0_i32_1 = arith.constant 0 : i32
    %c0_i32_2 = arith.constant 0 : i32
    return %c0_i32, %c0_i32_0, %c0_i32_1 : i32, i32, i32
  }
  func.func @transform_19(%arg0: i32) -> (i32, i32) {
    %c0_i32 = arith.constant 0 : i32
    %c0_i32_0 = arith.constant 0 : i32
    %c0_i32_1 = arith.constant 0 : i32
    return %c0_i32, %c0_i32_0 : i32, i32
  }
  func.func @transform_20(%arg0: i32) -> (i32, i32) {
    %c0_i32 = arith.constant 0 : i32
    %c0_i32_0 = arith.constant 0 : i32
    %c0_i32_1 = arith.constant 0 : i32
    return %c0_i32, %c0_i32_0 : i32, i32
  }
  func.func @transform_21(%arg0: i32) -> (i32, i32) {
    %c0_i32 = arith.constant 0 : i32
    %c0_i32_0 = arith.constant 0 : i32
    %c0_i32_1 = arith.constant 0 : i32
    return %c0_i32, %c0_i32_0 : i32, i32
  }
  func.func @transform_22(%arg0: i32) -> (i32, i32) {
    %c0_i32 = arith.constant 0 : i32
    %c0_i32_0 = arith.constant 0 : i32
    %c0_i32_1 = arith.constant 0 : i32
    return %c0_i32, %c0_i32_0 : i32, i32
  }
  func.func @transform_23(%arg0: i32) -> (i32, i32) {
    %c0_i32 = arith.constant 0 : i32
    %c0_i32_0 = arith.constant 0 : i32
    %c0_i32_1 = arith.constant 0 : i32
    return %c0_i32, %c0_i32_0 : i32, i32
  }
}

</mosaic_0001>

<llo_original>
// kernel: tpu_custom_call.1
$region0: #{tpu_custom_call.1}
  #allocation0 [shape = 'u32[]', space=smem, size = 0x4, offset = 0x4, fixed_abs, tag = 'smem constant byte address 0x4 - core index']
  #allocation1 [shape = 'u32[144,128]{1,0:T(1,128)}', space=vmem, size = 0x12000, scoped, tag = 'internal scratch']
  %s0 = inlined_call_operand.vmem [shape: s32[16,1], index: 0, kind: input, shape index: {}]
  %s1 = inlined_call_operand.vmem [shape: s32[2,1,8], index: 1, kind: input, shape index: {}]
  %s2 = inlined_call_operand.vmem [shape: bf16[128,32], index: 2, kind: input, shape index: {}]
  %s3 = inlined_call_operand.vmem [shape: f32[16,32], index: 3, kind: input, shape index: {}]
  %s4 = inlined_call_operand.vmem [shape: f32[2,32], index: 4, kind: input, shape index: {}]
  %s5 = inlined_call_operand.vmem [shape: f32[1,32], index: 5, kind: input, shape index: {}]
  %s6 = inlined_call_operand.vmem [shape: f32[1,32], index: 6, kind: input, shape index: {}]
  %s7 = inlined_call_operand.vmem [shape: bf16[2,32,96], index: 7, kind: input, shape index: {}]
  %s8 = inlined_call_operand.vmem [shape: f32[2,1,96], index: 8, kind: input, shape index: {}]
  %s9 = inlined_call_operand.vmem [shape: bf16[2,32,32], index: 9, kind: input, shape index: {}]
  %s10 = inlined_call_operand.vmem [shape: f32[2,1,32], index: 10, kind: input, shape index: {}]
  %s11 = inlined_call_operand.vmem [shape: f32[2,1,32], index: 11, kind: input, shape index: {}]
  %s12 = inlined_call_operand.vmem [shape: f32[2,1,32], index: 12, kind: input, shape index: {}]
  %s13 = inlined_call_operand.vmem [shape: bf16[2,32,64], index: 13, kind: input, shape index: {}]
  %s14 = inlined_call_operand.vmem [shape: f32[2,1,64], index: 14, kind: input, shape index: {}]
  %s15 = inlined_call_operand.vmem [shape: bf16[2,64,32], index: 15, kind: input, shape index: {}]
  %s16 = inlined_call_operand.vmem [shape: f32[2,1,32], index: 16, kind: input, shape index: {}]
  %s17 = inlined_call_operand.vmem [shape: f32[2,1,32], index: 17, kind: input, shape index: {}]
  %s18 = inlined_call_operand.vmem [shape: f32[2,1,32], index: 18, kind: input, shape index: {}]
  %s19 = inlined_call_operand.vmem [shape: bf16[32,32], index: 19, kind: input, shape index: {}]
  %s20 = inlined_call_operand.vmem [shape: f32[1,32], index: 20, kind: input, shape index: {}]
  %s21 = inlined_call_operand.vmem [shape: bf16[32,128], index: 21, kind: input, shape index: {}]
  %s22 = inlined_call_operand.vmem [shape: f32[1,128], index: 22, kind: input, shape index: {}]
  %s23 = inlined_call_operand.hbm [shape: f32[16,128], index: 23, kind: output, shape index: {}]
  %s24 = sld [smem:[#allocation0]]
  $region102: #{tpu_custom_call.1} parent=0
    _
  %s26 = ssub.s32 1, %s24
  %s27 = scalar_select 0, %s26, %s24
  $region1: #{tpu_custom_call.1} parent=0
    #allocation2 [shape = 'u8[8192]{0}', space=vmem, size = 0x2000, scoped, tag = 'output window, operand 0, single buffered']
    #allocation3 [shape = 's32[1]{0}', space=sflag, size = 0x4, scoped, tag = 'scoped memory for tpu_custom_call.1']
    %28 = vsyncpa [#allocation3], 0
    // Predicated region
    $region2: #{tpu_custom_call.1} parent=1 // pred_check
      _
    $region3: #{tpu_custom_call.1} parent=1 // pred_check_branch
      %30 = sbr.rel (0) target = $region5
    $region4: #{tpu_custom_call.1} parent=1 // pred_region
      _
    $region5: #{tpu_custom_call.1} parent=1 // pred_fallthru
      _
    // Predicated region
    $region6: #{tpu_custom_call.1} parent=1 // pred_check
      _
    $region7: #{tpu_custom_call.1} parent=1 // pred_check_branch
      %32 = sbr.rel (0) target = $region9
    $region8: #{tpu_custom_call.1} parent=1 // pred_region
      _
    $region9: #{tpu_custom_call.1} parent=1 // pred_fallthru
      _
    // Predicated region
    $region10: #{tpu_custom_call.1} parent=1 // pred_check
      _
    $region11: #{tpu_custom_call.1} parent=1 // pred_check_branch
      %34 = sbr.rel (0) target = $region13
    $region12: #{tpu_custom_call.1} parent=1 // pred_region
      _
    $region13: #{tpu_custom_call.1} parent=1 // pred_fallthru
      _
    // Predicated region
    $region14: #{tpu_custom_call.1} parent=1 // pred_check
      _
    $region15: #{tpu_custom_call.1} parent=1 // pred_check_branch
      %36 = sbr.rel (0) target = $region17
    $region16: #{tpu_custom_call.1} parent=1 // pred_region
      _
    $region17: #{tpu_custom_call.1} parent=1 // pred_fallthru
      _
    // Predicated region
    $region18: #{tpu_custom_call.1} parent=1 // pred_check
      _
    $region19: #{tpu_custom_call.1} parent=1 // pred_check_branch
      %38 = sbr.rel (0) target = $region21
    $region20: #{tpu_custom_call.1} parent=1 // pred_region
      _
    $region21: #{tpu_custom_call.1} parent=1 // pred_fallthru
      _
    // Predicated region
    $region22: #{tpu_custom_call.1} parent=1 // pred_check
      _
    $region23: #{tpu_custom_call.1} parent=1 // pred_check_branch
      %40 = sbr.rel (0) target = $region25
    $region24: #{tpu_custom_call.1} parent=1 // pred_region
      _
    $region25: #{tpu_custom_call.1} parent=1 // pred_fallthru
      _
    // Predicated region
    $region26: #{tpu_custom_call.1} parent=1 // pred_check
      _
    $region27: #{tpu_custom_call.1} parent=1 // pred_check_branch
      %42 = sbr.rel (0) target = $region29
    $region28: #{tpu_custom_call.1} parent=1 // pred_region
      _
    $region29: #{tpu_custom_call.1} parent=1 // pred_fallthru
      _
    // Predicated region
    $region30: #{tpu_custom_call.1} parent=1 // pred_check
      _
    $region31: #{tpu_custom_call.1} parent=1 // pred_check_branch
      %44 = sbr.rel (0) target = $region33
    $region32: #{tpu_custom_call.1} parent=1 // pred_region
      _
    $region33: #{tpu_custom_call.1} parent=1 // pred_fallthru
      _
    // Predicated region
    $region34: #{tpu_custom_call.1} parent=1 // pred_check
      _
    $region35: #{tpu_custom_call.1} parent=1 // pred_check_branch
      %46 = sbr.rel (0) target = $region37
    $region36: #{tpu_custom_call.1} parent=1 // pred_region
      _
    $region37: #{tpu_custom_call.1} parent=1 // pred_fallthru
      _
    // Predicated region
    $region38: #{tpu_custom_call.1} parent=1 // pred_check
      _
    $region39: #{tpu_custom_call.1} parent=1 // pred_check_branch
      %48 = sbr.rel (0) target = $region41
    $region40: #{tpu_custom_call.1} parent=1 // pred_region
      _
    $region41: #{tpu_custom_call.1} parent=1 // pred_fallthru
      _
    // Predicated region
    $region42: #{tpu_custom_call.1} parent=1 // pred_check
      _
    $region43: #{tpu_custom_call.1} parent=1 // pred_check_branch
      %50 = sbr.rel (0) target = $region45
    $region44: #{tpu_custom_call.1} parent=1 // pred_region
      _
    $region45: #{tpu_custom_call.1} parent=1 // pred_fallthru
      _
    // Predicated region
    $region46: #{tpu_custom_call.1} parent=1 // pred_check
      _
    $region47: #{tpu_custom_call.1} parent=1 // pred_check_branch
      %52 = sbr.rel (0) target = $region49
    $region48: #{tpu_custom_call.1} parent=1 // pred_region
      _
    $region49: #{tpu_custom_call.1} parent=1 // pred_fallthru
      _
    // Predicated region
    $region50: #{tpu_custom_call.1} parent=1 // pred_check
      _
    $region51: #{tpu_custom_call.1} parent=1 // pred_check_branch
      %54 = sbr.rel (0) target = $region53
    $region52: #{tpu_custom_call.1} parent=1 // pred_region
      _
    $region53: #{tpu_custom_call.1} parent=1 // pred_fallthru
      _
    // Predicated region
    $region54: #{tpu_custom_call.1} parent=1 // pred_check
      _
    $region55: #{tpu_custom_call.1} parent=1 // pred_check_branch
      %56 = sbr.rel (0) target = $region57
    $region56: #{tpu_custom_call.1} parent=1 // pred_region
      _
    $region57: #{tpu_custom_call.1} parent=1 // pred_fallthru
      _
    // Predicated region
    $region58: #{tpu_custom_call.1} parent=1 // pred_check
      _
    $region59: #{tpu_custom_call.1} parent=1 // pred_check_branch
      %58 = sbr.rel (0) target = $region61
    $region60: #{tpu_custom_call.1} parent=1 // pred_region
      _
    $region61: #{tpu_custom_call.1} parent=1 // pred_fallthru
      _
    // Predicated region
    $region62: #{tpu_custom_call.1} parent=1 // pred_check
      _
    $region63: #{tpu_custom_call.1} parent=1 // pred_check_branch
      %60 = sbr.rel (0) target = $region65
    $region64: #{tpu_custom_call.1} parent=1 // pred_region
      _
    $region65: #{tpu_custom_call.1} parent=1 // pred_fallthru
      _
    // Predicated region
    $region66: #{tpu_custom_call.1} parent=1 // pred_check
      _
    $region67: #{tpu_custom_call.1} parent=1 // pred_check_branch
      %62 = sbr.rel (0) target = $region69
    $region68: #{tpu_custom_call.1} parent=1 // pred_region
      _
    $region69: #{tpu_custom_call.1} parent=1 // pred_fallthru
      _
    // Predicated region
    $region70: #{tpu_custom_call.1} parent=1 // pred_check
      _
    $region71: #{tpu_custom_call.1} parent=1 // pred_check_branch
      %64 = sbr.rel (0) target = $region73
    $region72: #{tpu_custom_call.1} parent=1 // pred_region
      _
    $region73: #{tpu_custom_call.1} parent=1 // pred_fallthru
      _
    // Predicated region
    $region74: #{tpu_custom_call.1} parent=1 // pred_check
      _
    $region75: #{tpu_custom_call.1} parent=1 // pred_check_branch
      %66 = sbr.rel (0) target = $region77
    $region76: #{tpu_custom_call.1} parent=1 // pred_region
      _
    $region77: #{tpu_custom_call.1} parent=1 // pred_fallthru
      _
    // Predicated region
    $region78: #{tpu_custom_call.1} parent=1 // pred_check
      _
    $region79: #{tpu_custom_call.1} parent=1 // pred_check_branch
      %68 = sbr.rel (0) target = $region81
    $region80: #{tpu_custom_call.1} parent=1 // pred_region
      _
    $region81: #{tpu_custom_call.1} parent=1 // pred_fallthru
      _
    // Predicated region
    $region82: #{tpu_custom_call.1} parent=1 // pred_check
      _
    $region83: #{tpu_custom_call.1} parent=1 // pred_check_branch
      %70 = sbr.rel (0) target = $region85
    $region84: #{tpu_custom_call.1} parent=1 // pred_region
      _
    $region85: #{tpu_custom_call.1} parent=1 // pred_fallthru
      _
    // Predicated region
    $region86: #{tpu_custom_call.1} parent=1 // pred_check
      _
    $region87: #{tpu_custom_call.1} parent=1 // pred_check_branch
      %72 = sbr.rel (0) target = $region89
    $region88: #{tpu_custom_call.1} parent=1 // pred_region
      _
    $region89: #{tpu_custom_call.1} parent=1 // pred_fallthru
      _
    // Predicated region
    $region90: #{tpu_custom_call.1} parent=1 // pred_check
      _
    $region91: #{tpu_custom_call.1} parent=1 // pred_check_branch
      %74 = sbr.rel (0) target = $region93
    $region92: #{tpu_custom_call.1} parent=1 // pred_region
      _
    $region93: #{tpu_custom_call.1} parent=1 // pred_fallthru
      _
    %v76 = vld [vmem:[%s0] sm:$0xff]
    %v77 = vld [vmem:[%s0 + $0x8] sm:$0xff]
    %v78 = vlaneseq
    %v79 = vand.u32 %v78, 127
    %80 = vset.pattern.permute.xlu0 0
    %81 = vperm.xlu0 %80, %v76
    %v82 = vpop.permute.xlu0 %81
    %83 = vset.pattern.permute.xlu0 0
    %84 = vperm.xlu0 %83, %v77
    %v85 = vpop.permute.xlu0 %84
    %vm86 = vcmp.eq.s32.totalorder %v82, %v79
    %vm87 = vcmp.eq.s32.totalorder %v85, %v79
    %v88 = vsel %vm86, 1, 0
    %v89 = vsel %vm87, 1, 0
    %v90 = vcvt.s32.f32 %v88
    %v91 = vcvt.s32.f32 %v89
    %v92 = vpack.c.bf16 %v91, %v90
    %v93 = vld [vmem:[%s2] sm:$0xf]
    %v94 = vld [vmem:[%s2 + $0x4] sm:$0xf]
    %v95 = vld [vmem:[%s2 + $0x8] sm:$0xf]
    %v96 = vld [vmem:[%s2 + $0xc] sm:$0xf]
    %v97 = vld [vmem:[%s2 + $0x10] sm:$0xf]
    %v98 = vld [vmem:[%s2 + $0x14] sm:$0xf]
    %v99 = vld [vmem:[%s2 + $0x18] sm:$0xf]
    %v100 = vld [vmem:[%s2 + $0x1c] sm:$0xf]
    %v101 = vld [vmem:[%s2 + $0x20] sm:$0xf]
    %v102 = vld [vmem:[%s2 + $0x24] sm:$0xf]
    %v103 = vld [vmem:[%s2 + $0x28] sm:$0xf]
    %v104 = vld [vmem:[%s2 + $0x2c] sm:$0xf]
    %v105 = vld [vmem:[%s2 + $0x30] sm:$0xf]
    %v106 = vld [vmem:[%s2 + $0x34] sm:$0xf]
    %v107 = vld [vmem:[%s2 + $0x38] sm:$0xf]
    %v108 = vld [vmem:[%s2 + $0x3c] sm:$0xf]
    %v109 = vld [vmem:[%s3] sm:$0xff]
    %v110 = vld [vmem:[%s4] sm:$0x1]
    %v111 = vlaneseq
    %v112 = vshrl.u32 %v111, 7
    %v113 = vsub.s32 0, %v112
    %v114 = vrot.slane %v110, %v113
    %v115 = vadd.f32 %v109, %v114
    %v132 = vunpack.c.l.b16 %v93
    %v133 = vunpack.c.l.b16 %v94
    %v134 = vunpack.c.l.b16 %v95
    %v135 = vunpack.c.l.b16 %v96
    %v136 = vunpack.c.l.b16 %v97
    %v137 = vunpack.c.l.b16 %v98
    %v138 = vunpack.c.l.b16 %v99
    %v139 = vunpack.c.l.b16 %v100
    %v140 = vunpack.c.l.b16 %v101
    %v141 = vunpack.c.l.b16 %v102
    %v142 = vunpack.c.l.b16 %v103
    %v143 = vunpack.c.l.b16 %v104
    %v144 = vunpack.c.l.b16 %v105
    %v145 = vunpack.c.l.b16 %v106
    %v146 = vunpack.c.l.b16 %v107
    %v147 = vunpack.c.l.b16 %v108
    %v148 = vpack.c.b16 %v133, %v132
    %v149 = vpack.c.b16 %v135, %v134
    %v150 = vpack.c.b16 %v137, %v136
    %v151 = vpack.c.b16 %v139, %v138
    %v152 = vpack.c.b16 %v141, %v140
    %v153 = vpack.c.b16 %v143, %v142
    %v154 = vpack.c.b16 %v145, %v144
    %v155 = vpack.c.b16 %v147, %v146
    %164 = vmatprep.subr.bf16.mxu0 0
    %165 = vmatpush1.bf16.msra.mxu0 %v148
    %166 = vmatprep.subr.bf16.mxu0 0
    %167 = vmatpush1.bf16.msra.mxu0 %v149
    %168 = vmatprep.subr.bf16.mxu0 0
    %169 = vmatpush1.bf16.msra.mxu0 %v150
    %170 = vmatprep.subr.bf16.mxu0 0
    %171 = vmatpush1.bf16.msra.mxu0 %v151
    %172 = vmatprep.subr.bf16.mxu0 0
    %173 = vmatpush1.bf16.msra.mxu0 %v152
    %174 = vmatprep.subr.bf16.mxu0 0
    %175 = vmatpush1.bf16.msra.mxu0 %v153
    %176 = vmatprep.subr.bf16.mxu0 0
    %177 = vmatpush1.bf16.msra.mxu0 %v154
    %178 = vmatprep.subr.bf16.mxu0 0
    %179 = vmatpush1.bf16.msra.mxu0 %v155
    %180 = vmatprep.subr.bf16.mxu0 0
    %181 = vmatpush1.bf16.msra.mxu0 0
    %182 = vmatprep.subr.bf16.mxu0 0
    %183 = vmatpush1.bf16.msra.mxu0 0
    %184 = vmatprep.subr.bf16.mxu0 0
    %185 = vmatpush1.bf16.msra.mxu0 0
    %186 = vmatprep.subr.bf16.mxu0 0
    %187 = vmatpush1.bf16.msra.mxu0 0
    %188 = vmatprep.subr.bf16.mxu0 0
    %189 = vmatpush1.bf16.msra.mxu0 0
    %190 = vmatprep.subr.bf16.mxu0 0
    %191 = vmatpush1.bf16.msra.mxu0 0
    %192 = vmatprep.subr.bf16.mxu0 0
    %193 = vmatpush1.bf16.msra.mxu0 0
    %194 = vmatprep.subr.bf16.mxu0 0
    %195 = vmatpush1.bf16.msra.mxu0 0
    %196 = vmatprep.mubr.bf16.mxu0 0
    %197 = vmatmul.mubr.bf16.gmra.mrb[0].mxu0 %v92
    %v198 = vpop.f32.mrb[0].mxu0
    %v199 = vadd.f32 %v115, %v198
    %v200 = vpop.f32.mrb[0].mxu0
    %v201 = vpop.f32.mrb[0].mxu0
    %v202 = vadd.f32 %v115, %v201
    %v203 = vpop.f32.mrb[0].mxu0
    %204 = vdwg.mxu0
    %v205 = vld [vmem:[%s5] sm:$0x1]
    %v206 = vld [vmem:[%s6] sm:$0x1]
    %vm207 = vcmask 261120
    %v208 = vsel %vm207, %v199, 0.0
    %209 = vadd.xlane.f32.xlu0 %v208
    %v210 = vpop.xlane.xlu0 %209
    %v211 = vsel %vm207, %v202, 0.0
    %212 = vadd.xlane.f32.xlu0 %v211
    %v213 = vpop.xlane.xlu0 %212
    %v214 = vrcp.pop 32.0
    %v215 = vmul.f32 %v210, %v214
    %v216 = vmul.f32 %v213, %v214
    %v217 = vsub.f32 %v199, %v215
    %v218 = vsub.f32 %v202, %v216
    %v219 = vmul.f32 %v217, %v217
    %v220 = vmul.f32 %v218, %v218
    %v221 = vsel %vm207, %v219, 0.0
    %222 = vadd.xlane.f32.xlu0 %v221
    %v223 = vpop.xlane.xlu0 %222
    %v224 = vsel %vm207, %v220, 0.0
    %225 = vadd.xlane.f32.xlu0 %v224
    %v226 = vpop.xlane.xlu0 %225
    %v227 = vmul.f32 %v223, %v214
    %v228 = vmul.f32 %v226, %v214
    %v229 = vadd.f32 %v227, 1e-12
    %v230 = vadd.f32 %v228, 1e-12
    %v231 = vrsqrt.pop %v229
    %v232 = vrsqrt.pop %v230
    %v233 = vmul.f32 %v217, %v231
    %v234 = vmul.f32 %v218, %v232
    %v236 = vlaneseq
    %v237 = vshrl.u32 %v236, 7
    %v238 = vsub.s32 0, %v237
    %v239 = vrot.slane %v205, %v238
    %v241 = vmul.f32 %v233, %v239
    %v242 = vmul.f32 %v234, %v239
    %v244 = vlaneseq
    %v245 = vshrl.u32 %v244, 7
    %v246 = vsub.s32 0, %v245
    %v247 = vrot.slane %v206, %v246
    %v249 = vadd.f32 %v241, %v247
    %v250 = vadd.f32 %v242, %v247
    %v251 = vld [vmem:[%s1] sm:$0x1]
    %v252 = vld [vmem:[%s1 + $0x1] sm:$0x1]
    %v253 = vcvt.s32.f32 %v251
    %v254 = vcvt.s32.f32 %v252
    %v255 = vsub.f32 1.0, %v253
    %v256 = vsub.f32 1.0, %v254
    %v257 = vmul.f32 %v255, -10000.0
    %v258 = vmul.f32 %v256, -10000.0
    %v259 = vpack.c.bf16 %v250, %v249
    %v260 = vld [vmem:[%s7] sm:$0xf]
    %v261 = vld [vmem:[%s7 + $0x4] sm:$0xf]
    %v262 = vld [vmem:[%s7 + $0x8] sm:$0xf]
    %v263 = vld [vmem:[%s7 + $0xc] sm:$0xf]
    %v264 = vld [vmem:[%s8] sm:$0x1]
    %v266 = vlaneseq
    %v267 = vshrl.u32 %v266, 7
    %v268 = vsub.s32 0, %v267
    %v269 = vrot.slane %v264, %v268
    %v275 = vunpack.c.l.b16 %v260
    %v276 = vunpack.c.l.b16 %v261
    %v277 = vunpack.c.l.b16 %v262
    %v278 = vunpack.c.l.b16 %v263
    %v279 = vpack.c.b16 %v276, %v275
    %v280 = vpack.c.b16 %v278, %v277
    %v284 = vsel %vm207, %v259, 0
    %286 = vmatprep.subr.bf16.mxu0 0
    %287 = vmatpush1.bf16.msra.mxu0 %v279
    %288 = vmatprep.subr.bf16.mxu0 0
    %289 = vmatpush1.bf16.msra.mxu0 %v280
    %290 = vmatprep.subr.bf16.mxu0 0
    %291 = vmatpush1.bf16.msra.mxu0 0
    %292 = vmatprep.subr.bf16.mxu0 0
    %293 = vmatpush1.bf16.msra.mxu0 0
    %294 = vmatprep.subr.bf16.mxu0 0
    %295 = vmatpush1.bf16.msra.mxu0 0
    %296 = vmatprep.subr.bf16.mxu0 0
    %297 = vmatpush1.bf16.msra.mxu0 0
    %298 = vmatprep.subr.bf16.mxu0 0
    %299 = vmatpush1.bf16.msra.mxu0 0
    %300 = vmatprep.subr.bf16.mxu0 0
    %301 = vmatpush1.bf16.msra.mxu0 0
    %302 = vmatprep.subr.bf16.mxu0 0
    %303 = vmatpush1.bf16.msra.mxu0 0
    %304 = vmatprep.subr.bf16.mxu0 0
    %305 = vmatpush1.bf16.msra.mxu0 0
    %306 = vmatprep.subr.bf16.mxu0 0
    %307 = vmatpush1.bf16.msra.mxu0 0
    %308 = vmatprep.subr.bf16.mxu0 0
    %309 = vmatpush1.bf16.msra.mxu0 0
    %310 = vmatprep.subr.bf16.mxu0 0
    %311 = vmatpush1.bf16.msra.mxu0 0
    %312 = vmatprep.subr.bf16.mxu0 0
    %313 = vmatpush1.bf16.msra.mxu0 0
    %314 = vmatprep.subr.bf16.mxu0 0
    %315 = vmatpush1.bf16.msra.mxu0 0
    %316 = vmatprep.subr.bf16.mxu0 0
    %317 = vmatpush1.bf16.msra.mxu0 0
    %318 = vmatprep.mubr.bf16.mxu0 0
    %319 = vmatmul.mubr.bf16.gmra.mrb[0].mxu0 %v284
    %v320 = vpop.f32.mrb[0].mxu0
    %v321 = vadd.f32 %v269, %v320
    %v322 = vpop.f32.mrb[0].mxu0
    %v323 = vpop.f32.mrb[0].mxu0
    %v324 = vadd.f32 %v269, %v323
    %v325 = vpop.f32.mrb[0].mxu0
    %326 = vdwg.mxu0
    %v329 = vlaneseq
    %v330 = vshrl.u32 %v329, 7
    %v331 = vsub.s32 0, %v330
    %v332 = vrot.slane %v257, %v331
    %v333 = vlaneseq
    %v334 = vshrl.u32 %v333, 7
    %v335 = vsub.s32 0, %v334
    %v336 = vrot.slane %v258, %v335
    %340 = vrot.lane.b32.xlu0 %v321, 96
    %v341 = vpop.permute.xlu0 %340
    %vm342 = vcmask 130048
    %v343 = vsel %vm342, %v321, 0
    %v345 = vsel %vm342, %v341, 0
    %347 = vmatprep.subr.mxu0 0.0
    %348 = vmatpush1.xpose.msra.mxu0 %v345
    %349 = vmatprep.subr.mxu0 0.0
    %350 = vmatpush1.xpose.msra.mxu0 0.0
    %351 = vmatprep.subr.mxu0 0.0
    %352 = vmatpush1.xpose.msra.mxu0 0.0
    %353 = vmatprep.subr.mxu0 0.0
    %354 = vmatpush1.xpose.msra.mxu0 0.0
    %355 = vmatprep.subr.mxu0 0.0
    %356 = vmatpush1.xpose.msra.mxu0 0.0
    %357 = vmatprep.subr.mxu0 0.0
    %358 = vmatpush1.xpose.msra.mxu0 0.0
    %359 = vmatprep.subr.mxu0 0.0
    %360 = vmatpush1.xpose.msra.mxu0 0.0
    %361 = vmatprep.subr.mxu0 0.0
    %362 = vmatpush1.xpose.msra.mxu0 0.0
    %363 = vmatprep.subr.mxu0 0.0
    %364 = vmatpush1.xpose.msra.mxu0 0.0
    %365 = vmatprep.subr.mxu0 0.0
    %366 = vmatpush1.xpose.msra.mxu0 0.0
    %367 = vmatprep.subr.mxu0 0.0
    %368 = vmatpush1.xpose.msra.mxu0 0.0
    %369 = vmatprep.subr.mxu0 0.0
    %370 = vmatpush1.xpose.msra.mxu0 0.0
    %371 = vmatprep.subr.mxu0 0.0
    %372 = vmatpush1.xpose.msra.mxu0 0.0
    %373 = vmatprep.subr.mxu0 0.0
    %374 = vmatpush1.xpose.msra.mxu0 0.0
    %375 = vmatprep.subr.mxu0 0.0
    %376 = vmatpush1.xpose.msra.mxu0 0.0
    %377 = vmatprep.subr.mxu0 0.0
    %378 = vmatpush1.xpose.msra.mxu0 0.0
    %379 = vmatprep.subr.mxu0 0.0
    %380 = vmatpush1.xpose.msra.mxu0 0.0
    %381 = vmatprep.subr.mxu0 0.0
    %382 = vmatpush1.xpose.msra.mxu0 0.0
    %383 = vmatprep.subr.mxu0 0.0
    %384 = vmatpush1.xpose.msra.mxu0 0.0
    %385 = vmatprep.subr.mxu0 0.0
    %386 = vmatpush1.xpose.msra.mxu0 0.0
    %387 = vmatprep.subr.mxu0 0.0
    %388 = vmatpush1.xpose.msra.mxu0 0.0
    %389 = vmatprep.subr.mxu0 0.0
    %390 = vmatpush1.xpose.msra.mxu0 0.0
    %391 = vmatprep.subr.mxu0 0.0
    %392 = vmatpush1.xpose.msra.mxu0 0.0
    %393 = vmatprep.subr.mxu0 0.0
    %394 = vmatpush1.xpose.msra.mxu0 0.0
    %395 = vmatprep.subr.mxu0 0.0
    %396 = vmatpush1.xpose.msra.mxu0 0.0
    %397 = vmatprep.subr.mxu0 0.0
    %398 = vmatpush1.xpose.msra.mxu0 0.0
    %399 = vmatprep.subr.mxu0 0.0
    %400 = vmatpush1.xpose.msra.mxu0 0.0
    %401 = vmatprep.subr.mxu0 0.0
    %402 = vmatpush1.xpose.msra.mxu0 0.0
    %403 = vmatprep.subr.mxu0 0.0
    %404 = vmatpush1.xpose.msra.mxu0 0.0
    %405 = vmatprep.subr.mxu0 0.0
    %406 = vmatpush1.xpose.msra.mxu0 0.0
    %407 = vmatprep.subr.mxu0 0.0
    %408 = vmatpush1.xpose.msra.mxu0 0.0
    %409 = vmatprep.subr.mxu0 0.0
    %410 = vmatpush1.xpose.msra.mxu0 0.0
    %411 = vmatprep.mubr.f32.mxu0 0.0
    %412 = vmatmul.mubr.f32.gmra.mrb[0].mxu0 %v343
    %v413 = vpop.f32.mrb[0].mxu0
    %v414 = vadd.f32 %v332, %v413
    %v415 = vpop.f32.mrb[0].mxu0
    %416 = vdwg.mxu0
    %418 = vrot.lane.b32.xlu0 %v324, 96
    %v419 = vpop.permute.xlu0 %418
    %v420 = vsel %vm342, %v324, 0
    %v422 = vsel %vm342, %v419, 0
    %424 = vmatprep.subr.mxu0 0.0
    %425 = vmatpush1.xpose.msra.mxu0 %v422
    %426 = vmatprep.subr.mxu0 0.0
    %427 = vmatpush1.xpose.msra.mxu0 0.0
    %428 = vmatprep.subr.mxu0 0.0
    %429 = vmatpush1.xpose.msra.mxu0 0.0
    %430 = vmatprep.subr.mxu0 0.0
    %431 = vmatpush1.xpose.msra.mxu0 0.0
    %432 = vmatprep.subr.mxu0 0.0
    %433 = vmatpush1.xpose.msra.mxu0 0.0
    %434 = vmatprep.subr.mxu0 0.0
    %435 = vmatpush1.xpose.msra.mxu0 0.0
    %436 = vmatprep.subr.mxu0 0.0
    %437 = vmatpush1.xpose.msra.mxu0 0.0
    %438 = vmatprep.subr.mxu0 0.0
    %439 = vmatpush1.xpose.msra.mxu0 0.0
    %440 = vmatprep.subr.mxu0 0.0
    %441 = vmatpush1.xpose.msra.mxu0 0.0
    %442 = vmatprep.subr.mxu0 0.0
    %443 = vmatpush1.xpose.msra.mxu0 0.0
    %444 = vmatprep.subr.mxu0 0.0
    %445 = vmatpush1.xpose.msra.mxu0 0.0
    %446 = vmatprep.subr.mxu0 0.0
    %447 = vmatpush1.xpose.msra.mxu0 0.0
    %448 = vmatprep.subr.mxu0 0.0
    %449 = vmatpush1.xpose.msra.mxu0 0.0
    %450 = vmatprep.subr.mxu0 0.0
    %451 = vmatpush1.xpose.msra.mxu0 0.0
    %452 = vmatprep.subr.mxu0 0.0
    %453 = vmatpush1.xpose.msra.mxu0 0.0
    %454 = vmatprep.subr.mxu0 0.0
    %455 = vmatpush1.xpose.msra.mxu0 0.0
    %456 = vmatprep.subr.mxu0 0.0
    %457 = vmatpush1.xpose.msra.mxu0 0.0
    %458 = vmatprep.subr.mxu0 0.0
    %459 = vmatpush1.xpose.msra.mxu0 0.0
    %460 = vmatprep.subr.mxu0 0.0
    %461 = vmatpush1.xpose.msra.mxu0 0.0
    %462 = vmatprep.subr.mxu0 0.0
    %463 = vmatpush1.xpose.msra.mxu0 0.0
    %464 = vmatprep.subr.mxu0 0.0
    %465 = vmatpush1.xpose.msra.mxu0 0.0
    %466 = vmatprep.subr.mxu0 0.0
    %467 = vmatpush1.xpose.msra.mxu0 0.0
    %468 = vmatprep.subr.mxu0 0.0
    %469 = vmatpush1.xpose.msra.mxu0 0.0
    %470 = vmatprep.subr.mxu0 0.0
    %471 = vmatpush1.xpose.msra.mxu0 0.0
    %472 = vmatprep.subr.mxu0 0.0
    %473 = vmatpush1.xpose.msra.mxu0 0.0
    %474 = vmatprep.subr.mxu0 0.0
    %475 = vmatpush1.xpose.msra.mxu0 0.0
    %476 = vmatprep.subr.mxu0 0.0
    %477 = vmatpush1.xpose.msra.mxu0 0.0
    %478 = vmatprep.subr.mxu0 0.0
    %479 = vmatpush1.xpose.msra.mxu0 0.0
    %480 = vmatprep.subr.mxu0 0.0
    %481 = vmatpush1.xpose.msra.mxu0 0.0
    %482 = vmatprep.subr.mxu0 0.0
    %483 = vmatpush1.xpose.msra.mxu0 0.0
    %484 = vmatprep.subr.mxu0 0.0
    %485 = vmatpush1.xpose.msra.mxu0 0.0
    %486 = vmatprep.subr.mxu0 0.0
    %487 = vmatpush1.xpose.msra.mxu0 0.0
    %488 = vmatprep.mubr.f32.mxu0 0.0
    %489 = vmatmul.mubr.f32.gmra.mrb[0].mxu0 %v420
    %v490 = vpop.f32.mrb[0].mxu0
    %v491 = vadd.f32 %v336, %v490
    %v492 = vpop.f32.mrb[0].mxu0
    %493 = vdwg.mxu0
    %vm494 = vcmask 64512
    %v495 = vsel %vm494, %v414, -inf
    %496 = vmax.xlane.f32.xlu0 %v495
    %v497 = vpop.xlane.xlu0 %496
    %v498 = vsel %vm494, %v491, -inf
    %499 = vmax.xlane.f32.xlu0 %v498
    %v500 = vpop.xlane.xlu0 %499
    %v501 = vsub.f32 %v414, %v497
    %v502 = vsub.f32 %v491, %v500
    %v503 = vmul.f32 %v501, 1.442695
    %v504 = vpow.pop %v503
    %v505 = vmul.f32 %v502, 1.442695
    %v506 = vpow.pop %v505
    %v507 = vsel %vm494, %v504, 0.0
    %508 = vadd.xlane.f32.xlu0 %v507
    %v509 = vpop.xlane.xlu0 %508
    %v510 = vsel %vm494, %v506, 0.0
    %511 = vadd.xlane.f32.xlu0 %v510
    %v512 = vpop.xlane.xlu0 %511
    %v513 = vrcp.pop %v509
    %v514 = vrcp.pop %v512
    %v515 = vmul.f32 %v504, %v513
    %v516 = vmul.f32 %v506, %v514
    %517 = vrot.lane.b32.xlu0 %v321, 64
    %v518 = vpop.permute.xlu0 %517
    %v521 = vsel %vm494, %v515, 0
    %523 = vmatprep.subr.mxu0 0.0
    %524 = vmatpush1.msra.mxu0 %v518
    %525 = vmatprep.subr.mxu0 0.0
    %526 = vmatpush1.msra.mxu0 0.0
    %527 = vmatprep.subr.mxu0 0.0
    %528 = vmatpush1.msra.mxu0 0.0
    %529 = vmatprep.subr.mxu0 0.0
    %530 = vmatpush1.msra.mxu0 0.0
    %531 = vmatprep.subr.mxu0 0.0
    %532 = vmatpush1.msra.mxu0 0.0
    %533 = vmatprep.subr.mxu0 0.0
    %534 = vmatpush1.msra.mxu0 0.0
    %535 = vmatprep.subr.mxu0 0.0
    %536 = vmatpush1.msra.mxu0 0.0
    %537 = vmatprep.subr.mxu0 0.0
    %538 = vmatpush1.msra.mxu0 0.0
    %539 = vmatprep.subr.mxu0 0.0
    %540 = vmatpush1.msra.mxu0 0.0
    %541 = vmatprep.subr.mxu0 0.0
    %542 = vmatpush1.msra.mxu0 0.0
    %543 = vmatprep.subr.mxu0 0.0
    %544 = vmatpush1.msra.mxu0 0.0
    %545 = vmatprep.subr.mxu0 0.0
    %546 = vmatpush1.msra.mxu0 0.0
    %547 = vmatprep.subr.mxu0 0.0
    %548 = vmatpush1.msra.mxu0 0.0
    %549 = vmatprep.subr.mxu0 0.0
    %550 = vmatpush1.msra.mxu0 0.0
    %551 = vmatprep.subr.mxu0 0.0
    %552 = vmatpush1.msra.mxu0 0.0
    %553 = vmatprep.subr.mxu0 0.0
    %554 = vmatpush1.msra.mxu0 0.0
    %555 = vmatprep.subr.mxu0 0.0
    %556 = vmatpush1.msra.mxu0 0.0
    %557 = vmatprep.subr.mxu0 0.0
    %558 = vmatpush1.msra.mxu0 0.0
    %559 = vmatprep.subr.mxu0 0.0
    %560 = vmatpush1.msra.mxu0 0.0
    %561 = vmatprep.subr.mxu0 0.0
    %562 = vmatpush1.msra.mxu0 0.0
    %563 = vmatprep.subr.mxu0 0.0
    %564 = vmatpush1.msra.mxu0 0.0
    %565 = vmatprep.subr.mxu0 0.0
    %566 = vmatpush1.msra.mxu0 0.0
    %567 = vmatprep.subr.mxu0 0.0
    %568 = vmatpush1.msra.mxu0 0.0
    %569 = vmatprep.subr.mxu0 0.0
    %570 = vmatpush1.msra.mxu0 0.0
    %571 = vmatprep.subr.mxu0 0.0
    %572 = vmatpush1.msra.mxu0 0.0
    %573 = vmatprep.subr.mxu0 0.0
    %574 = vmatpush1.msra.mxu0 0.0
    %575 = vmatprep.subr.mxu0 0.0
    %576 = vmatpush1.msra.mxu0 0.0
    %577 = vmatprep.subr.mxu0 0.0
    %578 = vmatpush1.msra.mxu0 0.0
    %579 = vmatprep.subr.mxu0 0.0
    %580 = vmatpush1.msra.mxu0 0.0
    %581 = vmatprep.subr.mxu0 0.0
    %582 = vmatpush1.msra.mxu0 0.0
    %583 = vmatprep.subr.mxu0 0.0
    %584 = vmatpush1.msra.mxu0 0.0
    %585 = vmatprep.subr.mxu0 0.0
    %586 = vmatpush1.msra.mxu0 0.0
    %587 = vmatprep.mubr.f32.mxu0 0.0
    %588 = vmatmul.mubr.f32.gmra.mrb[0].mxu0 %v521
    %v589 = vpop.f32.mrb[0].mxu0
    %v590 = vadd.f32 0.0, %v589
    %v591 = vpop.f32.mrb[0].mxu0
    %592 = vdwg.mxu0
    %593 = vrot.lane.b32.xlu0 %v324, 64
    %v594 = vpop.permute.xlu0 %593
    %v597 = vsel %vm494, %v516, 0
    %599 = vmatprep.subr.mxu0 0.0
    %600 = vmatpush1.msra.mxu0 %v594
    %601 = vmatprep.subr.mxu0 0.0
    %602 = vmatpush1.msra.mxu0 0.0
    %603 = vmatprep.subr.mxu0 0.0
    %604 = vmatpush1.msra.mxu0 0.0
    %605 = vmatprep.subr.mxu0 0.0
    %606 = vmatpush1.msra.mxu0 0.0
    %607 = vmatprep.subr.mxu0 0.0
    %608 = vmatpush1.msra.mxu0 0.0
    %609 = vmatprep.subr.mxu0 0.0
    %610 = vmatpush1.msra.mxu0 0.0
    %611 = vmatprep.subr.mxu0 0.0
    %612 = vmatpush1.msra.mxu0 0.0
    %613 = vmatprep.subr.mxu0 0.0
    %614 = vmatpush1.msra.mxu0 0.0
    %615 = vmatprep.subr.mxu0 0.0
    %616 = vmatpush1.msra.mxu0 0.0
    %617 = vmatprep.subr.mxu0 0.0
    %618 = vmatpush1.msra.mxu0 0.0
    %619 = vmatprep.subr.mxu0 0.0
    %620 = vmatpush1.msra.mxu0 0.0
    %621 = vmatprep.subr.mxu0 0.0
    %622 = vmatpush1.msra.mxu0 0.0
    %623 = vmatprep.subr.mxu0 0.0
    %624 = vmatpush1.msra.mxu0 0.0
    %625 = vmatprep.subr.mxu0 0.0
    %626 = vmatpush1.msra.mxu0 0.0
    %627 = vmatprep.subr.mxu0 0.0
    %628 = vmatpush1.msra.mxu0 0.0
    %629 = vmatprep.subr.mxu0 0.0
    %630 = vmatpush1.msra.mxu0 0.0
    %631 = vmatprep.subr.mxu0 0.0
    %632 = vmatpush1.msra.mxu0 0.0
    %633 = vmatprep.subr.mxu0 0.0
    %634 = vmatpush1.msra.mxu0 0.0
    %635 = vmatprep.subr.mxu0 0.0
    %636 = vmatpush1.msra.mxu0 0.0
    %637 = vmatprep.subr.mxu0 0.0
    %638 = vmatpush1.msra.mxu0 0.0
    %639 = vmatprep.subr.mxu0 0.0
    %640 = vmatpush1.msra.mxu0 0.0
    %641 = vmatprep.subr.mxu0 0.0
    %642 = vmatpush1.msra.mxu0 0.0
    %643 = vmatprep.subr.mxu0 0.0
    %644 = vmatpush1.msra.mxu0 0.0
    %645 = vmatprep.subr.mxu0 0.0
    %646 = vmatpush1.msra.mxu0 0.0
    %647 = vmatprep.subr.mxu0 0.0
    %648 = vmatpush1.msra.mxu0 0.0
    %649 = vmatprep.subr.mxu0 0.0
    %650 = vmatpush1.msra.mxu0 0.0
    %651 = vmatprep.subr.mxu0 0.0
    %652 = vmatpush1.msra.mxu0 0.0
    %653 = vmatprep.subr.mxu0 0.0
    %654 = vmatpush1.msra.mxu0 0.0
    %655 = vmatprep.subr.mxu0 0.0
    %656 = vmatpush1.msra.mxu0 0.0
    %657 = vmatprep.subr.mxu0 0.0
    %658 = vmatpush1.msra.mxu0 0.0
    %659 = vmatprep.subr.mxu0 0.0
    %660 = vmatpush1.msra.mxu0 0.0
    %661 = vmatprep.subr.mxu0 0.0
    %662 = vmatpush1.msra.mxu0 0.0
    %663 = vmatprep.mubr.f32.mxu0 0.0
    %664 = vmatmul.mubr.f32.gmra.mrb[0].mxu0 %v597
    %v665 = vpop.f32.mrb[0].mxu0
    %v666 = vadd.f32 0.0, %v665
    %v667 = vpop.f32.mrb[0].mxu0
    %668 = vdwg.mxu0
    %669 = vrot.lane.b32.xlu0 %v321, 112
    %v670 = vpop.permute.xlu0 %669
    %671 = vrot.lane.b32.xlu0 %v321, 80
    %v672 = vpop.permute.xlu0 %671
    %v673 = vsel %vm342, %v670, 0
    %v675 = vsel %vm342, %v672, 0
    %677 = vmatprep.subr.mxu0 0.0
    %678 = vmatpush1.xpose.msra.mxu0 %v675
    %679 = vmatprep.subr.mxu0 0.0
    %680 = vmatpush1.xpose.msra.mxu0 0.0
    %681 = vmatprep.subr.mxu0 0.0
    %682 = vmatpush1.xpose.msra.mxu0 0.0
    %683 = vmatprep.subr.mxu0 0.0
    %684 = vmatpush1.xpose.msra.mxu0 0.0
    %685 = vmatprep.subr.mxu0 0.0
    %686 = vmatpush1.xpose.msra.mxu0 0.0
    %687 = vmatprep.subr.mxu0 0.0
    %688 = vmatpush1.xpose.msra.mxu0 0.0
    %689 = vmatprep.subr.mxu0 0.0
    %690 = vmatpush1.xpose.msra.mxu0 0.0
    %691 = vmatprep.subr.mxu0 0.0
    %692 = vmatpush1.xpose.msra.mxu0 0.0
    %693 = vmatprep.subr.mxu0 0.0
    %694 = vmatpush1.xpose.msra.mxu0 0.0
    %695 = vmatprep.subr.mxu0 0.0
    %696 = vmatpush1.xpose.msra.mxu0 0.0
    %697 = vmatprep.subr.mxu0 0.0
    %698 = vmatpush1.xpose.msra.mxu0 0.0
    %699 = vmatprep.subr.mxu0 0.0
    %700 = vmatpush1.xpose.msra.mxu0 0.0
    %701 = vmatprep.subr.mxu0 0.0
    %702 = vmatpush1.xpose.msra.mxu0 0.0
    %703 = vmatprep.subr.mxu0 0.0
    %704 = vmatpush1.xpose.msra.mxu0 0.0
    %705 = vmatprep.subr.mxu0 0.0
    %706 = vmatpush1.xpose.msra.mxu0 0.0
    %707 = vmatprep.subr.mxu0 0.0
    %708 = vmatpush1.xpose.msra.mxu0 0.0
    %709 = vmatprep.subr.mxu0 0.0
    %710 = vmatpush1.xpose.msra.mxu0 0.0
    %711 = vmatprep.subr.mxu0 0.0
    %712 = vmatpush1.xpose.msra.mxu0 0.0
    %713 = vmatprep.subr.mxu0 0.0
    %714 = vmatpush1.xpose.msra.mxu0 0.0
    %715 = vmatprep.subr.mxu0 0.0
    %716 = vmatpush1.xpose.msra.mxu0 0.0
    %717 = vmatprep.subr.mxu0 0.0
    %718 = vmatpush1.xpose.msra.mxu0 0.0
    %719 = vmatprep.subr.mxu0 0.0
    %720 = vmatpush1.xpose.msra.mxu0 0.0
    %721 = vmatprep.subr.mxu0 0.0
    %722 = vmatpush1.xpose.msra.mxu0 0.0
    %723 = vmatprep.subr.mxu0 0.0
    %724 = vmatpush1.xpose.msra.mxu0 0.0
    %725 = vmatprep.subr.mxu0 0.0
    %726 = vmatpush1.xpose.msra.mxu0 0.0
    %727 = vmatprep.subr.mxu0 0.0
    %728 = vmatpush1.xpose.msra.mxu0 0.0
    %729 = vmatprep.subr.mxu0 0.0
    %730 = vmatpush1.xpose.msra.mxu0 0.0
    %731 = vmatprep.subr.mxu0 0.0
    %732 = vmatpush1.xpose.msra.mxu0 0.0
    %733 = vmatprep.subr.mxu0 0.0
    %734 = vmatpush1.xpose.msra.mxu0 0.0
    %735 = vmatprep.subr.mxu0 0.0
    %736 = vmatpush1.xpose.msra.mxu0 0.0
    %737 = vmatprep.subr.mxu0 0.0
    %738 = vmatpush1.xpose.msra.mxu0 0.0
    %739 = vmatprep.subr.mxu0 0.0
    %740 = vmatpush1.xpose.msra.mxu0 0.0
    %741 = vmatprep.mubr.f32.mxu0 0.0
    %742 = vmatmul.mubr.f32.gmra.mrb[0].mxu0 %v673
    %v743 = vpop.f32.mrb[0].mxu0
    %v744 = vadd.f32 %v332, %v743
    %v745 = vpop.f32.mrb[0].mxu0
    %746 = vdwg.mxu0
    %747 = vrot.lane.b32.xlu0 %v324, 112
    %v748 = vpop.permute.xlu0 %747
    %749 = vrot.lane.b32.xlu0 %v324, 80
    %v750 = vpop.permute.xlu0 %749
    %v751 = vsel %vm342, %v748, 0
    %v753 = vsel %vm342, %v750, 0
    %755 = vmatprep.subr.mxu0 0.0
    %756 = vmatpush1.xpose.msra.mxu0 %v753
    %757 = vmatprep.subr.mxu0 0.0
    %758 = vmatpush1.xpose.msra.mxu0 0.0
    %759 = vmatprep.subr.mxu0 0.0
    %760 = vmatpush1.xpose.msra.mxu0 0.0
    %761 = vmatprep.subr.mxu0 0.0
    %762 = vmatpush1.xpose.msra.mxu0 0.0
    %763 = vmatprep.subr.mxu0 0.0
    %764 = vmatpush1.xpose.msra.mxu0 0.0
    %765 = vmatprep.subr.mxu0 0.0
    %766 = vmatpush1.xpose.msra.mxu0 0.0
    %767 = vmatprep.subr.mxu0 0.0
    %768 = vmatpush1.xpose.msra.mxu0 0.0
    %769 = vmatprep.subr.mxu0 0.0
    %770 = vmatpush1.xpose.msra.mxu0 0.0
    %771 = vmatprep.subr.mxu0 0.0
    %772 = vmatpush1.xpose.msra.mxu0 0.0
    %773 = vmatprep.subr.mxu0 0.0
    %774 = vmatpush1.xpose.msra.mxu0 0.0
    %775 = vmatprep.subr.mxu0 0.0
    %776 = vmatpush1.xpose.msra.mxu0 0.0
    %777 = vmatprep.subr.mxu0 0.0
    %778 = vmatpush1.xpose.msra.mxu0 0.0
    %779 = vmatprep.subr.mxu0 0.0
    %780 = vmatpush1.xpose.msra.mxu0 0.0
    %781 = vmatprep.subr.mxu0 0.0
    %782 = vmatpush1.xpose.msra.mxu0 0.0
    %783 = vmatprep.subr.mxu0 0.0
    %784 = vmatpush1.xpose.msra.mxu0 0.0
    %785 = vmatprep.subr.mxu0 0.0
    %786 = vmatpush1.xpose.msra.mxu0 0.0
    %787 = vmatprep.subr.mxu0 0.0
    %788 = vmatpush1.xpose.msra.mxu0 0.0
    %789 = vmatprep.subr.mxu0 0.0
    %790 = vmatpush1.xpose.msra.mxu0 0.0
    %791 = vmatprep.subr.mxu0 0.0
    %792 = vmatpush1.xpose.msra.mxu0 0.0
    %793 = vmatprep.subr.mxu0 0.0
    %794 = vmatpush1.xpose.msra.mxu0 0.0
    %795 = vmatprep.subr.mxu0 0.0
    %796 = vmatpush1.xpose.msra.mxu0 0.0
    %797 = vmatprep.subr.mxu0 0.0
    %798 = vmatpush1.xpose.msra.mxu0 0.0
    %799 = vmatprep.subr.mxu0 0.0
    %800 = vmatpush1.xpose.msra.mxu0 0.0
    %801 = vmatprep.subr.mxu0 0.0
    %802 = vmatpush1.xpose.msra.mxu0 0.0
    %803 = vmatprep.subr.mxu0 0.0
    %804 = vmatpush1.xpose.msra.mxu0 0.0
    %805 = vmatprep.subr.mxu0 0.0
    %806 = vmatpush1.xpose.msra.mxu0 0.0
    %807 = vmatprep.subr.mxu0 0.0
    %808 = vmatpush1.xpose.msra.mxu0 0.0
    %809 = vmatprep.subr.mxu0 0.0
    %810 = vmatpush1.xpose.msra.mxu0 0.0
    %811 = vmatprep.subr.mxu0 0.0
    %812 = vmatpush1.xpose.msra.mxu0 0.0
    %813 = vmatprep.subr.mxu0 0.0
    %814 = vmatpush1.xpose.msra.mxu0 0.0
    %815 = vmatprep.subr.mxu0 0.0
    %816 = vmatpush1.xpose.msra.mxu0 0.0
    %817 = vmatprep.subr.mxu0 0.0
    %818 = vmatpush1.xpose.msra.mxu0 0.0
    %819 = vmatprep.mubr.f32.mxu0 0.0
    %820 = vmatmul.mubr.f32.gmra.mrb[0].mxu0 %v751
    %v821 = vpop.f32.mrb[0].mxu0
    %v822 = vadd.f32 %v336, %v821
    %v823 = vpop.f32.mrb[0].mxu0
    %824 = vdwg.mxu0
    %v825 = vsel %vm494, %v744, -inf
    %826 = vmax.xlane.f32.xlu0 %v825
    %v827 = vpop.xlane.xlu0 %826
    %v828 = vsel %vm494, %v822, -inf
    %829 = vmax.xlane.f32.xlu0 %v828
    %v830 = vpop.xlane.xlu0 %829
    %v831 = vsub.f32 %v744, %v827
    %v832 = vsub.f32 %v822, %v830
    %v833 = vmul.f32 %v831, 1.442695
    %v834 = vpow.pop %v833
    %v835 = vmul.f32 %v832, 1.442695
    %v836 = vpow.pop %v835
    %v837 = vsel %vm494, %v834, 0.0
    %838 = vadd.xlane.f32.xlu0 %v837
    %v839 = vpop.xlane.xlu0 %838
    %v840 = vsel %vm494, %v836, 0.0
    %841 = vadd.xlane.f32.xlu0 %v840
    %v842 = vpop.xlane.xlu0 %841
    %v843 = vrcp.pop %v839
    %v844 = vrcp.pop %v842
    %v845 = vmul.f32 %v834, %v843
    %v846 = vmul.f32 %v836, %v844
    %847 = vrot.lane.b32.xlu0 %v321, 48
    %v848 = vpop.permute.xlu0 %847
    %v851 = vsel %vm494, %v845, 0
    %853 = vmatprep.subr.mxu0 0.0
    %854 = vmatpush1.msra.mxu0 %v848
    %855 = vmatprep.subr.mxu0 0.0
    %856 = vmatpush1.msra.mxu0 0.0
    %857 = vmatprep.subr.mxu0 0.0
    %858 = vmatpush1.msra.mxu0 0.0
    %859 = vmatprep.subr.mxu0 0.0
    %860 = vmatpush1.msra.mxu0 0.0
    %861 = vmatprep.subr.mxu0 0.0
    %862 = vmatpush1.msra.mxu0 0.0
    %863 = vmatprep.subr.mxu0 0.0
    %864 = vmatpush1.msra.mxu0 0.0
    %865 = vmatprep.subr.mxu0 0.0
    %866 = vmatpush1.msra.mxu0 0.0
    %867 = vmatprep.subr.mxu0 0.0
    %868 = vmatpush1.msra.mxu0 0.0
    %869 = vmatprep.subr.mxu0 0.0
    %870 = vmatpush1.msra.mxu0 0.0
    %871 = vmatprep.subr.mxu0 0.0
    %872 = vmatpush1.msra.mxu0 0.0
    %873 = vmatprep.subr.mxu0 0.0
    %874 = vmatpush1.msra.mxu0 0.0
    %875 = vmatprep.subr.mxu0 0.0
    %876 = vmatpush1.msra.mxu0 0.0
    %877 = vmatprep.subr.mxu0 0.0
    %878 = vmatpush1.msra.mxu0 0.0
    %879 = vmatprep.subr.mxu0 0.0
    %880 = vmatpush1.msra.mxu0 0.0
    %881 = vmatprep.subr.mxu0 0.0
    %882 = vmatpush1.msra.mxu0 0.0
    %883 = vmatprep.subr.mxu0 0.0
    %884 = vmatpush1.msra.mxu0 0.0
    %885 = vmatprep.subr.mxu0 0.0
    %886 = vmatpush1.msra.mxu0 0.0
    %887 = vmatprep.subr.mxu0 0.0
    %888 = vmatpush1.msra.mxu0 0.0
    %889 = vmatprep.subr.mxu0 0.0
    %890 = vmatpush1.msra.mxu0 0.0
    %891 = vmatprep.subr.mxu0 0.0
    %892 = vmatpush1.msra.mxu0 0.0
    %893 = vmatprep.subr.mxu0 0.0
    %894 = vmatpush1.msra.mxu0 0.0
    %895 = vmatprep.subr.mxu0 0.0
    %896 = vmatpush1.msra.mxu0 0.0
    %897 = vmatprep.subr.mxu0 0.0
    %898 = vmatpush1.msra.mxu0 0.0
    %899 = vmatprep.subr.mxu0 0.0
    %900 = vmatpush1.msra.mxu0 0.0
    %901 = vmatprep.subr.mxu0 0.0
    %902 = vmatpush1.msra.mxu0 0.0
    %903 = vmatprep.subr.mxu0 0.0
    %904 = vmatpush1.msra.mxu0 0.0
    %905 = vmatprep.subr.mxu0 0.0
    %906 = vmatpush1.msra.mxu0 0.0
    %907 = vmatprep.subr.mxu0 0.0
    %908 = vmatpush1.msra.mxu0 0.0
    %909 = vmatprep.subr.mxu0 0.0
    %910 = vmatpush1.msra.mxu0 0.0
    %911 = vmatprep.subr.mxu0 0.0
    %912 = vmatpush1.msra.mxu0 0.0
    %913 = vmatprep.subr.mxu0 0.0
    %914 = vmatpush1.msra.mxu0 0.0
    %915 = vmatprep.subr.mxu0 0.0
    %916 = vmatpush1.msra.mxu0 0.0
    %917 = vmatprep.mubr.f32.mxu0 0.0
    %918 = vmatmul.mubr.f32.gmra.mrb[0].mxu0 %v851
    %v919 = vpop.f32.mrb[0].mxu0
    %v920 = vadd.f32 0.0, %v919
    %v921 = vpop.f32.mrb[0].mxu0
    %922 = vdwg.mxu0
    %923 = vrot.lane.b32.xlu0 %v324, 48
    %v924 = vpop.permute.xlu0 %923
    %v927 = vsel %vm494, %v846, 0
    %929 = vmatprep.subr.mxu0 0.0
    %930 = vmatpush1.msra.mxu0 %v924
    %931 = vmatprep.subr.mxu0 0.0
    %932 = vmatpush1.msra.mxu0 0.0
    %933 = vmatprep.subr.mxu0 0.0
    %934 = vmatpush1.msra.mxu0 0.0
    %935 = vmatprep.subr.mxu0 0.0
    %936 = vmatpush1.msra.mxu0 0.0
    %937 = vmatprep.subr.mxu0 0.0
    %938 = vmatpush1.msra.mxu0 0.0
    %939 = vmatprep.subr.mxu0 0.0
    %940 = vmatpush1.msra.mxu0 0.0
    %941 = vmatprep.subr.mxu0 0.0
    %942 = vmatpush1.msra.mxu0 0.0
    %943 = vmatprep.subr.mxu0 0.0
    %944 = vmatpush1.msra.mxu0 0.0
    %945 = vmatprep.subr.mxu0 0.0
    %946 = vmatpush1.msra.mxu0 0.0
    %947 = vmatprep.subr.mxu0 0.0
    %948 = vmatpush1.msra.mxu0 0.0
    %949 = vmatprep.subr.mxu0 0.0
    %950 = vmatpush1.msra.mxu0 0.0
    %951 = vmatprep.subr.mxu0 0.0
    %952 = vmatpush1.msra.mxu0 0.0
    %953 = vmatprep.subr.mxu0 0.0
    %954 = vmatpush1.msra.mxu0 0.0
    %955 = vmatprep.subr.mxu0 0.0
    %956 = vmatpush1.msra.mxu0 0.0
    %957 = vmatprep.subr.mxu0 0.0
    %958 = vmatpush1.msra.mxu0 0.0
    %959 = vmatprep.subr.mxu0 0.0
    %960 = vmatpush1.msra.mxu0 0.0
    %961 = vmatprep.subr.mxu0 0.0
    %962 = vmatpush1.msra.mxu0 0.0
    %963 = vmatprep.subr.mxu0 0.0
    %964 = vmatpush1.msra.mxu0 0.0
    %965 = vmatprep.subr.mxu0 0.0
    %966 = vmatpush1.msra.mxu0 0.0
    %967 = vmatprep.subr.mxu0 0.0
    %968 = vmatpush1.msra.mxu0 0.0
    %969 = vmatprep.subr.mxu0 0.0
    %970 = vmatpush1.msra.mxu0 0.0
    %971 = vmatprep.subr.mxu0 0.0
    %972 = vmatpush1.msra.mxu0 0.0
    %973 = vmatprep.subr.mxu0 0.0
    %974 = vmatpush1.msra.mxu0 0.0
    %975 = vmatprep.subr.mxu0 0.0
    %976 = vmatpush1.msra.mxu0 0.0
    %977 = vmatprep.subr.mxu0 0.0
    %978 = vmatpush1.msra.mxu0 0.0
    %979 = vmatprep.subr.mxu0 0.0
    %980 = vmatpush1.msra.mxu0 0.0
    %981 = vmatprep.subr.mxu0 0.0
    %982 = vmatpush1.msra.mxu0 0.0
    %983 = vmatprep.subr.mxu0 0.0
    %984 = vmatpush1.msra.mxu0 0.0
    %985 = vmatprep.subr.mxu0 0.0
    %986 = vmatpush1.msra.mxu0 0.0
    %987 = vmatprep.subr.mxu0 0.0
    %988 = vmatpush1.msra.mxu0 0.0
    %989 = vmatprep.subr.mxu0 0.0
    %990 = vmatpush1.msra.mxu0 0.0
    %991 = vmatprep.subr.mxu0 0.0
    %992 = vmatpush1.msra.mxu0 0.0
    %993 = vmatprep.mubr.f32.mxu0 0.0
    %994 = vmatmul.mubr.f32.gmra.mrb[0].mxu0 %v927
    %v995 = vpop.f32.mrb[0].mxu0
    %v996 = vadd.f32 0.0, %v995
    %v997 = vpop.f32.mrb[0].mxu0
    %998 = vdwg.mxu0
    %1001 = vrot.lane.b32.xlu0 %v920, 16
    %v1002 = vpop.permute.xlu0 %1001
    %1003 = vrot.lane.b32.xlu0 %v996, 16
    %v1004 = vpop.permute.xlu0 %1003
    %v1007 = vsel %vm342, %v590, %v1002
    %v1008 = vsel %vm342, %v666, %v1004
    %v1009 = vpack.c.bf16 %v1008, %v1007
    %v1010 = vld [vmem:[%s9] sm:$0xf]
    %v1011 = vld [vmem:[%s9 + $0x4] sm:$0xf]
    %v1012 = vld [vmem:[%s9 + $0x8] sm:$0xf]
    %v1013 = vld [vmem:[%s9 + $0xc] sm:$0xf]
    %v1014 = vld [vmem:[%s10] sm:$0x1]
    %v1016 = vlaneseq
    %v1017 = vshrl.u32 %v1016, 7
    %v1018 = vsub.s32 0, %v1017
    %v1019 = vrot.slane %v1014, %v1018
    %v1025 = vunpack.c.l.b16 %v1010
    %v1026 = vunpack.c.l.b16 %v1011
    %v1027 = vunpack.c.l.b16 %v1012
    %v1028 = vunpack.c.l.b16 %v1013
    %v1029 = vpack.c.b16 %v1026, %v1025
    %v1030 = vpack.c.b16 %v1028, %v1027
    %v1034 = vsel %vm207, %v1009, 0
    %1036 = vmatprep.subr.bf16.mxu0 0
    %1037 = vmatpush1.bf16.msra.mxu0 %v1029
    %1038 = vmatprep.subr.bf16.mxu0 0
    %1039 = vmatpush1.bf16.msra.mxu0 %v1030
    %1040 = vmatprep.subr.bf16.mxu0 0
    %1041 = vmatpush1.bf16.msra.mxu0 0
    %1042 = vmatprep.subr.bf16.mxu0 0
    %1043 = vmatpush1.bf16.msra.mxu0 0
    %1044 = vmatprep.subr.bf16.mxu0 0
    %1045 = vmatpush1.bf16.msra.mxu0 0
    %1046 = vmatprep.subr.bf16.mxu0 0
    %1047 = vmatpush1.bf16.msra.mxu0 0
    %1048 = vmatprep.subr.bf16.mxu0 0
    %1049 = vmatpush1.bf16.msra.mxu0 0
    %1050 = vmatprep.subr.bf16.mxu0 0
    %1051 = vmatpush1.bf16.msra.mxu0 0
    %1052 = vmatprep.subr.bf16.mxu0 0
    %1053 = vmatpush1.bf16.msra.mxu0 0
    %1054 = vmatprep.subr.bf16.mxu0 0
    %1055 = vmatpush1.bf16.msra.mxu0 0
    %1056 = vmatprep.subr.bf16.mxu0 0
    %1057 = vmatpush1.bf16.msra.mxu0 0
    %1058 = vmatprep.subr.bf16.mxu0 0
    %1059 = vmatpush1.bf16.msra.mxu0 0
    %1060 = vmatprep.subr.bf16.mxu0 0
    %1061 = vmatpush1.bf16.msra.mxu0 0
    %1062 = vmatprep.subr.bf16.mxu0 0
    %1063 = vmatpush1.bf16.msra.mxu0 0
    %1064 = vmatprep.subr.bf16.mxu0 0
    %1065 = vmatpush1.bf16.msra.mxu0 0
    %1066 = vmatprep.subr.bf16.mxu0 0
    %1067 = vmatpush1.bf16.msra.mxu0 0
    %1068 = vmatprep.mubr.bf16.mxu0 0
    %1069 = vmatmul.mubr.bf16.gmra.mrb[0].mxu0 %v1034
    %v1070 = vpop.f32.mrb[0].mxu0
    %v1071 = vadd.f32 %v1019, %v1070
    %v1072 = vpop.f32.mrb[0].mxu0
    %v1073 = vpop.f32.mrb[0].mxu0
    %v1074 = vadd.f32 %v1019, %v1073
    %v1075 = vpop.f32.mrb[0].mxu0
    %1076 = vdwg.mxu0
    %v1077 = vadd.f32 %v1071, %v249
    %v1078 = vadd.f32 %v1074, %v250
    %v1079 = vld [vmem:[%s11] sm:$0x1]
    %v1080 = vld [vmem:[%s12] sm:$0x1]
    %v1081 = vsel %vm207, %v1077, 0.0
    %1082 = vadd.xlane.f32.xlu0 %v1081
    %v1083 = vpop.xlane.xlu0 %1082
    %v1084 = vsel %vm207, %v1078, 0.0
    %1085 = vadd.xlane.f32.xlu0 %v1084
    %v1086 = vpop.xlane.xlu0 %1085
    %v1087 = vmul.f32 %v1083, %v214
    %v1088 = vmul.f32 %v1086, %v214
    %v1089 = vsub.f32 %v1077, %v1087
    %v1090 = vsub.f32 %v1078, %v1088
    %v1091 = vmul.f32 %v1089, %v1089
    %v1092 = vmul.f32 %v1090, %v1090
    %v1093 = vsel %vm207, %v1091, 0.0
    %1094 = vadd.xlane.f32.xlu0 %v1093
    %v1095 = vpop.xlane.xlu0 %1094
    %v1096 = vsel %vm207, %v1092, 0.0
    %1097 = vadd.xlane.f32.xlu0 %v1096
    %v1098 = vpop.xlane.xlu0 %1097
    %v1099 = vmul.f32 %v1095, %v214
    %v1100 = vmul.f32 %v1098, %v214
    %v1101 = vadd.f32 %v1099, 1e-12
    %v1102 = vadd.f32 %v1100, 1e-12
    %v1103 = vrsqrt.pop %v1101
    %v1104 = vrsqrt.pop %v1102
    %v1105 = vmul.f32 %v1089, %v1103
    %v1106 = vmul.f32 %v1090, %v1104
    %v1108 = vlaneseq
    %v1109 = vshrl.u32 %v1108, 7
    %v1110 = vsub.s32 0, %v1109
    %v1111 = vrot.slane %v1079, %v1110
    %v1113 = vmul.f32 %v1105, %v1111
    %v1114 = vmul.f32 %v1106, %v1111
    %v1116 = vlaneseq
    %v1117 = vshrl.u32 %v1116, 7
    %v1118 = vsub.s32 0, %v1117
    %v1119 = vrot.slane %v1080, %v1118
    %v1121 = vadd.f32 %v1113, %v1119
    %v1122 = vadd.f32 %v1114, %v1119
    %v1123 = vpack.c.bf16 %v1122, %v1121
    %v1124 = vld [vmem:[%s13] sm:$0xf]
    %v1125 = vld [vmem:[%s13 + $0x4] sm:$0xf]
    %v1126 = vld [vmem:[%s13 + $0x8] sm:$0xf]
    %v1127 = vld [vmem:[%s13 + $0xc] sm:$0xf]
    %v1128 = vld [vmem:[%s14] sm:$0x1]
    %v1130 = vlaneseq
    %v1131 = vshrl.u32 %v1130, 7
    %v1132 = vsub.s32 0, %v1131
    %v1133 = vrot.slane %v1128, %v1132
    %v1139 = vunpack.c.l.b16 %v1124
    %v1140 = vunpack.c.l.b16 %v1125
    %v1141 = vunpack.c.l.b16 %v1126
    %v1142 = vunpack.c.l.b16 %v1127
    %v1143 = vpack.c.b16 %v1140, %v1139
    %v1144 = vpack.c.b16 %v1142, %v1141
    %v1148 = vsel %vm207, %v1123, 0
    %1150 = vmatprep.subr.bf16.mxu0 0
    %1151 = vmatpush1.bf16.msra.mxu0 %v1143
    %1152 = vmatprep.subr.bf16.mxu0 0
    %1153 = vmatpush1.bf16.msra.mxu0 %v1144
    %1154 = vmatprep.subr.bf16.mxu0 0
    %1155 = vmatpush1.bf16.msra.mxu0 0
    %1156 = vmatprep.subr.bf16.mxu0 0
    %1157 = vmatpush1.bf16.msra.mxu0 0
    %1158 = vmatprep.subr.bf16.mxu0 0
    %1159 = vmatpush1.bf16.msra.mxu0 0
    %1160 = vmatprep.subr.bf16.mxu0 0
    %1161 = vmatpush1.bf16.msra.mxu0 0
    %1162 = vmatprep.subr.bf16.mxu0 0
    %1163 = vmatpush1.bf16.msra.mxu0 0
    %1164 = vmatprep.subr.bf16.mxu0 0
    %1165 = vmatpush1.bf16.msra.mxu0 0
    %1166 = vmatprep.subr.bf16.mxu0 0
    %1167 = vmatpush1.bf16.msra.mxu0 0
    %1168 = vmatprep.subr.bf16.mxu0 0
    %1169 = vmatpush1.bf16.msra.mxu0 0
    %1170 = vmatprep.subr.bf16.mxu0 0
    %1171 = vmatpush1.bf16.msra.mxu0 0
    %1172 = vmatprep.subr.bf16.mxu0 0
    %1173 = vmatpush1.bf16.msra.mxu0 0
    %1174 = vmatprep.subr.bf16.mxu0 0
    %1175 = vmatpush1.bf16.msra.mxu0 0
    %1176 = vmatprep.subr.bf16.mxu0 0
    %1177 = vmatpush1.bf16.msra.mxu0 0
    %1178 = vmatprep.subr.bf16.mxu0 0
    %1179 = vmatpush1.bf16.msra.mxu0 0
    %1180 = vmatprep.subr.bf16.mxu0 0
    %1181 = vmatpush1.bf16.msra.mxu0 0
    %1182 = vmatprep.mubr.bf16.mxu0 0
    %1183 = vmatmul.mubr.bf16.gmra.mrb[0].mxu0 %v1148
    %v1184 = vpop.f32.mrb[0].mxu0
    %v1185 = vadd.f32 %v1133, %v1184
    %v1186 = vpop.f32.mrb[0].mxu0
    %v1187 = vpop.f32.mrb[0].mxu0
    %v1188 = vadd.f32 %v1133, %v1187
    %v1189 = vpop.f32.mrb[0].mxu0
    %1190 = vdwg.mxu0
    %v1191 = vmul.f32 %v1185, 0.5
    %v1192 = vmul.f32 %v1188, 0.5
    %v1193 = vmul.f32 %v1185, 0.044715
    %v1194 = vmul.f32 %v1188, 0.044715
    %v1195 = vmul.f32 %v1193, %v1185
    %v1196 = vmul.f32 %v1194, %v1188
    %v1197 = vmul.f32 %v1195, %v1185
    %v1198 = vmul.f32 %v1196, %v1188
    %v1199 = vadd.f32 %v1185, %v1197
    %v1200 = vadd.f32 %v1188, %v1198
    %v1201 = vmul.f32 %v1199, 0.7978846
    %v1202 = vmul.f32 %v1200, 0.7978846
    %v1203 = vtanh.pop %v1201
    %v1204 = vtanh.pop %v1202
    %v1205 = vadd.f32 %v1203, 1.0
    %v1206 = vadd.f32 %v1204, 1.0
    %v1207 = vmul.f32 %v1191, %v1205
    %v1208 = vmul.f32 %v1192, %v1206
    %v1209 = vpack.c.bf16 %v1208, %v1207
    %v1210 = vld [vmem:[%s15] sm:$0xf]
    %v1211 = vld [vmem:[%s15 + $0x4] sm:$0xf]
    %v1212 = vld [vmem:[%s15 + $0x8] sm:$0xf]
    %v1213 = vld [vmem:[%s15 + $0xc] sm:$0xf]
    %v1214 = vld [vmem:[%s15 + $0x10] sm:$0xf]
    %v1215 = vld [vmem:[%s15 + $0x14] sm:$0xf]
    %v1216 = vld [vmem:[%s15 + $0x18] sm:$0xf]
    %v1217 = vld [vmem:[%s15 + $0x1c] sm:$0xf]
    %v1218 = vld [vmem:[%s16] sm:$0x1]
    %v1220 = vlaneseq
    %v1221 = vshrl.u32 %v1220, 7
    %v1222 = vsub.s32 0, %v1221
    %v1223 = vrot.slane %v1218, %v1222
    %v1233 = vunpack.c.l.b16 %v1210
    %v1234 = vunpack.c.l.b16 %v1211
    %v1235 = vunpack.c.l.b16 %v1212
    %v1236 = vunpack.c.l.b16 %v1213
    %v1237 = vunpack.c.l.b16 %v1214
    %v1238 = vunpack.c.l.b16 %v1215
    %v1239 = vunpack.c.l.b16 %v1216
    %v1240 = vunpack.c.l.b16 %v1217
    %v1241 = vpack.c.b16 %v1234, %v1233
    %v1242 = vpack.c.b16 %v1236, %v1235
    %v1243 = vpack.c.b16 %v1238, %v1237
    %v1244 = vpack.c.b16 %v1240, %v1239
    %vm1249 = vcmask 523264
    %v1251 = vsel %vm1249, %v1209, 0
    %1253 = vmatprep.subr.bf16.mxu0 0
    %1254 = vmatpush1.bf16.msra.mxu0 %v1241
    %1255 = vmatprep.subr.bf16.mxu0 0
    %1256 = vmatpush1.bf16.msra.mxu0 %v1242
    %1257 = vmatprep.subr.bf16.mxu0 0
    %1258 = vmatpush1.bf16.msra.mxu0 %v1243
    %1259 = vmatprep.subr.bf16.mxu0 0
    %1260 = vmatpush1.bf16.msra.mxu0 %v1244
    %1261 = vmatprep.subr.bf16.mxu0 0
    %1262 = vmatpush1.bf16.msra.mxu0 0
    %1263 = vmatprep.subr.bf16.mxu0 0
    %1264 = vmatpush1.bf16.msra.mxu0 0
    %1265 = vmatprep.subr.bf16.mxu0 0
    %1266 = vmatpush1.bf16.msra.mxu0 0
    %1267 = vmatprep.subr.bf16.mxu0 0
    %1268 = vmatpush1.bf16.msra.mxu0 0
    %1269 = vmatprep.subr.bf16.mxu0 0
    %1270 = vmatpush1.bf16.msra.mxu0 0
    %1271 = vmatprep.subr.bf16.mxu0 0
    %1272 = vmatpush1.bf16.msra.mxu0 0
    %1273 = vmatprep.subr.bf16.mxu0 0
    %1274 = vmatpush1.bf16.msra.mxu0 0
    %1275 = vmatprep.subr.bf16.mxu0 0
    %1276 = vmatpush1.bf16.msra.mxu0 0
    %1277 = vmatprep.subr.bf16.mxu0 0
    %1278 = vmatpush1.bf16.msra.mxu0 0
    %1279 = vmatprep.subr.bf16.mxu0 0
    %1280 = vmatpush1.bf16.msra.mxu0 0
    %1281 = vmatprep.subr.bf16.mxu0 0
    %1282 = vmatpush1.bf16.msra.mxu0 0
    %1283 = vmatprep.subr.bf16.mxu0 0
    %1284 = vmatpush1.bf16.msra.mxu0 0
    %1285 = vmatprep.mubr.bf16.mxu0 0
    %1286 = vmatmul.mubr.bf16.gmra.mrb[0].mxu0 %v1251
    %v1287 = vpop.f32.mrb[0].mxu0
    %v1288 = vadd.f32 %v1223, %v1287
    %v1289 = vpop.f32.mrb[0].mxu0
    %v1290 = vpop.f32.mrb[0].mxu0
    %v1291 = vadd.f32 %v1223, %v1290
    %v1292 = vpop.f32.mrb[0].mxu0
    %1293 = vdwg.mxu0
    %v1294 = vadd.f32 %v1288, %v1121
    %v1295 = vadd.f32 %v1291, %v1122
    %v1296 = vld [vmem:[%s17] sm:$0x1]
    %v1297 = vld [vmem:[%s18] sm:$0x1]
    %v1298 = vsel %vm207, %v1294, 0.0
    %1299 = vadd.xlane.f32.xlu0 %v1298
    %v1300 = vpop.xlane.xlu0 %1299
    %v1301 = vsel %vm207, %v1295, 0.0
    %1302 = vadd.xlane.f32.xlu0 %v1301
    %v1303 = vpop.xlane.xlu0 %1302
    %v1304 = vmul.f32 %v1300, %v214
    %v1305 = vmul.f32 %v1303, %v214
    %v1306 = vsub.f32 %v1294, %v1304
    %v1307 = vsub.f32 %v1295, %v1305
    %v1308 = vmul.f32 %v1306, %v1306
    %v1309 = vmul.f32 %v1307, %v1307
    %v1310 = vsel %vm207, %v1308, 0.0
    %1311 = vadd.xlane.f32.xlu0 %v1310
    %v1312 = vpop.xlane.xlu0 %1311
    %v1313 = vsel %vm207, %v1309, 0.0
    %1314 = vadd.xlane.f32.xlu0 %v1313
    %v1315 = vpop.xlane.xlu0 %1314
    %v1316 = vmul.f32 %v1312, %v214
    %v1317 = vmul.f32 %v1315, %v214
    %v1318 = vadd.f32 %v1316, 1e-12
    %v1319 = vadd.f32 %v1317, 1e-12
    %v1320 = vrsqrt.pop %v1318
    %v1321 = vrsqrt.pop %v1319
    %v1322 = vmul.f32 %v1306, %v1320
    %v1323 = vmul.f32 %v1307, %v1321
    %v1325 = vlaneseq
    %v1326 = vshrl.u32 %v1325, 7
    %v1327 = vsub.s32 0, %v1326
    %v1328 = vrot.slane %v1296, %v1327
    %v1330 = vmul.f32 %v1322, %v1328
    %v1331 = vmul.f32 %v1323, %v1328
    %v1333 = vlaneseq
    %v1334 = vshrl.u32 %v1333, 7
    %v1335 = vsub.s32 0, %v1334
    %v1336 = vrot.slane %v1297, %v1335
    %v1338 = vadd.f32 %v1330, %v1336
    %v1339 = vadd.f32 %v1331, %v1336
    %v1340 = vpack.c.bf16 %v1339, %v1338
    %s1341 = scalar_lea.vmem %s7, 16
    %v1342 = vld [vmem:[%s1341] sm:$0xf]
    %v1343 = vld [vmem:[%s1341 + $0x4] sm:$0xf]
    %v1344 = vld [vmem:[%s1341 + $0x8] sm:$0xf]
    %v1345 = vld [vmem:[%s1341 + $0xc] sm:$0xf]
    %s1346 = scalar_lea.vmem %s8, 1
    %v1347 = vld [vmem:[%s1346] sm:$0x1]
    %v1349 = vlaneseq
    %v1350 = vshrl.u32 %v1349, 7
    %v1351 = vsub.s32 0, %v1350
    %v1352 = vrot.slane %v1347, %v1351
    %v1358 = vunpack.c.l.b16 %v1342
    %v1359 = vunpack.c.l.b16 %v1343
    %v1360 = vunpack.c.l.b16 %v1344
    %v1361 = vunpack.c.l.b16 %v1345
    %v1362 = vpack.c.b16 %v1359, %v1358
    %v1363 = vpack.c.b16 %v1361, %v1360
    %v1367 = vsel %vm207, %v1340, 0
    %1369 = vmatprep.subr.bf16.mxu0 0
    %1370 = vmatpush1.bf16.msra.mxu0 %v1362
    %1371 = vmatprep.subr.bf16.mxu0 0
    %1372 = vmatpush1.bf16.msra.mxu0 %v1363
    %1373 = vmatprep.subr.bf16.mxu0 0
    %1374 = vmatpush1.bf16.msra.mxu0 0
    %1375 = vmatprep.subr.bf16.mxu0 0
    %1376 = vmatpush1.bf16.msra.mxu0 0
    %1377 = vmatprep.subr.bf16.mxu0 0
    %1378 = vmatpush1.bf16.msra.mxu0 0
    %1379 = vmatprep.subr.bf16.mxu0 0
    %1380 = vmatpush1.bf16.msra.mxu0 0
    %1381 = vmatprep.subr.bf16.mxu0 0
    %1382 = vmatpush1.bf16.msra.mxu0 0
    %1383 = vmatprep.subr.bf16.mxu0 0
    %1384 = vmatpush1.bf16.msra.mxu0 0
    %1385 = vmatprep.subr.bf16.mxu0 0
    %1386 = vmatpush1.bf16.msra.mxu0 0
    %1387 = vmatprep.subr.bf16.mxu0 0
    %1388 = vmatpush1.bf16.msra.mxu0 0
    %1389 = vmatprep.subr.bf16.mxu0 0
    %1390 = vmatpush1.bf16.msra.mxu0 0
    %1391 = vmatprep.subr.bf16.mxu0 0
    %1392 = vmatpush1.bf16.msra.mxu0 0
    %1393 = vmatprep.subr.bf16.mxu0 0
    %1394 = vmatpush1.bf16.msra.mxu0 0
    %1395 = vmatprep.subr.bf16.mxu0 0
    %1396 = vmatpush1.bf16.msra.mxu0 0
    %1397 = vmatprep.subr.bf16.mxu0 0
    %1398 = vmatpush1.bf16.msra.mxu0 0
    %1399 = vmatprep.subr.bf16.mxu0 0
    %1400 = vmatpush1.bf16.msra.mxu0 0
    %1401 = vmatprep.mubr.bf16.mxu0 0
    %1402 = vmatmul.mubr.bf16.gmra.mrb[0].mxu0 %v1367
    %v1403 = vpop.f32.mrb[0].mxu0
    %v1404 = vadd.f32 %v1352, %v1403
    %v1405 = vpop.f32.mrb[0].mxu0
    %v1406 = vpop.f32.mrb[0].mxu0
    %v1407 = vadd.f32 %v1352, %v1406
    %v1408 = vpop.f32.mrb[0].mxu0
    %1409 = vdwg.mxu0
    %1411 = vrot.lane.b32.xlu0 %v1404, 96
    %v1412 = vpop.permute.xlu0 %1411
    %v1413 = vsel %vm342, %v1404, 0
    %v1415 = vsel %vm342, %v1412, 0
    %1417 = vmatprep.subr.mxu0 0.0
    %1418 = vmatpush1.xpose.msra.mxu0 %v1415
    %1419 = vmatprep.subr.mxu0 0.0
    %1420 = vmatpush1.xpose.msra.mxu0 0.0
    %1421 = vmatprep.subr.mxu0 0.0
    %1422 = vmatpush1.xpose.msra.mxu0 0.0
    %1423 = vmatprep.subr.mxu0 0.0
    %1424 = vmatpush1.xpose.msra.mxu0 0.0
    %1425 = vmatprep.subr.mxu0 0.0
    %1426 = vmatpush1.xpose.msra.mxu0 0.0
    %1427 = vmatprep.subr.mxu0 0.0
    %1428 = vmatpush1.xpose.msra.mxu0 0.0
    %1429 = vmatprep.subr.mxu0 0.0
    %1430 = vmatpush1.xpose.msra.mxu0 0.0
    %1431 = vmatprep.subr.mxu0 0.0
    %1432 = vmatpush1.xpose.msra.mxu0 0.0
    %1433 = vmatprep.subr.mxu0 0.0
    %1434 = vmatpush1.xpose.msra.mxu0 0.0
    %1435 = vmatprep.subr.mxu0 0.0
    %1436 = vmatpush1.xpose.msra.mxu0 0.0
    %1437 = vmatprep.subr.mxu0 0.0
    %1438 = vmatpush1.xpose.msra.mxu0 0.0
    %1439 = vmatprep.subr.mxu0 0.0
    %1440 = vmatpush1.xpose.msra.mxu0 0.0
    %1441 = vmatprep.subr.mxu0 0.0
    %1442 = vmatpush1.xpose.msra.mxu0 0.0
    %1443 = vmatprep.subr.mxu0 0.0
    %1444 = vmatpush1.xpose.msra.mxu0 0.0
    %1445 = vmatprep.subr.mxu0 0.0
    %1446 = vmatpush1.xpose.msra.mxu0 0.0
    %1447 = vmatprep.subr.mxu0 0.0
    %1448 = vmatpush1.xpose.msra.mxu0 0.0
    %1449 = vmatprep.subr.mxu0 0.0
    %1450 = vmatpush1.xpose.msra.mxu0 0.0
    %1451 = vmatprep.subr.mxu0 0.0
    %1452 = vmatpush1.xpose.msra.mxu0 0.0
    %1453 = vmatprep.subr.mxu0 0.0
    %1454 = vmatpush1.xpose.msra.mxu0 0.0
    %1455 = vmatprep.subr.mxu0 0.0
    %1456 = vmatpush1.xpose.msra.mxu0 0.0
    %1457 = vmatprep.subr.mxu0 0.0
    %1458 = vmatpush1.xpose.msra.mxu0 0.0
    %1459 = vmatprep.subr.mxu0 0.0
    %1460 = vmatpush1.xpose.msra.mxu0 0.0
    %1461 = vmatprep.subr.mxu0 0.0
    %1462 = vmatpush1.xpose.msra.mxu0 0.0
    %1463 = vmatprep.subr.mxu0 0.0
    %1464 = vmatpush1.xpose.msra.mxu0 0.0
    %1465 = vmatprep.subr.mxu0 0.0
    %1466 = vmatpush1.xpose.msra.mxu0 0.0
    %1467 = vmatprep.subr.mxu0 0.0
    %1468 = vmatpush1.xpose.msra.mxu0 0.0
    %1469 = vmatprep.subr.mxu0 0.0
    %1470 = vmatpush1.xpose.msra.mxu0 0.0
    %1471 = vmatprep.subr.mxu0 0.0
    %1472 = vmatpush1.xpose.msra.mxu0 0.0
    %1473 = vmatprep.subr.mxu0 0.0
    %1474 = vmatpush1.xpose.msra.mxu0 0.0
    %1475 = vmatprep.subr.mxu0 0.0
    %1476 = vmatpush1.xpose.msra.mxu0 0.0
    %1477 = vmatprep.subr.mxu0 0.0
    %1478 = vmatpush1.xpose.msra.mxu0 0.0
    %1479 = vmatprep.subr.mxu0 0.0
    %1480 = vmatpush1.xpose.msra.mxu0 0.0
    %1481 = vmatprep.mubr.f32.mxu0 0.0
    %1482 = vmatmul.mubr.f32.gmra.mrb[0].mxu0 %v1413
    %v1483 = vpop.f32.mrb[0].mxu0
    %v1484 = vadd.f32 %v332, %v1483
    %v1485 = vpop.f32.mrb[0].mxu0
    %1486 = vdwg.mxu0
    %1488 = vrot.lane.b32.xlu0 %v1407, 96
    %v1489 = vpop.permute.xlu0 %1488
    %v1490 = vsel %vm342, %v1407, 0
    %v1492 = vsel %vm342, %v1489, 0
    %1494 = vmatprep.subr.mxu0 0.0
    %1495 = vmatpush1.xpose.msra.mxu0 %v1492
    %1496 = vmatprep.subr.mxu0 0.0
    %1497 = vmatpush1.xpose.msra.mxu0 0.0
    %1498 = vmatprep.subr.mxu0 0.0
    %1499 = vmatpush1.xpose.msra.mxu0 0.0
    %1500 = vmatprep.subr.mxu0 0.0
    %1501 = vmatpush1.xpose.msra.mxu0 0.0
    %1502 = vmatprep.subr.mxu0 0.0
    %1503 = vmatpush1.xpose.msra.mxu0 0.0
    %1504 = vmatprep.subr.mxu0 0.0
    %1505 = vmatpush1.xpose.msra.mxu0 0.0
    %1506 = vmatprep.subr.mxu0 0.0
    %1507 = vmatpush1.xpose.msra.mxu0 0.0
    %1508 = vmatprep.subr.mxu0 0.0
    %1509 = vmatpush1.xpose.msra.mxu0 0.0
    %1510 = vmatprep.subr.mxu0 0.0
    %1511 = vmatpush1.xpose.msra.mxu0 0.0
    %1512 = vmatprep.subr.mxu0 0.0
    %1513 = vmatpush1.xpose.msra.mxu0 0.0
    %1514 = vmatprep.subr.mxu0 0.0
    %1515 = vmatpush1.xpose.msra.mxu0 0.0
    %1516 = vmatprep.subr.mxu0 0.0
    %1517 = vmatpush1.xpose.msra.mxu0 0.0
    %1518 = vmatprep.subr.mxu0 0.0
    %1519 = vmatpush1.xpose.msra.mxu0 0.0
    %1520 = vmatprep.subr.mxu0 0.0
    %1521 = vmatpush1.xpose.msra.mxu0 0.0
    %1522 = vmatprep.subr.mxu0 0.0
    %1523 = vmatpush1.xpose.msra.mxu0 0.0
    %1524 = vmatprep.subr.mxu0 0.0
    %1525 = vmatpush1.xpose.msra.mxu0 0.0
    %1526 = vmatprep.subr.mxu0 0.0
    %1527 = vmatpush1.xpose.msra.mxu0 0.0
    %1528 = vmatprep.subr.mxu0 0.0
    %1529 = vmatpush1.xpose.msra.mxu0 0.0
    %1530 = vmatprep.subr.mxu0 0.0
    %1531 = vmatpush1.xpose.msra.mxu0 0.0
    %1532 = vmatprep.subr.mxu0 0.0
    %1533 = vmatpush1.xpose.msra.mxu0 0.0
    %1534 = vmatprep.subr.mxu0 0.0
    %1535 = vmatpush1.xpose.msra.mxu0 0.0
    %1536 = vmatprep.subr.mxu0 0.0
    %1537 = vmatpush1.xpose.msra.mxu0 0.0
    %1538 = vmatprep.subr.mxu0 0.0
    %1539 = vmatpush1.xpose.msra.mxu0 0.0
    %1540 = vmatprep.subr.mxu0 0.0
    %1541 = vmatpush1.xpose.msra.mxu0 0.0
    %1542 = vmatprep.subr.mxu0 0.0
    %1543 = vmatpush1.xpose.msra.mxu0 0.0
    %1544 = vmatprep.subr.mxu0 0.0
    %1545 = vmatpush1.xpose.msra.mxu0 0.0
    %1546 = vmatprep.subr.mxu0 0.0
    %1547 = vmatpush1.xpose.msra.mxu0 0.0
    %1548 = vmatprep.subr.mxu0 0.0
    %1549 = vmatpush1.xpose.msra.mxu0 0.0
    %1550 = vmatprep.subr.mxu0 0.0
    %1551 = vmatpush1.xpose.msra.mxu0 0.0
    %1552 = vmatprep.subr.mxu0 0.0
    %1553 = vmatpush1.xpose.msra.mxu0 0.0
    %1554 = vmatprep.subr.mxu0 0.0
    %1555 = vmatpush1.xpose.msra.mxu0 0.0
    %1556 = vmatprep.subr.mxu0 0.0
    %1557 = vmatpush1.xpose.msra.mxu0 0.0
    %1558 = vmatprep.mubr.f32.mxu0 0.0
    %1559 = vmatmul.mubr.f32.gmra.mrb[0].mxu0 %v1490
    %v1560 = vpop.f32.mrb[0].mxu0
    %v1561 = vadd.f32 %v336, %v1560
    %v1562 = vpop.f32.mrb[0].mxu0
    %1563 = vdwg.mxu0
    %v1564 = vsel %vm494, %v1484, -inf
    %1565 = vmax.xlane.f32.xlu0 %v1564
    %v1566 = vpop.xlane.xlu0 %1565
    %v1567 = vsel %vm494, %v1561, -inf
    %1568 = vmax.xlane.f32.xlu0 %v1567
    %v1569 = vpop.xlane.xlu0 %1568
    %v1570 = vsub.f32 %v1484, %v1566
    %v1571 = vsub.f32 %v1561, %v1569
    %v1572 = vmul.f32 %v1570, 1.442695
    %v1573 = vpow.pop %v1572
    %v1574 = vmul.f32 %v1571, 1.442695
    %v1575 = vpow.pop %v1574
    %v1576 = vsel %vm494, %v1573, 0.0
    %1577 = vadd.xlane.f32.xlu0 %v1576
    %v1578 = vpop.xlane.xlu0 %1577
    %v1579 = vsel %vm494, %v1575, 0.0
    %1580 = vadd.xlane.f32.xlu0 %v1579
    %v1581 = vpop.xlane.xlu0 %1580
    %v1582 = vrcp.pop %v1578
    %v1583 = vrcp.pop %v1581
    %v1584 = vmul.f32 %v1573, %v1582
    %v1585 = vmul.f32 %v1575, %v1583
    %1586 = vrot.lane.b32.xlu0 %v1404, 64
    %v1587 = vpop.permute.xlu0 %1586
    %v1590 = vsel %vm494, %v1584, 0
    %1592 = vmatprep.subr.mxu0 0.0
    %1593 = vmatpush1.msra.mxu0 %v1587
    %1594 = vmatprep.subr.mxu0 0.0
    %1595 = vmatpush1.msra.mxu0 0.0
    %1596 = vmatprep.subr.mxu0 0.0
    %1597 = vmatpush1.msra.mxu0 0.0
    %1598 = vmatprep.subr.mxu0 0.0
    %1599 = vmatpush1.msra.mxu0 0.0
    %1600 = vmatprep.subr.mxu0 0.0
    %1601 = vmatpush1.msra.mxu0 0.0
    %1602 = vmatprep.subr.mxu0 0.0
    %1603 = vmatpush1.msra.mxu0 0.0
    %1604 = vmatprep.subr.mxu0 0.0
    %1605 = vmatpush1.msra.mxu0 0.0
    %1606 = vmatprep.subr.mxu0 0.0
    %1607 = vmatpush1.msra.mxu0 0.0
    %1608 = vmatprep.subr.mxu0 0.0
    %1609 = vmatpush1.msra.mxu0 0.0
    %1610 = vmatprep.subr.mxu0 0.0
    %1611 = vmatpush1.msra.mxu0 0.0
    %1612 = vmatprep.subr.mxu0 0.0
    %1613 = vmatpush1.msra.mxu0 0.0
    %1614 = vmatprep.subr.mxu0 0.0
    %1615 = vmatpush1.msra.mxu0 0.0
    %1616 = vmatprep.subr.mxu0 0.0
    %1617 = vmatpush1.msra.mxu0 0.0
    %1618 = vmatprep.subr.mxu0 0.0
    %1619 = vmatpush1.msra.mxu0 0.0
    %1620 = vmatprep.subr.mxu0 0.0
    %1621 = vmatpush1.msra.mxu0 0.0
    %1622 = vmatprep.subr.mxu0 0.0
    %1623 = vmatpush1.msra.mxu0 0.0
    %1624 = vmatprep.subr.mxu0 0.0
    %1625 = vmatpush1.msra.mxu0 0.0
    %1626 = vmatprep.subr.mxu0 0.0
    %1627 = vmatpush1.msra.mxu0 0.0
    %1628 = vmatprep.subr.mxu0 0.0
    %1629 = vmatpush1.msra.mxu0 0.0
    %1630 = vmatprep.subr.mxu0 0.0
    %1631 = vmatpush1.msra.mxu0 0.0
    %1632 = vmatprep.subr.mxu0 0.0
    %1633 = vmatpush1.msra.mxu0 0.0
    %1634 = vmatprep.subr.mxu0 0.0
    %1635 = vmatpush1.msra.mxu0 0.0
    %1636 = vmatprep.subr.mxu0 0.0
    %1637 = vmatpush1.msra.mxu0 0.0
    %1638 = vmatprep.subr.mxu0 0.0
    %1639 = vmatpush1.msra.mxu0 0.0
    %1640 = vmatprep.subr.mxu0 0.0
    %1641 = vmatpush1.msra.mxu0 0.0
    %1642 = vmatprep.subr.mxu0 0.0
    %1643 = vmatpush1.msra.mxu0 0.0
    %1644 = vmatprep.subr.mxu0 0.0
    %1645 = vmatpush1.msra.mxu0 0.0
    %1646 = vmatprep.subr.mxu0 0.0
    %1647 = vmatpush1.msra.mxu0 0.0
    %1648 = vmatprep.subr.mxu0 0.0
    %1649 = vmatpush1.msra.mxu0 0.0
    %1650 = vmatprep.subr.mxu0 0.0
    %1651 = vmatpush1.msra.mxu0 0.0
    %1652 = vmatprep.subr.mxu0 0.0
    %1653 = vmatpush1.msra.mxu0 0.0
    %1654 = vmatprep.subr.mxu0 0.0
    %1655 = vmatpush1.msra.mxu0 0.0
    %1656 = vmatprep.mubr.f32.mxu0 0.0
    %1657 = vmatmul.mubr.f32.gmra.mrb[0].mxu0 %v1590
    %v1658 = vpop.f32.mrb[0].mxu0
    %v1659 = vadd.f32 0.0, %v1658
    %v1660 = vpop.f32.mrb[0].mxu0
    %1661 = vdwg.mxu0
    %1662 = vrot.lane.b32.xlu0 %v1407, 64
    %v1663 = vpop.permute.xlu0 %1662
    %v1666 = vsel %vm494, %v1585, 0
    %1668 = vmatprep.subr.mxu0 0.0
    %1669 = vmatpush1.msra.mxu0 %v1663
    %1670 = vmatprep.subr.mxu0 0.0
    %1671 = vmatpush1.msra.mxu0 0.0
    %1672 = vmatprep.subr.mxu0 0.0
    %1673 = vmatpush1.msra.mxu0 0.0
    %1674 = vmatprep.subr.mxu0 0.0
    %1675 = vmatpush1.msra.mxu0 0.0
    %1676 = vmatprep.subr.mxu0 0.0
    %1677 = vmatpush1.msra.mxu0 0.0
    %1678 = vmatprep.subr.mxu0 0.0
    %1679 = vmatpush1.msra.mxu0 0.0
    %1680 = vmatprep.subr.mxu0 0.0
    %1681 = vmatpush1.msra.mxu0 0.0
    %1682 = vmatprep.subr.mxu0 0.0
    %1683 = vmatpush1.msra.mxu0 0.0
    %1684 = vmatprep.subr.mxu0 0.0
    %1685 = vmatpush1.msra.mxu0 0.0
    %1686 = vmatprep.subr.mxu0 0.0
    %1687 = vmatpush1.msra.mxu0 0.0
    %1688 = vmatprep.subr.mxu0 0.0
    %1689 = vmatpush1.msra.mxu0 0.0
    %1690 = vmatprep.subr.mxu0 0.0
    %1691 = vmatpush1.msra.mxu0 0.0
    %1692 = vmatprep.subr.mxu0 0.0
    %1693 = vmatpush1.msra.mxu0 0.0
    %1694 = vmatprep.subr.mxu0 0.0
    %1695 = vmatpush1.msra.mxu0 0.0
    %1696 = vmatprep.subr.mxu0 0.0
    %1697 = vmatpush1.msra.mxu0 0.0
    %1698 = vmatprep.subr.mxu0 0.0
    %1699 = vmatpush1.msra.mxu0 0.0
    %1700 = vmatprep.subr.mxu0 0.0
    %1701 = vmatpush1.msra.mxu0 0.0
    %1702 = vmatprep.subr.mxu0 0.0
    %1703 = vmatpush1.msra.mxu0 0.0
    %1704 = vmatprep.subr.mxu0 0.0
    %1705 = vmatpush1.msra.mxu0 0.0
    %1706 = vmatprep.subr.mxu0 0.0
    %1707 = vmatpush1.msra.mxu0 0.0
    %1708 = vmatprep.subr.mxu0 0.0
    %1709 = vmatpush1.msra.mxu0 0.0
    %1710 = vmatprep.subr.mxu0 0.0
    %1711 = vmatpush1.msra.mxu0 0.0
    %1712 = vmatprep.subr.mxu0 0.0
    %1713 = vmatpush1.msra.mxu0 0.0
    %1714 = vmatprep.subr.mxu0 0.0
    %1715 = vmatpush1.msra.mxu0 0.0
    %1716 = vmatprep.subr.mxu0 0.0
    %1717 = vmatpush1.msra.mxu0 0.0
    %1718 = vmatprep.subr.mxu0 0.0
    %1719 = vmatpush1.msra.mxu0 0.0
    %1720 = vmatprep.subr.mxu0 0.0
    %1721 = vmatpush1.msra.mxu0 0.0
    %1722 = vmatprep.subr.mxu0 0.0
    %1723 = vmatpush1.msra.mxu0 0.0
    %1724 = vmatprep.subr.mxu0 0.0
    %1725 = vmatpush1.msra.mxu0 0.0
    %1726 = vmatprep.subr.mxu0 0.0
    %1727 = vmatpush1.msra.mxu0 0.0
    %1728 = vmatprep.subr.mxu0 0.0
    %1729 = vmatpush1.msra.mxu0 0.0
    %1730 = vmatprep.subr.mxu0 0.0
    %1731 = vmatpush1.msra.mxu0 0.0
    %1732 = vmatprep.mubr.f32.mxu0 0.0
    %1733 = vmatmul.mubr.f32.gmra.mrb[0].mxu0 %v1666
    %v1734 = vpop.f32.mrb[0].mxu0
    %v1735 = vadd.f32 0.0, %v1734
    %v1736 = vpop.f32.mrb[0].mxu0
    %1737 = vdwg.mxu0
    %1738 = vrot.lane.b32.xlu0 %v1404, 112
    %v1739 = vpop.permute.xlu0 %1738
    %1740 = vrot.lane.b32.xlu0 %v1404, 80
    %v1741 = vpop.permute.xlu0 %1740
    %v1742 = vsel %vm342, %v1739, 0
    %v1744 = vsel %vm342, %v1741, 0
    %1746 = vmatprep.subr.mxu0 0.0
    %1747 = vmatpush1.xpose.msra.mxu0 %v1744
    %1748 = vmatprep.subr.mxu0 0.0
    %1749 = vmatpush1.xpose.msra.mxu0 0.0
    %1750 = vmatprep.subr.mxu0 0.0
    %1751 = vmatpush1.xpose.msra.mxu0 0.0
    %1752 = vmatprep.subr.mxu0 0.0
    %1753 = vmatpush1.xpose.msra.mxu0 0.0
    %1754 = vmatprep.subr.mxu0 0.0
    %1755 = vmatpush1.xpose.msra.mxu0 0.0
    %1756 = vmatprep.subr.mxu0 0.0
    %1757 = vmatpush1.xpose.msra.mxu0 0.0
    %1758 = vmatprep.subr.mxu0 0.0
    %1759 = vmatpush1.xpose.msra.mxu0 0.0
    %1760 = vmatprep.subr.mxu0 0.0
    %1761 = vmatpush1.xpose.msra.mxu0 0.0
    %1762 = vmatprep.subr.mxu0 0.0
    %1763 = vmatpush1.xpose.msra.mxu0 0.0
    %1764 = vmatprep.subr.mxu0 0.0
    %1765 = vmatpush1.xpose.msra.mxu0 0.0
    %1766 = vmatprep.subr.mxu0 0.0
    %1767 = vmatpush1.xpose.msra.mxu0 0.0
    %1768 = vmatprep.subr.mxu0 0.0
    %1769 = vmatpush1.xpose.msra.mxu0 0.0
    %1770 = vmatprep.subr.mxu0 0.0
    %1771 = vmatpush1.xpose.msra.mxu0 0.0
    %1772 = vmatprep.subr.mxu0 0.0
    %1773 = vmatpush1.xpose.msra.mxu0 0.0
    %1774 = vmatprep.subr.mxu0 0.0
    %1775 = vmatpush1.xpose.msra.mxu0 0.0
    %1776 = vmatprep.subr.mxu0 0.0
    %1777 = vmatpush1.xpose.msra.mxu0 0.0
    %1778 = vmatprep.subr.mxu0 0.0
    %1779 = vmatpush1.xpose.msra.mxu0 0.0
    %1780 = vmatprep.subr.mxu0 0.0
    %1781 = vmatpush1.xpose.msra.mxu0 0.0
    %1782 = vmatprep.subr.mxu0 0.0
    %1783 = vmatpush1.xpose.msra.mxu0 0.0
    %1784 = vmatprep.subr.mxu0 0.0
    %1785 = vmatpush1.xpose.msra.mxu0 0.0
    %1786 = vmatprep.subr.mxu0 0.0
    %1787 = vmatpush1.xpose.msra.mxu0 0.0
    %1788 = vmatprep.subr.mxu0 0.0
    %1789 = vmatpush1.xpose.msra.mxu0 0.0
    %1790 = vmatprep.subr.mxu0 0.0
    %1791 = vmatpush1.xpose.msra.mxu0 0.0
    %1792 = vmatprep.subr.mxu0 0.0
    %1793 = vmatpush1.xpose.msra.mxu0 0.0
    %1794 = vmatprep.subr.mxu0 0.0
    %1795 = vmatpush1.xpose.msra.mxu0 0.0
    %1796 = vmatprep.subr.mxu0 0.0
    %1797 = vmatpush1.xpose.msra.mxu0 0.0
    %1798 = vmatprep.subr.mxu0 0.0
    %1799 = vmatpush1.xpose.msra.mxu0 0.0
    %1800 = vmatprep.subr.mxu0 0.0
    %1801 = vmatpush1.xpose.msra.mxu0 0.0
    %1802 = vmatprep.subr.mxu0 0.0
    %1803 = vmatpush1.xpose.msra.mxu0 0.0
    %1804 = vmatprep.subr.mxu0 0.0
    %1805 = vmatpush1.xpose.msra.mxu0 0.0
    %1806 = vmatprep.subr.mxu0 0.0
    %1807 = vmatpush1.xpose.msra.mxu0 0.0
    %1808 = vmatprep.subr.mxu0 0.0
    %1809 = vmatpush1.xpose.msra.mxu0 0.0
    %1810 = vmatprep.mubr.f32.mxu0 0.0
    %1811 = vmatmul.mubr.f32.gmra.mrb[0].mxu0 %v1742
    %v1812 = vpop.f32.mrb[0].mxu0
    %v1813 = vadd.f32 %v332, %v1812
    %v1814 = vpop.f32.mrb[0].mxu0
    %1815 = vdwg.mxu0
    %1816 = vrot.lane.b32.xlu0 %v1407, 112
    %v1817 = vpop.permute.xlu0 %1816
    %1818 = vrot.lane.b32.xlu0 %v1407, 80
    %v1819 = vpop.permute.xlu0 %1818
    %v1820 = vsel %vm342, %v1817, 0
    %v1822 = vsel %vm342, %v1819, 0
    %1824 = vmatprep.subr.mxu0 0.0
    %1825 = vmatpush1.xpose.msra.mxu0 %v1822
    %1826 = vmatprep.subr.mxu0 0.0
    %1827 = vmatpush1.xpose.msra.mxu0 0.0
    %1828 = vmatprep.subr.mxu0 0.0
    %1829 = vmatpush1.xpose.msra.mxu0 0.0
    %1830 = vmatprep.subr.mxu0 0.0
    %1831 = vmatpush1.xpose.msra.mxu0 0.0
    %1832 = vmatprep.subr.mxu0 0.0
    %1833 = vmatpush1.xpose.msra.mxu0 0.0
    %1834 = vmatprep.subr.mxu0 0.0
    %1835 = vmatpush1.xpose.msra.mxu0 0.0
    %1836 = vmatprep.subr.mxu0 0.0
    %1837 = vmatpush1.xpose.msra.mxu0 0.0
    %1838 = vmatprep.subr.mxu0 0.0
    %1839 = vmatpush1.xpose.msra.mxu0 0.0
    %1840 = vmatprep.subr.mxu0 0.0
    %1841 = vmatpush1.xpose.msra.mxu0 0.0
    %1842 = vmatprep.subr.mxu0 0.0
    %1843 = vmatpush1.xpose.msra.mxu0 0.0
    %1844 = vmatprep.subr.mxu0 0.0
    %1845 = vmatpush1.xpose.msra.mxu0 0.0
    %1846 = vmatprep.subr.mxu0 0.0
    %1847 = vmatpush1.xpose.msra.mxu0 0.0
    %1848 = vmatprep.subr.mxu0 0.0
    %1849 = vmatpush1.xpose.msra.mxu0 0.0
    %1850 = vmatprep.subr.mxu0 0.0
    %1851 = vmatpush1.xpose.msra.mxu0 0.0
    %1852 = vmatprep.subr.mxu0 0.0
    %1853 = vmatpush1.xpose.msra.mxu0 0.0
    %1854 = vmatprep.subr.mxu0 0.0
    %1855 = vmatpush1.xpose.msra.mxu0 0.0
    %1856 = vmatprep.subr.mxu0 0.0
    %1857 = vmatpush1.xpose.msra.mxu0 0.0
    %1858 = vmatprep.subr.mxu0 0.0
    %1859 = vmatpush1.xpose.msra.mxu0 0.0
    %1860 = vmatprep.subr.mxu0 0.0
    %1861 = vmatpush1.xpose.msra.mxu0 0.0
    %1862 = vmatprep.subr.mxu0 0.0
    %1863 = vmatpush1.xpose.msra.mxu0 0.0
    %1864 = vmatprep.subr.mxu0 0.0
    %1865 = vmatpush1.xpose.msra.mxu0 0.0
    %1866 = vmatprep.subr.mxu0 0.0
    %1867 = vmatpush1.xpose.msra.mxu0 0.0
    %1868 = vmatprep.subr.mxu0 0.0
    %1869 = vmatpush1.xpose.msra.mxu0 0.0
    %1870 = vmatprep.subr.mxu0 0.0
    %1871 = vmatpush1.xpose.msra.mxu0 0.0
    %1872 = vmatprep.subr.mxu0 0.0
    %1873 = vmatpush1.xpose.msra.mxu0 0.0
    %1874 = vmatprep.subr.mxu0 0.0
    %1875 = vmatpush1.xpose.msra.mxu0 0.0
    %1876 = vmatprep.subr.mxu0 0.0
    %1877 = vmatpush1.xpose.msra.mxu0 0.0
    %1878 = vmatprep.subr.mxu0 0.0
    %1879 = vmatpush1.xpose.msra.mxu0 0.0
    %1880 = vmatprep.subr.mxu0 0.0
    %1881 = vmatpush1.xpose.msra.mxu0 0.0
    %1882 = vmatprep.subr.mxu0 0.0
    %1883 = vmatpush1.xpose.msra.mxu0 0.0
    %1884 = vmatprep.subr.mxu0 0.0
    %1885 = vmatpush1.xpose.msra.mxu0 0.0
    %1886 = vmatprep.subr.mxu0 0.0
    %1887 = vmatpush1.xpose.msra.mxu0 0.0
    %1888 = vmatprep.mubr.f32.mxu0 0.0
    %1889 = vmatmul.mubr.f32.gmra.mrb[0].mxu0 %v1820
    %v1890 = vpop.f32.mrb[0].mxu0
    %v1891 = vadd.f32 %v336, %v1890
    %v1892 = vpop.f32.mrb[0].mxu0
    %1893 = vdwg.mxu0
    %v1894 = vsel %vm494, %v1813, -inf
    %1895 = vmax.xlane.f32.xlu0 %v1894
    %v1896 = vpop.xlane.xlu0 %1895
    %v1897 = vsel %vm494, %v1891, -inf
    %1898 = vmax.xlane.f32.xlu0 %v1897
    %v1899 = vpop.xlane.xlu0 %1898
    %v1900 = vsub.f32 %v1813, %v1896
    %v1901 = vsub.f32 %v1891, %v1899
    %v1902 = vmul.f32 %v1900, 1.442695
    %v1903 = vpow.pop %v1902
    %v1904 = vmul.f32 %v1901, 1.442695
    %v1905 = vpow.pop %v1904
    %v1906 = vsel %vm494, %v1903, 0.0
    %1907 = vadd.xlane.f32.xlu0 %v1906
    %v1908 = vpop.xlane.xlu0 %1907
    %v1909 = vsel %vm494, %v1905, 0.0
    %1910 = vadd.xlane.f32.xlu0 %v1909
    %v1911 = vpop.xlane.xlu0 %1910
    %v1912 = vrcp.pop %v1908
    %v1913 = vrcp.pop %v1911
    %v1914 = vmul.f32 %v1903, %v1912
    %v1915 = vmul.f32 %v1905, %v1913
    %1916 = vrot.lane.b32.xlu0 %v1404, 48
    %v1917 = vpop.permute.xlu0 %1916
    %v1920 = vsel %vm494, %v1914, 0
    %1922 = vmatprep.subr.mxu0 0.0
    %1923 = vmatpush1.msra.mxu0 %v1917
    %1924 = vmatprep.subr.mxu0 0.0
    %1925 = vmatpush1.msra.mxu0 0.0
    %1926 = vmatprep.subr.mxu0 0.0
    %1927 = vmatpush1.msra.mxu0 0.0
    %1928 = vmatprep.subr.mxu0 0.0
    %1929 = vmatpush1.msra.mxu0 0.0
    %1930 = vmatprep.subr.mxu0 0.0
    %1931 = vmatpush1.msra.mxu0 0.0
    %1932 = vmatprep.subr.mxu0 0.0
    %1933 = vmatpush1.msra.mxu0 0.0
    %1934 = vmatprep.subr.mxu0 0.0
    %1935 = vmatpush1.msra.mxu0 0.0
    %1936 = vmatprep.subr.mxu0 0.0
    %1937 = vmatpush1.msra.mxu0 0.0
    %1938 = vmatprep.subr.mxu0 0.0
    %1939 = vmatpush1.msra.mxu0 0.0
    %1940 = vmatprep.subr.mxu0 0.0
    %1941 = vmatpush1.msra.mxu0 0.0
    %1942 = vmatprep.subr.mxu0 0.0
    %1943 = vmatpush1.msra.mxu0 0.0
    %1944 = vmatprep.subr.mxu0 0.0
    %1945 = vmatpush1.msra.mxu0 0.0
    %1946 = vmatprep.subr.mxu0 0.0
    %1947 = vmatpush1.msra.mxu0 0.0
    %1948 = vmatprep.subr.mxu0 0.0
    %1949 = vmatpush1.msra.mxu0 0.0
    %1950 = vmatprep.subr.mxu0 0.0
    %1951 = vmatpush1.msra.mxu0 0.0
    %1952 = vmatprep.subr.mxu0 0.0
    %1953 = vmatpush1.msra.mxu0 0.0
    %1954 = vmatprep.subr.mxu0 0.0
    %1955 = vmatpush1.msra.mxu0 0.0
    %1956 = vmatprep.subr.mxu0 0.0
    %1957 = vmatpush1.msra.mxu0 0.0
    %1958 = vmatprep.subr.mxu0 0.0
    %1959 = vmatpush1.msra.mxu0 0.0
    %1960 = vmatprep.subr.mxu0 0.0
    %1961 = vmatpush1.msra.mxu0 0.0
    %1962 = vmatprep.subr.mxu0 0.0
    %1963 = vmatpush1.msra.mxu0 0.0
    %1964 = vmatprep.subr.mxu0 0.0
    %1965 = vmatpush1.msra.mxu0 0.0
    %1966 = vmatprep.subr.mxu0 0.0
    %1967 = vmatpush1.msra.mxu0 0.0
    %1968 = vmatprep.subr.mxu0 0.0
    %1969 = vmatpush1.msra.mxu0 0.0
    %1970 = vmatprep.subr.mxu0 0.0
    %1971 = vmatpush1.msra.mxu0 0.0
    %1972 = vmatprep.subr.mxu0 0.0
    %1973 = vmatpush1.msra.mxu0 0.0
    %1974 = vmatprep.subr.mxu0 0.0
    %1975 = vmatpush1.msra.mxu0 0.0
    %1976 = vmatprep.subr.mxu0 0.0
    %1977 = vmatpush1.msra.mxu0 0.0
    %1978 = vmatprep.subr.mxu0 0.0
    %1979 = vmatpush1.msra.mxu0 0.0
    %1980 = vmatprep.subr.mxu0 0.0
    %1981 = vmatpush1.msra.mxu0 0.0
    %1982 = vmatprep.subr.mxu0 0.0
    %1983 = vmatpush1.msra.mxu0 0.0
    %1984 = vmatprep.subr.mxu0 0.0
    %1985 = vmatpush1.msra.mxu0 0.0
    %1986 = vmatprep.mubr.f32.mxu0 0.0
    %1987 = vmatmul.mubr.f32.gmra.mrb[0].mxu0 %v1920
    %v1988 = vpop.f32.mrb[0].mxu0
    %v1989 = vadd.f32 0.0, %v1988
    %v1990 = vpop.f32.mrb[0].mxu0
    %1991 = vdwg.mxu0
    %1992 = vrot.lane.b32.xlu0 %v1407, 48
    %v1993 = vpop.permute.xlu0 %1992
    %v1996 = vsel %vm494, %v1915, 0
    %1998 = vmatprep.subr.mxu0 0.0
    %1999 = vmatpush1.msra.mxu0 %v1993
    %2000 = vmatprep.subr.mxu0 0.0
    %2001 = vmatpush1.msra.mxu0 0.0
    %2002 = vmatprep.subr.mxu0 0.0
    %2003 = vmatpush1.msra.mxu0 0.0
    %2004 = vmatprep.subr.mxu0 0.0
    %2005 = vmatpush1.msra.mxu0 0.0
    %2006 = vmatprep.subr.mxu0 0.0
    %2007 = vmatpush1.msra.mxu0 0.0
    %2008 = vmatprep.subr.mxu0 0.0
    %2009 = vmatpush1.msra.mxu0 0.0
    %2010 = vmatprep.subr.mxu0 0.0
    %2011 = vmatpush1.msra.mxu0 0.0
    %2012 = vmatprep.subr.mxu0 0.0
    %2013 = vmatpush1.msra.mxu0 0.0
    %2014 = vmatprep.subr.mxu0 0.0
    %2015 = vmatpush1.msra.mxu0 0.0
    %2016 = vmatprep.subr.mxu0 0.0
    %2017 = vmatpush1.msra.mxu0 0.0
    %2018 = vmatprep.subr.mxu0 0.0
    %2019 = vmatpush1.msra.mxu0 0.0
    %2020 = vmatprep.subr.mxu0 0.0
    %2021 = vmatpush1.msra.mxu0 0.0
    %2022 = vmatprep.subr.mxu0 0.0
    %2023 = vmatpush1.msra.mxu0 0.0
    %2024 = vmatprep.subr.mxu0 0.0
    %2025 = vmatpush1.msra.mxu0 0.0
    %2026 = vmatprep.subr.mxu0 0.0
    %2027 = vmatpush1.msra.mxu0 0.0
    %2028 = vmatprep.subr.mxu0 0.0
    %2029 = vmatpush1.msra.mxu0 0.0
    %2030 = vmatprep.subr.mxu0 0.0
    %2031 = vmatpush1.msra.mxu0 0.0
    %2032 = vmatprep.subr.mxu0 0.0
    %2033 = vmatpush1.msra.mxu0 0.0
    %2034 = vmatprep.subr.mxu0 0.0
    %2035 = vmatpush1.msra.mxu0 0.0
    %2036 = vmatprep.subr.mxu0 0.0
    %2037 = vmatpush1.msra.mxu0 0.0
    %2038 = vmatprep.subr.mxu0 0.0
    %2039 = vmatpush1.msra.mxu0 0.0
    %2040 = vmatprep.subr.mxu0 0.0
    %2041 = vmatpush1.msra.mxu0 0.0
    %2042 = vmatprep.subr.mxu0 0.0
    %2043 = vmatpush1.msra.mxu0 0.0
    %2044 = vmatprep.subr.mxu0 0.0
    %2045 = vmatpush1.msra.mxu0 0.0
    %2046 = vmatprep.subr.mxu0 0.0
    %2047 = vmatpush1.msra.mxu0 0.0
    %2048 = vmatprep.subr.mxu0 0.0
    %2049 = vmatpush1.msra.mxu0 0.0
    %2050 = vmatprep.subr.mxu0 0.0
    %2051 = vmatpush1.msra.mxu0 0.0
    %2052 = vmatprep.subr.mxu0 0.0
    %2053 = vmatpush1.msra.mxu0 0.0
    %2054 = vmatprep.subr.mxu0 0.0
    %2055 = vmatpush1.msra.mxu0 0.0
    %2056 = vmatprep.subr.mxu0 0.0
    %2057 = vmatpush1.msra.mxu0 0.0
    %2058 = vmatprep.subr.mxu0 0.0
    %2059 = vmatpush1.msra.mxu0 0.0
    %2060 = vmatprep.subr.mxu0 0.0
    %2061 = vmatpush1.msra.mxu0 0.0
    %2062 = vmatprep.mubr.f32.mxu0 0.0
    %2063 = vmatmul.mubr.f32.gmra.mrb[0].mxu0 %v1996
    %v2064 = vpop.f32.mrb[0].mxu0
    %v2065 = vadd.f32 0.0, %v2064
    %v2066 = vpop.f32.mrb[0].mxu0
    %2067 = vdwg.mxu0
    %2070 = vrot.lane.b32.xlu0 %v1989, 16
    %v2071 = vpop.permute.xlu0 %2070
    %2072 = vrot.lane.b32.xlu0 %v2065, 16
    %v2073 = vpop.permute.xlu0 %2072
    %v2076 = vsel %vm342, %v1659, %v2071
    %v2077 = vsel %vm342, %v1735, %v2073
    %v2078 = vpack.c.bf16 %v2077, %v2076
    %s2079 = scalar_lea.vmem %s9, 16
    %v2080 = vld [vmem:[%s2079] sm:$0xf]
    %v2081 = vld [vmem:[%s2079 + $0x4] sm:$0xf]
    %v2082 = vld [vmem:[%s2079 + $0x8] sm:$0xf]
    %v2083 = vld [vmem:[%s2079 + $0xc] sm:$0xf]
    %s2084 = scalar_lea.vmem %s10, 1
    %v2085 = vld [vmem:[%s2084] sm:$0x1]
    %v2087 = vlaneseq
    %v2088 = vshrl.u32 %v2087, 7
    %v2089 = vsub.s32 0, %v2088
    %v2090 = vrot.slane %v2085, %v2089
    %v2096 = vunpack.c.l.b16 %v2080
    %v2097 = vunpack.c.l.b16 %v2081
    %v2098 = vunpack.c.l.b16 %v2082
    %v2099 = vunpack.c.l.b16 %v2083
    %v2100 = vpack.c.b16 %v2097, %v2096
    %v2101 = vpack.c.b16 %v2099, %v2098
    %v2105 = vsel %vm207, %v2078, 0
    %2107 = vmatprep.subr.bf16.mxu0 0
    %2108 = vmatpush1.bf16.msra.mxu0 %v2100
    %2109 = vmatprep.subr.bf16.mxu0 0
    %2110 = vmatpush1.bf16.msra.mxu0 %v2101
    %2111 = vmatprep.subr.bf16.mxu0 0
    %2112 = vmatpush1.bf16.msra.mxu0 0
    %2113 = vmatprep.subr.bf16.mxu0 0
    %2114 = vmatpush1.bf16.msra.mxu0 0
    %2115 = vmatprep.subr.bf16.mxu0 0
    %2116 = vmatpush1.bf16.msra.mxu0 0
    %2117 = vmatprep.subr.bf16.mxu0 0
    %2118 = vmatpush1.bf16.msra.mxu0 0
    %2119 = vmatprep.subr.bf16.mxu0 0
    %2120 = vmatpush1.bf16.msra.mxu0 0
    %2121 = vmatprep.subr.bf16.mxu0 0
    %2122 = vmatpush1.bf16.msra.mxu0 0
    %2123 = vmatprep.subr.bf16.mxu0 0
    %2124 = vmatpush1.bf16.msra.mxu0 0
    %2125 = vmatprep.subr.bf16.mxu0 0
    %2126 = vmatpush1.bf16.msra.mxu0 0
    %2127 = vmatprep.subr.bf16.mxu0 0
    %2128 = vmatpush1.bf16.msra.mxu0 0
    %2129 = vmatprep.subr.bf16.mxu0 0
    %2130 = vmatpush1.bf16.msra.mxu0 0
    %2131 = vmatprep.subr.bf16.mxu0 0
    %2132 = vmatpush1.bf16.msra.mxu0 0
    %2133 = vmatprep.subr.bf16.mxu0 0
    %2134 = vmatpush1.bf16.msra.mxu0 0
    %2135 = vmatprep.subr.bf16.mxu0 0
    %2136 = vmatpush1.bf16.msra.mxu0 0
    %2137 = vmatprep.subr.bf16.mxu0 0
    %2138 = vmatpush1.bf16.msra.mxu0 0
    %2139 = vmatprep.mubr.bf16.mxu0 0
    %2140 = vmatmul.mubr.bf16.gmra.mrb[0].mxu0 %v2105
    %v2141 = vpop.f32.mrb[0].mxu0
    %v2142 = vadd.f32 %v2090, %v2141
    %v2143 = vpop.f32.mrb[0].mxu0
    %v2144 = vpop.f32.mrb[0].mxu0
    %v2145 = vadd.f32 %v2090, %v2144
    %v2146 = vpop.f32.mrb[0].mxu0
    %2147 = vdwg.mxu0
    %v2148 = vadd.f32 %v2142, %v1338
    %v2149 = vadd.f32 %v2145, %v1339
    %s2150 = scalar_lea.vmem %s11, 1
    %v2151 = vld [vmem:[%s2150] sm:$0x1]
    %s2152 = scalar_lea.vmem %s12, 1
    %v2153 = vld [vmem:[%s2152] sm:$0x1]
    %v2154 = vsel %vm207, %v2148, 0.0
    %2155 = vadd.xlane.f32.xlu0 %v2154
    %v2156 = vpop.xlane.xlu0 %2155
    %v2157 = vsel %vm207, %v2149, 0.0
    %2158 = vadd.xlane.f32.xlu0 %v2157
    %v2159 = vpop.xlane.xlu0 %2158
    %v2160 = vmul.f32 %v2156, %v214
    %v2161 = vmul.f32 %v2159, %v214
    %v2162 = vsub.f32 %v2148, %v2160
    %v2163 = vsub.f32 %v2149, %v2161
    %v2164 = vmul.f32 %v2162, %v2162
    %v2165 = vmul.f32 %v2163, %v2163
    %v2166 = vsel %vm207, %v2164, 0.0
    %2167 = vadd.xlane.f32.xlu0 %v2166
    %v2168 = vpop.xlane.xlu0 %2167
    %v2169 = vsel %vm207, %v2165, 0.0
    %2170 = vadd.xlane.f32.xlu0 %v2169
    %v2171 = vpop.xlane.xlu0 %2170
    %v2172 = vmul.f32 %v2168, %v214
    %v2173 = vmul.f32 %v2171, %v214
    %v2174 = vadd.f32 %v2172, 1e-12
    %v2175 = vadd.f32 %v2173, 1e-12
    %v2176 = vrsqrt.pop %v2174
    %v2177 = vrsqrt.pop %v2175
    %v2178 = vmul.f32 %v2162, %v2176
    %v2179 = vmul.f32 %v2163, %v2177
    %v2181 = vlaneseq
    %v2182 = vshrl.u32 %v2181, 7
    %v2183 = vsub.s32 0, %v2182
    %v2184 = vrot.slane %v2151, %v2183
    %v2186 = vmul.f32 %v2178, %v2184
    %v2187 = vmul.f32 %v2179, %v2184
    %v2189 = vlaneseq
    %v2190 = vshrl.u32 %v2189, 7
    %v2191 = vsub.s32 0, %v2190
    %v2192 = vrot.slane %v2153, %v2191
    %v2194 = vadd.f32 %v2186, %v2192
    %v2195 = vadd.f32 %v2187, %v2192
    %v2196 = vpack.c.bf16 %v2195, %v2194
    %s2197 = scalar_lea.vmem %s13, 16
    %v2198 = vld [vmem:[%s2197] sm:$0xf]
    %v2199 = vld [vmem:[%s2197 + $0x4] sm:$0xf]
    %v2200 = vld [vmem:[%s2197 + $0x8] sm:$0xf]
    %v2201 = vld [vmem:[%s2197 + $0xc] sm:$0xf]
    %s2202 = scalar_lea.vmem %s14, 1
    %v2203 = vld [vmem:[%s2202] sm:$0x1]
    %v2205 = vlaneseq
    %v2206 = vshrl.u32 %v2205, 7
    %v2207 = vsub.s32 0, %v2206
    %v2208 = vrot.slane %v2203, %v2207
    %v2214 = vunpack.c.l.b16 %v2198
    %v2215 = vunpack.c.l.b16 %v2199
    %v2216 = vunpack.c.l.b16 %v2200
    %v2217 = vunpack.c.l.b16 %v2201
    %v2218 = vpack.c.b16 %v2215, %v2214
    %v2219 = vpack.c.b16 %v2217, %v2216
    %v2223 = vsel %vm207, %v2196, 0
    %2225 = vmatprep.subr.bf16.mxu0 0
    %2226 = vmatpush1.bf16.msra.mxu0 %v2218
    %2227 = vmatprep.subr.bf16.mxu0 0
    %2228 = vmatpush1.bf16.msra.mxu0 %v2219
    %2229 = vmatprep.subr.bf16.mxu0 0
    %2230 = vmatpush1.bf16.msra.mxu0 0
    %2231 = vmatprep.subr.bf16.mxu0 0
    %2232 = vmatpush1.bf16.msra.mxu0 0
    %2233 = vmatprep.subr.bf16.mxu0 0
    %2234 = vmatpush1.bf16.msra.mxu0 0
    %2235 = vmatprep.subr.bf16.mxu0 0
    %2236 = vmatpush1.bf16.msra.mxu0 0
    %2237 = vmatprep.subr.bf16.mxu0 0
    %2238 = vmatpush1.bf16.msra.mxu0 0
    %2239 = vmatprep.subr.bf16.mxu0 0
    %2240 = vmatpush1.bf16.msra.mxu0 0
    %2241 = vmatprep.subr.bf16.mxu0 0
    %2242 = vmatpush1.bf16.msra.mxu0 0
    %2243 = vmatprep.subr.bf16.mxu0 0
    %2244 = vmatpush1.bf16.msra.mxu0 0
    %2245 = vmatprep.subr.bf16.mxu0 0
    %2246 = vmatpush1.bf16.msra.mxu0 0
    %2247 = vmatprep.subr.bf16.mxu0 0
    %2248 = vmatpush1.bf16.msra.mxu0 0
    %2249 = vmatprep.subr.bf16.mxu0 0
    %2250 = vmatpush1.bf16.msra.mxu0 0
    %2251 = vmatprep.subr.bf16.mxu0 0
    %2252 = vmatpush1.bf16.msra.mxu0 0
    %2253 = vmatprep.subr.bf16.mxu0 0
    %2254 = vmatpush1.bf16.msra.mxu0 0
    %2255 = vmatprep.subr.bf16.mxu0 0
    %2256 = vmatpush1.bf16.msra.mxu0 0
    %2257 = vmatprep.mubr.bf16.mxu0 0
    %2258 = vmatmul.mubr.bf16.gmra.mrb[0].mxu0 %v2223
    %v2259 = vpop.f32.mrb[0].mxu0
    %v2260 = vadd.f32 %v2208, %v2259
    %v2261 = vpop.f32.mrb[0].mxu0
    %v2262 = vpop.f32.mrb[0].mxu0
    %v2263 = vadd.f32 %v2208, %v2262
    %v2264 = vpop.f32.mrb[0].mxu0
    %2265 = vdwg.mxu0
    %v2266 = vmul.f32 %v2260, 0.5
    %v2267 = vmul.f32 %v2263, 0.5
    %v2268 = vmul.f32 %v2260, 0.044715
    %v2269 = vmul.f32 %v2263, 0.044715
    %v2270 = vmul.f32 %v2268, %v2260
    %v2271 = vmul.f32 %v2269, %v2263
    %v2272 = vmul.f32 %v2270, %v2260
    %v2273 = vmul.f32 %v2271, %v2263
    %v2274 = vadd.f32 %v2260, %v2272
    %v2275 = vadd.f32 %v2263, %v2273
    %v2276 = vmul.f32 %v2274, 0.7978846
    %v2277 = vmul.f32 %v2275, 0.7978846
    %v2278 = vtanh.pop %v2276
    %v2279 = vtanh.pop %v2277
    %v2280 = vadd.f32 %v2278, 1.0
    %v2281 = vadd.f32 %v2279, 1.0
    %v2282 = vmul.f32 %v2266, %v2280
    %v2283 = vmul.f32 %v2267, %v2281
    %v2284 = vpack.c.bf16 %v2283, %v2282
    %s2285 = scalar_lea.vmem %s15, 32
    %v2286 = vld [vmem:[%s2285] sm:$0xf]
    %v2287 = vld [vmem:[%s2285 + $0x4] sm:$0xf]
    %v2288 = vld [vmem:[%s2285 + $0x8] sm:$0xf]
    %v2289 = vld [vmem:[%s2285 + $0xc] sm:$0xf]
    %v2290 = vld [vmem:[%s2285 + $0x10] sm:$0xf]
    %v2291 = vld [vmem:[%s2285 + $0x14] sm:$0xf]
    %v2292 = vld [vmem:[%s2285 + $0x18] sm:$0xf]
    %v2293 = vld [vmem:[%s2285 + $0x1c] sm:$0xf]
    %s2294 = scalar_lea.vmem %s16, 1
    %v2295 = vld [vmem:[%s2294] sm:$0x1]
    %v2297 = vlaneseq
    %v2298 = vshrl.u32 %v2297, 7
    %v2299 = vsub.s32 0, %v2298
    %v2300 = vrot.slane %v2295, %v2299
    %v2310 = vunpack.c.l.b16 %v2286
    %v2311 = vunpack.c.l.b16 %v2287
    %v2312 = vunpack.c.l.b16 %v2288
    %v2313 = vunpack.c.l.b16 %v2289
    %v2314 = vunpack.c.l.b16 %v2290
    %v2315 = vunpack.c.l.b16 %v2291
    %v2316 = vunpack.c.l.b16 %v2292
    %v2317 = vunpack.c.l.b16 %v2293
    %v2318 = vpack.c.b16 %v2311, %v2310
    %v2319 = vpack.c.b16 %v2313, %v2312
    %v2320 = vpack.c.b16 %v2315, %v2314
    %v2321 = vpack.c.b16 %v2317, %v2316
    %v2327 = vsel %vm1249, %v2284, 0
    %2329 = vmatprep.subr.bf16.mxu0 0
    %2330 = vmatpush1.bf16.msra.mxu0 %v2318
    %2331 = vmatprep.subr.bf16.mxu0 0
    %2332 = vmatpush1.bf16.msra.mxu0 %v2319
    %2333 = vmatprep.subr.bf16.mxu0 0
    %2334 = vmatpush1.bf16.msra.mxu0 %v2320
    %2335 = vmatprep.subr.bf16.mxu0 0
    %2336 = vmatpush1.bf16.msra.mxu0 %v2321
    %2337 = vmatprep.subr.bf16.mxu0 0
    %2338 = vmatpush1.bf16.msra.mxu0 0
    %2339 = vmatprep.subr.bf16.mxu0 0
    %2340 = vmatpush1.bf16.msra.mxu0 0
    %2341 = vmatprep.subr.bf16.mxu0 0
    %2342 = vmatpush1.bf16.msra.mxu0 0
    %2343 = vmatprep.subr.bf16.mxu0 0
    %2344 = vmatpush1.bf16.msra.mxu0 0
    %2345 = vmatprep.subr.bf16.mxu0 0
    %2346 = vmatpush1.bf16.msra.mxu0 0
    %2347 = vmatprep.subr.bf16.mxu0 0
    %2348 = vmatpush1.bf16.msra.mxu0 0
    %2349 = vmatprep.subr.bf16.mxu0 0
    %2350 = vmatpush1.bf16.msra.mxu0 0
    %2351 = vmatprep.subr.bf16.mxu0 0
    %2352 = vmatpush1.bf16.msra.mxu0 0
    %2353 = vmatprep.subr.bf16.mxu0 0
    %2354 = vmatpush1.bf16.msra.mxu0 0
    %2355 = vmatprep.subr.bf16.mxu0 0
    %2356 = vmatpush1.bf16.msra.mxu0 0
    %2357 = vmatprep.subr.bf16.mxu0 0
    %2358 = vmatpush1.bf16.msra.mxu0 0
    %2359 = vmatprep.subr.bf16.mxu0 0
    %2360 = vmatpush1.bf16.msra.mxu0 0
    %2361 = vmatprep.mubr.bf16.mxu0 0
    %2362 = vmatmul.mubr.bf16.gmra.mrb[0].mxu0 %v2327
    %v2363 = vpop.f32.mrb[0].mxu0
    %v2364 = vadd.f32 %v2300, %v2363
    %v2365 = vpop.f32.mrb[0].mxu0
    %v2366 = vpop.f32.mrb[0].mxu0
    %v2367 = vadd.f32 %v2300, %v2366
    %v2368 = vpop.f32.mrb[0].mxu0
    %2369 = vdwg.mxu0
    %v2370 = vadd.f32 %v2364, %v2194
    %v2371 = vadd.f32 %v2367, %v2195
    %s2372 = scalar_lea.vmem %s17, 1
    %v2373 = vld [vmem:[%s2372] sm:$0x1]
    %s2374 = scalar_lea.vmem %s18, 1
    %v2375 = vld [vmem:[%s2374] sm:$0x1]
    %v2376 = vsel %vm207, %v2370, 0.0
    %2377 = vadd.xlane.f32.xlu0 %v2376
    %v2378 = vpop.xlane.xlu0 %2377
    %v2379 = vsel %vm207, %v2371, 0.0
    %2380 = vadd.xlane.f32.xlu0 %v2379
    %v2381 = vpop.xlane.xlu0 %2380
    %v2382 = vmul.f32 %v2378, %v214
    %v2383 = vmul.f32 %v2381, %v214
    %v2384 = vsub.f32 %v2370, %v2382
    %v2385 = vsub.f32 %v2371, %v2383
    %v2386 = vmul.f32 %v2384, %v2384
    %v2387 = vmul.f32 %v2385, %v2385
    %v2388 = vsel %vm207, %v2386, 0.0
    %2389 = vadd.xlane.f32.xlu0 %v2388
    %v2390 = vpop.xlane.xlu0 %2389
    %v2391 = vsel %vm207, %v2387, 0.0
    %2392 = vadd.xlane.f32.xlu0 %v2391
    %v2393 = vpop.xlane.xlu0 %2392
    %v2394 = vmul.f32 %v2390, %v214
    %v2395 = vmul.f32 %v2393, %v214
    %v2396 = vadd.f32 %v2394, 1e-12
    %v2397 = vadd.f32 %v2395, 1e-12
    %v2398 = vrsqrt.pop %v2396
    %v2399 = vrsqrt.pop %v2397
    %v2400 = vmul.f32 %v2384, %v2398
    %v2401 = vmul.f32 %v2385, %v2399
    %v2403 = vlaneseq
    %v2404 = vshrl.u32 %v2403, 7
    %v2405 = vsub.s32 0, %v2404
    %v2406 = vrot.slane %v2373, %v2405
    %v2408 = vmul.f32 %v2400, %v2406
    %v2409 = vmul.f32 %v2401, %v2406
    %v2411 = vlaneseq
    %v2412 = vshrl.u32 %v2411, 7
    %v2413 = vsub.s32 0, %v2412
    %v2414 = vrot.slane %v2375, %v2413
    %v2416 = vadd.f32 %v2408, %v2414
    %v2417 = vadd.f32 %v2409, %v2414
    %v2418 = vpack.c.bf16 %v2417, %v2416
    %v2419 = vld [vmem:[%s19] sm:$0xf]
    %v2420 = vld [vmem:[%s19 + $0x4] sm:$0xf]
    %v2421 = vld [vmem:[%s19 + $0x8] sm:$0xf]
    %v2422 = vld [vmem:[%s19 + $0xc] sm:$0xf]
    %v2423 = vld [vmem:[%s20] sm:$0x1]
    %v2425 = vlaneseq
    %v2426 = vshrl.u32 %v2425, 7
    %v2427 = vsub.s32 0, %v2426
    %v2428 = vrot.slane %v2423, %v2427
    %v2434 = vunpack.c.l.b16 %v2419
    %v2435 = vunpack.c.l.b16 %v2420
    %v2436 = vunpack.c.l.b16 %v2421
    %v2437 = vunpack.c.l.b16 %v2422
    %v2438 = vpack.c.b16 %v2435, %v2434
    %v2439 = vpack.c.b16 %v2437, %v2436
    %v2443 = vsel %vm207, %v2418, 0
    %2445 = vmatprep.subr.bf16.mxu0 0
    %2446 = vmatpush1.bf16.msra.mxu0 %v2438
    %2447 = vmatprep.subr.bf16.mxu0 0
    %2448 = vmatpush1.bf16.msra.mxu0 %v2439
    %2449 = vmatprep.subr.bf16.mxu0 0
    %2450 = vmatpush1.bf16.msra.mxu0 0
    %2451 = vmatprep.subr.bf16.mxu0 0
    %2452 = vmatpush1.bf16.msra.mxu0 0
    %2453 = vmatprep.subr.bf16.mxu0 0
    %2454 = vmatpush1.bf16.msra.mxu0 0
    %2455 = vmatprep.subr.bf16.mxu0 0
    %2456 = vmatpush1.bf16.msra.mxu0 0
    %2457 = vmatprep.subr.bf16.mxu0 0
    %2458 = vmatpush1.bf16.msra.mxu0 0
    %2459 = vmatprep.subr.bf16.mxu0 0
    %2460 = vmatpush1.bf16.msra.mxu0 0
    %2461 = vmatprep.subr.bf16.mxu0 0
    %2462 = vmatpush1.bf16.msra.mxu0 0
    %2463 = vmatprep.subr.bf16.mxu0 0
    %2464 = vmatpush1.bf16.msra.mxu0 0
    %2465 = vmatprep.subr.bf16.mxu0 0
    %2466 = vmatpush1.bf16.msra.mxu0 0
    %2467 = vmatprep.subr.bf16.mxu0 0
    %2468 = vmatpush1.bf16.msra.mxu0 0
    %2469 = vmatprep.subr.bf16.mxu0 0
    %2470 = vmatpush1.bf16.msra.mxu0 0
    %2471 = vmatprep.subr.bf16.mxu0 0
    %2472 = vmatpush1.bf16.msra.mxu0 0
    %2473 = vmatprep.subr.bf16.mxu0 0
    %2474 = vmatpush1.bf16.msra.mxu0 0
    %2475 = vmatprep.subr.bf16.mxu0 0
    %2476 = vmatpush1.bf16.msra.mxu0 0
    %2477 = vmatprep.mubr.bf16.mxu0 0
    %2478 = vmatmul.mubr.bf16.gmra.mrb[0].mxu0 %v2443
    %v2479 = vpop.f32.mrb[0].mxu0
    %v2480 = vadd.f32 %v2428, %v2479
    %v2481 = vpop.f32.mrb[0].mxu0
    %v2482 = vpop.f32.mrb[0].mxu0
    %v2483 = vadd.f32 %v2428, %v2482
    %v2484 = vpop.f32.mrb[0].mxu0
    %2485 = vdwg.mxu0
    %v2486 = vtanh.pop %v2480
    %v2487 = vtanh.pop %v2483
    %v2488 = vpack.c.bf16 %v2487, %v2486
    %v2489 = vld [vmem:[%s21] sm:$0xf]
    %v2490 = vld [vmem:[%s21 + $0x4] sm:$0xf]
    %v2491 = vld [vmem:[%s21 + $0x8] sm:$0xf]
    %v2492 = vld [vmem:[%s21 + $0xc] sm:$0xf]
    %v2493 = vld [vmem:[%s22] sm:$0x1]
    %v2495 = vlaneseq
    %v2496 = vshrl.u32 %v2495, 7
    %v2497 = vsub.s32 0, %v2496
    %v2498 = vrot.slane %v2493, %v2497
    %v2504 = vunpack.c.l.b16 %v2489
    %v2505 = vunpack.c.l.b16 %v2490
    %v2506 = vunpack.c.l.b16 %v2491
    %v2507 = vunpack.c.l.b16 %v2492
    %v2508 = vpack.c.b16 %v2505, %v2504
    %v2509 = vpack.c.b16 %v2507, %v2506
    %v2513 = vsel %vm207, %v2488, 0
    %2515 = vmatprep.subr.bf16.mxu0 0
    %2516 = vmatpush1.bf16.msra.mxu0 %v2508
    %2517 = vmatprep.subr.bf16.mxu0 0
    %2518 = vmatpush1.bf16.msra.mxu0 %v2509
    %2519 = vmatprep.subr.bf16.mxu0 0
    %2520 = vmatpush1.bf16.msra.mxu0 0
    %2521 = vmatprep.subr.bf16.mxu0 0
    %2522 = vmatpush1.bf16.msra.mxu0 0
    %2523 = vmatprep.subr.bf16.mxu0 0
    %2524 = vmatpush1.bf16.msra.mxu0 0
    %2525 = vmatprep.subr.bf16.mxu0 0
    %2526 = vmatpush1.bf16.msra.mxu0 0
    %2527 = vmatprep.subr.bf16.mxu0 0
    %2528 = vmatpush1.bf16.msra.mxu0 0
    %2529 = vmatprep.subr.bf16.mxu0 0
    %2530 = vmatpush1.bf16.msra.mxu0 0
    %2531 = vmatprep.subr.bf16.mxu0 0
    %2532 = vmatpush1.bf16.msra.mxu0 0
    %2533 = vmatprep.subr.bf16.mxu0 0
    %2534 = vmatpush1.bf16.msra.mxu0 0
    %2535 = vmatprep.subr.bf16.mxu0 0
    %2536 = vmatpush1.bf16.msra.mxu0 0
    %2537 = vmatprep.subr.bf16.mxu0 0
    %2538 = vmatpush1.bf16.msra.mxu0 0
    %2539 = vmatprep.subr.bf16.mxu0 0
    %2540 = vmatpush1.bf16.msra.mxu0 0
    %2541 = vmatprep.subr.bf16.mxu0 0
    %2542 = vmatpush1.bf16.msra.mxu0 0
    %2543 = vmatprep.subr.bf16.mxu0 0
    %2544 = vmatpush1.bf16.msra.mxu0 0
    %2545 = vmatprep.subr.bf16.mxu0 0
    %2546 = vmatpush1.bf16.msra.mxu0 0
    %2547 = vmatprep.mubr.bf16.mxu0 0
    %2548 = vmatmul.mubr.bf16.gmra.mrb[0].mxu0 %v2513
    %v2549 = vpop.f32.mrb[0].mxu0
    %v2550 = vadd.f32 %v2498, %v2549
    %v2551 = vpop.f32.mrb[0].mxu0
    %v2552 = vpop.f32.mrb[0].mxu0
    %v2553 = vadd.f32 %v2498, %v2552
    %v2554 = vpop.f32.mrb[0].mxu0
    %2555 = vdwg.mxu0
    %2556 = vst [vmem:[#allocation2] sm:$0xff] %v2550
    %2557 = vst [vmem:[#allocation2 + $0x8] sm:$0xff] %v2553
    // Predicated region
    $region94: #{tpu_custom_call.1} parent=1 // pred_check
      _
    $region95: #{tpu_custom_call.1} parent=1 // pred_check_branch
      %2559 = sbr.rel (0) target = $region97
    $region96: #{tpu_custom_call.1} parent=1 // pred_region
      %s2561 = ssub.s32 256, 256
      %2562 = vsyncadd [#allocation3], %s2561
      %s2563 = sshll.u32 [#allocation2], 4
      %s2564 = int_to_ptr.vmem [resolvable:$true] %s2563
      %2569 = dma.vmem_to_hbm [thread:$0]  %s2564, 256, %s23, [#allocation3], 128, 128, 8
    $region97: #{tpu_custom_call.1} parent=1 // pred_fallthru
      _
    // Predicated region
    $region98: #{tpu_custom_call.1} parent=1 // pred_check
      _
    $region99: #{tpu_custom_call.1} parent=1 // pred_check_branch
      %2571 = sbr.rel (0) target = $region101
    $region100: #{tpu_custom_call.1} parent=1 // pred_region
      %2572 = dma.done [#allocation3], 256
    $region101: #{tpu_custom_call.1} parent=1 // pred_fallthru
      _
    %2573 = vsyncpa [#allocation3], 1

</llo_original>
